<compile_context>
chip_gen: v7x
topology: tpu7x:2x2x1
jax: 0.10.0
libtpu: 0.0.40
codegen_flags: <defaults>
</compile_context>

<pallas_src>
import functools
import math

import jax
import jax.numpy as jnp
from jax.experimental import pallas as pl
from jax.experimental.pallas import tpu as pltpu

# ----------------------------- configuration -------------------------------
PATCH_SIZE = 4       # patch_size == patch_stride, padding = 0 (non-overlapping)
IN_CHANS = 4
EMBED_DIM = 32
DEPTH = 2
NUM_HEADS = 2
MLP_RATIO = 4.0
WITH_CLS_TOKEN = True
LN_EPS = 1e-5
HIDDEN = int(EMBED_DIM * MLP_RATIO)


# ------------------------------ kernel helpers ------------------------------
def _ln(x, gamma, beta):
    """LayerNorm over the last dim (f32 math)."""
    mu = jnp.mean(x, axis=-1, keepdims=True)
    var = jnp.mean((x - mu) ** 2, axis=-1, keepdims=True)
    return (x - mu) * jax.lax.rsqrt(var + LN_EPS) * gamma + beta


def _gelu(x):
    """Exact (erf) GELU, matching torch.nn.GELU default."""
    return 0.5 * x * (1.0 + jax.lax.erf(x * (1.0 / math.sqrt(2.0))))


# ------------------------------ fused kernel --------------------------------
def _vit_kernel(patches_ref, pe_w_ref, pe_vec_ref,
                wqkv_ref, wo_ref, wfc1_ref, wfc2_ref,
                blk_vec_ref, bfc1_ref, out_ref,
                *, n_tokens, depth, num_heads):
    N = n_tokens
    D = EMBED_DIM
    Dh = D // num_heads
    T = N + 1
    scale = float(D) ** -0.5          # CvT uses dim_out ** -0.5

    # ---- ConvEmbed: conv (kernel==stride, pad=0) == matmul, + bias, + LN ----
    p = patches_ref[0].astype(jnp.float32)                       # (N, K)
    tok = jnp.dot(p, pe_w_ref[...].astype(jnp.float32),
                  preferred_element_type=jnp.float32)            # (N, D)
    pe_vec = pe_vec_ref[...].astype(jnp.float32)                 # (4, D)
    tok = tok + pe_vec[0:1, :]                                   # pe bias
    tok = _ln(tok, pe_vec[1:2, :], pe_vec[2:3, :])               # ConvEmbed norm

    # ---- assemble the sequence in the VMEM-resident output block.
    # Spatial tokens: rows [0, N); cls token: row N (kept at the end so both
    # stores are sublane-aligned; block math is order-invariant).
    out_ref[0, 0:N, :] = tok.astype(out_ref.dtype)
    out_ref[0, N:T, :] = pe_vec[3:4, :].astype(out_ref.dtype)    # cls token
    x = out_ref[0].astype(jnp.float32)                           # (T, D) residual stream

    # ---- transformer blocks (unrolled; weights stacked on a leading depth axis)
    for j in range(depth):
        bv = blk_vec_ref[j].astype(jnp.float32)                  # (6, D)

        # --- attention branch ---
        h = _ln(x, bv[0:1, :], bv[1:2, :])
        qkv = jnp.dot(h, wqkv_ref[j].astype(jnp.float32),
                      preferred_element_type=jnp.float32)        # (T, 3D)
        attn = jnp.zeros((T, D), jnp.float32)
        for hd in range(num_heads):
            lo = hd * Dh
            q = qkv[:, lo:lo + Dh]                               # (T, Dh)
            k = qkv[:, D + lo:D + lo + Dh]
            v = qkv[:, 2 * D + lo:2 * D + lo + Dh]
            s = jnp.dot(q, k.T, preferred_element_type=jnp.float32) * scale
            s = s - jnp.max(s, axis=-1, keepdims=True)
            pr = jnp.exp(s)
            pr = pr * pl.reciprocal(jnp.sum(pr, axis=-1, keepdims=True), approx=True)
            o_h = jnp.dot(pr, v, preferred_element_type=jnp.float32)      # (T, Dh)
            # out-projection folded per head: concat(o_h) @ Wo == sum_h o_h @ Wo[h]
            attn = attn + jnp.dot(o_h,
                                  wo_ref[j, lo:lo + Dh, :].astype(jnp.float32),
                                  preferred_element_type=jnp.float32)
        attn = attn + bv[4:5, :]                                 # out-proj bias
        x = x + attn                                             # residual (drop_path=identity)

        # --- MLP branch ---
        h2 = _ln(x, bv[2:3, :], bv[3:4, :])
        m = jnp.dot(h2, wfc1_ref[j].astype(jnp.float32),
                    preferred_element_type=jnp.float32) + bfc1_ref[j].astype(jnp.float32)
        m = _gelu(m)
        m = jnp.dot(m, wfc2_ref[j].astype(jnp.float32),
                    preferred_element_type=jnp.float32) + bv[5:6, :]
        x = x + m                                                # residual

    out_ref[0] = x.astype(out_ref.dtype)


# ------------------------------ model forward --------------------------------
def vision_transformer_forward(x, params):
    """x: (B, Cin, H, W) NCHW  ->  (x_out (B, D, Ho, Wo), cls_tokens (B, 1, D))"""
    assert WITH_CLS_TOKEN
    B, Cin, H, W = x.shape
    ps = PATCH_SIZE
    Ho, Wo = H // ps, W // ps
    N = Ho * Wo
    D = EMBED_DIM
    T = N + 1
    K = Cin * ps * ps

    # patchify: channel-major patch flattening matches torch Conv2d (D, Cin, k, k)
    patches = (x.reshape(B, Cin, Ho, ps, Wo, ps)
                .transpose(0, 2, 4, 1, 3, 5)            # b ho wo c kh kw
                .reshape(B, N, K))

    seq = pl.pallas_call(
        functools.partial(_vit_kernel, n_tokens=N, depth=DEPTH, num_heads=NUM_HEADS),
        out_shape=jax.ShapeDtypeStruct((B, T, D), x.dtype),
        grid=(B,),
        in_specs=[
            pl.BlockSpec((1, N, K), lambda b: (b, 0, 0)),            # patches (per batch)
            pl.BlockSpec((K, D), lambda b: (0, 0)),                  # pe_w
            pl.BlockSpec((4, D), lambda b: (0, 0)),                  # [pe_b, pe_ln_g, pe_ln_b, cls]
            pl.BlockSpec((DEPTH, D, 3 * D), lambda b: (0, 0, 0)),    # fused qkv weights
            pl.BlockSpec((DEPTH, D, D), lambda b: (0, 0, 0)),        # out-proj weights
            pl.BlockSpec((DEPTH, D, HIDDEN), lambda b: (0, 0, 0)),   # fc1 weights
            pl.BlockSpec((DEPTH, HIDDEN, D), lambda b: (0, 0, 0)),   # fc2 weights
            pl.BlockSpec((DEPTH, 6, D), lambda b: (0, 0, 0)),        # [ln1_g,ln1_b,ln2_g,ln2_b,bo,b_fc2]
            pl.BlockSpec((DEPTH, 1, HIDDEN), lambda b: (0, 0, 0)),   # fc1 bias
        ],
        out_specs=pl.BlockSpec((1, T, D), lambda b: (b, 0, 0)),
        compiler_params=pltpu.CompilerParams(dimension_semantics=("parallel",)),
    )(patches, params["pe_w"], params["pe_vecs"],
      params["wqkv"], params["wo"], params["w_fc1"], params["w_fc2"],
      params["blk_vecs"], params["b_fc1"])

    # split: spatial tokens are rows [0, N), cls token is row N (see kernel note)
    spatial = seq[:, :N, :]
    cls_tokens = seq[:, N:, :]
    x_out = spatial.reshape(B, Ho, Wo, D).transpose(0, 3, 1, 2)
    return x_out, cls_tokens


# ------------------------------ parameter init -------------------------------
def _trunc_normal(key, shape, std=0.02):
    return std * jax.random.truncated_normal(key, -2.0, 2.0, shape, jnp.float32)


def init_params(key):
    D = EMBED_DIM
    hidden = HIDDEN
    K = IN_CHANS * PATCH_SIZE * PATCH_SIZE
    k_pe, k_cls, k_blocks = jax.random.split(key, 3)

    pe_w = _trunc_normal(k_pe, (K, D))
    pe_b = jnp.zeros((D,), jnp.float32)
    pe_ln_g = jnp.ones((D,), jnp.float32)
    pe_ln_b = jnp.zeros((D,), jnp.float32)
    cls_token = _trunc_normal(k_cls, (D,))
    pe_vecs = jnp.stack([pe_b, pe_ln_g, pe_ln_b, cls_token], axis=0)     # (4, D)

    wqkv, wo, wfc1, wfc2, blk_vecs, bfc1 = [], [], [], [], [], []
    bkeys = jax.random.split(k_blocks, DEPTH)
    for j in range(DEPTH):
        ks = jax.random.split(bkeys[j], 6)
        wq = _trunc_normal(ks[0], (D, D))
        wk = _trunc_normal(ks[1], (D, D))
        wv = _trunc_normal(ks[2], (D, D))
        wqkv.append(jnp.concatenate([wq, wk, wv], axis=1))               # (D, 3D); qkv_bias=False
        wo.append(_trunc_normal(ks[3], (D, D)))
        wfc1.append(_trunc_normal(ks[4], (D, hidden)))
        wfc2.append(_trunc_normal(ks[5], (hidden, D)))
        blk_vecs.append(jnp.stack([
            jnp.ones((D,), jnp.float32),   # ln1_g
            jnp.zeros((D,), jnp.float32),  # ln1_b
            jnp.ones((D,), jnp.float32),   # ln2_g
            jnp.zeros((D,), jnp.float32),  # ln2_b
            jnp.zeros((D,), jnp.float32),  # bo
            jnp.zeros((D,), jnp.float32),  # b_fc2
        ], axis=0))                                                      # (6, D)
        bfc1.append(jnp.zeros((1, hidden), jnp.float32))

    return {
        "pe_w": pe_w,
        "pe_vecs": pe_vecs,
        "wqkv": jnp.stack(wqkv, 0),        # (DEPTH, D, 3D)
        "wo": jnp.stack(wo, 0),            # (DEPTH, D, D)
        "w_fc1": jnp.stack(wfc1, 0),       # (DEPTH, D, HIDDEN)
        "w_fc2": jnp.stack(wfc2, 0),       # (DEPTH, HIDDEN, D)
        "blk_vecs": jnp.stack(blk_vecs, 0),  # (DEPTH, 6, D)
        "b_fc1": jnp.stack(bfc1, 0),       # (DEPTH, 1, HIDDEN)
    }


# ----------------------------------- main ------------------------------------
if __name__ == "__main__":
    key = jax.random.PRNGKey(0)
    k_param, k_input = jax.random.split(key)
    params = init_params(k_param)

    # input image, NCHW like PyTorch
    x = jax.random.normal(k_input, (2, IN_CHANS, 16, 16), jnp.float32)

    fwd = jax.jit(vision_transformer_forward)
    x_out, cls_tokens = fwd(x, params)
    jax.block_until_ready(x_out)
    jax.block_until_ready(cls_tokens)

    assert x_out.shape == (2, EMBED_DIM, 16 // PATCH_SIZE, 16 // PATCH_SIZE), x_out.shape
    assert cls_tokens.shape == (2, 1, EMBED_DIM), cls_tokens.shape
    assert bool(jnp.all(jnp.isfinite(x_out))) and bool(jnp.all(jnp.isfinite(cls_tokens)))
    print("KERNEL_OK")
</pallas_src>

<mosaic_0001>
module attributes {stable_mosaic.version = 11 : i64} {
  func.func @_vit_kernel(%arg0: i32, %arg1: memref<1x16x64xf32, #tpu.memory_space<vmem>>, %arg2: memref<64x32xf32, #tpu.memory_space<vmem>>, %arg3: memref<4x32xf32, #tpu.memory_space<vmem>>, %arg4: memref<2x32x96xf32, #tpu.memory_space<vmem>>, %arg5: memref<2x32x32xf32, #tpu.memory_space<vmem>>, %arg6: memref<2x32x128xf32, #tpu.memory_space<vmem>>, %arg7: memref<2x128x32xf32, #tpu.memory_space<vmem>>, %arg8: memref<2x6x32xf32, #tpu.memory_space<vmem>>, %arg9: memref<2x1x128xf32, #tpu.memory_space<vmem>>, %arg10: memref<1x17x32xf32, #tpu.memory_space<vmem>>) attributes {dimension_semantics = [#tpu.dimension_semantics<parallel>], iteration_bounds = array<i64: 2>, scalar_prefetch = 0 : i64, scratch_operands = 0 : i64, tpu.core_type = #tpu.core_type<tc>, window_params = [{transform_indices = @transform_0, window_bounds = array<i64: 1, 16, 64>}, {pipeline_mode = #tpu.pipeline_mode<synchronous>, transform_indices = @transform_1, window_bounds = array<i64: 64, 32>}, {pipeline_mode = #tpu.pipeline_mode<synchronous>, transform_indices = @transform_2, window_bounds = array<i64: 4, 32>}, {pipeline_mode = #tpu.pipeline_mode<synchronous>, transform_indices = @transform_3, window_bounds = array<i64: 2, 32, 96>}, {pipeline_mode = #tpu.pipeline_mode<synchronous>, transform_indices = @transform_4, window_bounds = array<i64: 2, 32, 32>}, {pipeline_mode = #tpu.pipeline_mode<synchronous>, transform_indices = @transform_5, window_bounds = array<i64: 2, 32, 128>}, {pipeline_mode = #tpu.pipeline_mode<synchronous>, transform_indices = @transform_6, window_bounds = array<i64: 2, 128, 32>}, {pipeline_mode = #tpu.pipeline_mode<synchronous>, transform_indices = @transform_7, window_bounds = array<i64: 2, 6, 32>}, {pipeline_mode = #tpu.pipeline_mode<synchronous>, transform_indices = @transform_8, window_bounds = array<i64: 2, 1, 128>}, {transform_indices = @transform_9, window_bounds = array<i64: 1, 17, 32>}]} {
    %c0 = arith.constant 0 : index
    %c0_0 = arith.constant 0 : index
    %c0_1 = arith.constant 0 : index
    %0 = vector.load %arg1[%c0, %c0_0, %c0_1] : memref<1x16x64xf32, #tpu.memory_space<vmem>>, vector<1x16x64xf32>
    %1 = vector.shape_cast %0 : vector<1x16x64xf32> to vector<16x64xf32>
    %c0_2 = arith.constant 0 : index
    %c0_3 = arith.constant 0 : index
    %2 = vector.load %arg2[%c0_2, %c0_3] : memref<64x32xf32, #tpu.memory_space<vmem>>, vector<64x32xf32>
    %cst = arith.constant dense<0.000000e+00> : vector<16x32xf32>
    %3 = tpu.matmul %1, %2, %cst {dimension_numbers = #tpu.dot_dimension_numbers<[1], [0], [0], [1], [0, 0, 1, 1], [], []>} : vector<16x64xf32>, vector<64x32xf32>, vector<16x32xf32> -> vector<16x32xf32>
    %c0_4 = arith.constant 0 : index
    %c0_5 = arith.constant 0 : index
    %4 = vector.load %arg3[%c0_4, %c0_5] : memref<4x32xf32, #tpu.memory_space<vmem>>, vector<4x32xf32>
    %5 = vector.extract_strided_slice %4 {offsets = [0, 0], sizes = [1, 32], strides = [1, 1]} : vector<4x32xf32> to vector<1x32xf32>
    %6 = vector.broadcast %5 : vector<1x32xf32> to vector<16x32xf32>
    %7 = arith.addf %3, %6 : vector<16x32xf32>
    %8 = vector.extract_strided_slice %4 {offsets = [1, 0], sizes = [1, 32], strides = [1, 1]} : vector<4x32xf32> to vector<1x32xf32>
    %9 = vector.extract_strided_slice %4 {offsets = [2, 0], sizes = [1, 32], strides = [1, 1]} : vector<4x32xf32> to vector<1x32xf32>
    %cst_6 = arith.constant dense<0.000000e+00> : vector<16xf32>
    %10 = vector.multi_reduction <add>, %7, %cst_6 [1] : vector<16x32xf32> to vector<16xf32>
    %11 = vector.shape_cast %10 : vector<16xf32> to vector<16x1xf32>
    %cst_7 = arith.constant 3.200000e+01 : f32
    %12 = vector.broadcast %cst_7 : f32 to vector<16x1xf32>
    %13 = arith.divf %11, %12 : vector<16x1xf32>
    %14 = vector.broadcast %13 : vector<16x1xf32> to vector<16x32xf32>
    %15 = arith.subf %7, %14 : vector<16x32xf32>
    %16 = arith.mulf %15, %15 : vector<16x32xf32>
    %cst_8 = arith.constant dense<0.000000e+00> : vector<16xf32>
    %17 = vector.multi_reduction <add>, %16, %cst_8 [1] : vector<16x32xf32> to vector<16xf32>
    %18 = vector.shape_cast %17 : vector<16xf32> to vector<16x1xf32>
    %cst_9 = arith.constant 3.200000e+01 : f32
    %19 = vector.broadcast %cst_9 : f32 to vector<16x1xf32>
    %20 = arith.divf %18, %19 : vector<16x1xf32>
    %21 = vector.broadcast %13 : vector<16x1xf32> to vector<16x32xf32>
    %22 = arith.subf %7, %21 : vector<16x32xf32>
    %cst_10 = arith.constant 9.99999974E-6 : f32
    %23 = vector.broadcast %cst_10 : f32 to vector<16x1xf32>
    %24 = arith.addf %20, %23 : vector<16x1xf32>
    %25 = math.rsqrt %24 : vector<16x1xf32>
    %26 = vector.broadcast %25 : vector<16x1xf32> to vector<16x32xf32>
    %27 = arith.mulf %22, %26 : vector<16x32xf32>
    %28 = vector.broadcast %8 : vector<1x32xf32> to vector<16x32xf32>
    %29 = arith.mulf %27, %28 : vector<16x32xf32>
    %30 = vector.broadcast %9 : vector<1x32xf32> to vector<16x32xf32>
    %31 = arith.addf %29, %30 : vector<16x32xf32>
    %c0_11 = arith.constant 0 : index
    %c0_12 = arith.constant 0 : index
    %c0_13 = arith.constant 0 : index
    %32 = vector.load %arg10[%c0_11, %c0_12, %c0_13] : memref<1x17x32xf32, #tpu.memory_space<vmem>>, vector<1x16x32xf32>
    %33 = vector.shape_cast %32 : vector<1x16x32xf32> to vector<16x32xf32>
    %34 = vector.shape_cast %31 : vector<16x32xf32> to vector<1x16x32xf32>
    tpu.vector_store %arg10[%c0_11, %c0_12, %c0_13], %34 {strides = array<i32>} : memref<1x17x32xf32, #tpu.memory_space<vmem>>, vector<1x16x32xf32>,
    %35 = vector.extract_strided_slice %4 {offsets = [3, 0], sizes = [1, 32], strides = [1, 1]} : vector<4x32xf32> to vector<1x32xf32>
    %c0_14 = arith.constant 0 : index
    %c16 = arith.constant 16 : index
    %c0_15 = arith.constant 0 : index
    %36 = vector.load %arg10[%c0_14, %c16, %c0_15] : memref<1x17x32xf32, #tpu.memory_space<vmem>>, vector<1x1x32xf32>
    %37 = vector.shape_cast %36 : vector<1x1x32xf32> to vector<1x32xf32>
    %38 = vector.shape_cast %35 : vector<1x32xf32> to vector<1x1x32xf32>
    tpu.vector_store %arg10[%c0_14, %c16, %c0_15], %38 {strides = array<i32>} : memref<1x17x32xf32, #tpu.memory_space<vmem>>, vector<1x1x32xf32>,
    %c0_16 = arith.constant 0 : index
    %c0_17 = arith.constant 0 : index
    %c0_18 = arith.constant 0 : index
    %39 = vector.load %arg10[%c0_16, %c0_17, %c0_18] : memref<1x17x32xf32, #tpu.memory_space<vmem>>, vector<1x17x32xf32>
    %40 = vector.shape_cast %39 : vector<1x17x32xf32> to vector<17x32xf32>
    %c0_19 = arith.constant 0 : index
    %c0_20 = arith.constant 0 : index
    %c0_21 = arith.constant 0 : index
    %41 = vector.load %arg8[%c0_19, %c0_20, %c0_21] : memref<2x6x32xf32, #tpu.memory_space<vmem>>, vector<1x6x32xf32>
    %42 = vector.shape_cast %41 : vector<1x6x32xf32> to vector<6x32xf32>
    %43 = vector.extract_strided_slice %42 {offsets = [0, 0], sizes = [1, 32], strides = [1, 1]} : vector<6x32xf32> to vector<1x32xf32>
    %44 = vector.extract_strided_slice %42 {offsets = [1, 0], sizes = [1, 32], strides = [1, 1]} : vector<6x32xf32> to vector<1x32xf32>
    %cst_22 = arith.constant dense<0.000000e+00> : vector<17xf32>
    %45 = vector.multi_reduction <add>, %40, %cst_22 [1] : vector<17x32xf32> to vector<17xf32>
    %46 = vector.shape_cast %45 : vector<17xf32> to vector<17x1xf32>
    %cst_23 = arith.constant 3.200000e+01 : f32
    %47 = vector.broadcast %cst_23 : f32 to vector<17x1xf32>
    %48 = arith.divf %46, %47 : vector<17x1xf32>
    %49 = vector.broadcast %48 : vector<17x1xf32> to vector<17x32xf32>
    %50 = arith.subf %40, %49 : vector<17x32xf32>
    %51 = arith.mulf %50, %50 : vector<17x32xf32>
    %cst_24 = arith.constant dense<0.000000e+00> : vector<17xf32>
    %52 = vector.multi_reduction <add>, %51, %cst_24 [1] : vector<17x32xf32> to vector<17xf32>
    %53 = vector.shape_cast %52 : vector<17xf32> to vector<17x1xf32>
    %cst_25 = arith.constant 3.200000e+01 : f32
    %54 = vector.broadcast %cst_25 : f32 to vector<17x1xf32>
    %55 = arith.divf %53, %54 : vector<17x1xf32>
    %56 = vector.broadcast %48 : vector<17x1xf32> to vector<17x32xf32>
    %57 = arith.subf %40, %56 : vector<17x32xf32>
    %cst_26 = arith.constant 9.99999974E-6 : f32
    %58 = vector.broadcast %cst_26 : f32 to vector<17x1xf32>
    %59 = arith.addf %55, %58 : vector<17x1xf32>
    %60 = math.rsqrt %59 : vector<17x1xf32>
    %61 = vector.broadcast %60 : vector<17x1xf32> to vector<17x32xf32>
    %62 = arith.mulf %57, %61 : vector<17x32xf32>
    %63 = vector.broadcast %43 : vector<1x32xf32> to vector<17x32xf32>
    %64 = arith.mulf %62, %63 : vector<17x32xf32>
    %65 = vector.broadcast %44 : vector<1x32xf32> to vector<17x32xf32>
    %66 = arith.addf %64, %65 : vector<17x32xf32>
    %c0_27 = arith.constant 0 : index
    %c0_28 = arith.constant 0 : index
    %c0_29 = arith.constant 0 : index
    %67 = vector.load %arg4[%c0_27, %c0_28, %c0_29] : memref<2x32x96xf32, #tpu.memory_space<vmem>>, vector<1x32x96xf32>
    %68 = vector.shape_cast %67 : vector<1x32x96xf32> to vector<32x96xf32>
    %cst_30 = arith.constant dense<0.000000e+00> : vector<17x96xf32>
    %69 = tpu.matmul %66, %68, %cst_30 {dimension_numbers = #tpu.dot_dimension_numbers<[1], [0], [0], [1], [0, 0, 1, 1], [], []>} : vector<17x32xf32>, vector<32x96xf32>, vector<17x96xf32> -> vector<17x96xf32>
    %cst_31 = arith.constant 0.000000e+00 : f32
    %70 = vector.broadcast %cst_31 : f32 to vector<17x32xf32>
    %71 = vector.extract_strided_slice %69 {offsets = [0, 0], sizes = [17, 16], strides = [1, 1]} : vector<17x96xf32> to vector<17x16xf32>
    %72 = vector.extract_strided_slice %69 {offsets = [0, 32], sizes = [17, 16], strides = [1, 1]} : vector<17x96xf32> to vector<17x16xf32>
    %73 = vector.extract_strided_slice %69 {offsets = [0, 64], sizes = [17, 16], strides = [1, 1]} : vector<17x96xf32> to vector<17x16xf32>
    %74 = tpu.transpose %72, [1, 0] : vector<17x16xf32> -> vector<16x17xf32>
    %cst_32 = arith.constant dense<0.000000e+00> : vector<17x17xf32>
    %75 = tpu.matmul %71, %74, %cst_32 {dimension_numbers = #tpu.dot_dimension_numbers<[1], [0], [0], [1], [0, 0, 1, 1], [], []>} : vector<17x16xf32>, vector<16x17xf32>, vector<17x17xf32> -> vector<17x17xf32>
    %cst_33 = arith.constant 0.176776692 : f32
    %76 = vector.broadcast %cst_33 : f32 to vector<17x17xf32>
    %77 = arith.mulf %75, %76 : vector<17x17xf32>
    %cst_34 = arith.constant dense<0xFF800000> : vector<17xf32>
    %78 = vector.multi_reduction <maximumf>, %77, %cst_34 [1] : vector<17x17xf32> to vector<17xf32>
    %79 = vector.shape_cast %78 : vector<17xf32> to vector<17x1xf32>
    %80 = vector.broadcast %79 : vector<17x1xf32> to vector<17x17xf32>
    %81 = arith.subf %77, %80 : vector<17x17xf32>
    %82 = math.exp %81 : vector<17x17xf32>
    %cst_35 = arith.constant dense<0.000000e+00> : vector<17xf32>
    %83 = vector.multi_reduction <add>, %82, %cst_35 [1] : vector<17x17xf32> to vector<17xf32>
    %84 = vector.shape_cast %83 : vector<17xf32> to vector<17x1xf32>
    %85 = tpu.reciprocal %84 {approx = true} : vector<17x1xf32> -> vector<17x1xf32>
    %86 = vector.broadcast %85 : vector<17x1xf32> to vector<17x17xf32>
    %87 = arith.mulf %82, %86 : vector<17x17xf32>
    %cst_36 = arith.constant dense<0.000000e+00> : vector<17x16xf32>
    %88 = tpu.matmul %87, %73, %cst_36 {dimension_numbers = #tpu.dot_dimension_numbers<[1], [0], [0], [1], [0, 0, 1, 1], [], []>} : vector<17x17xf32>, vector<17x16xf32>, vector<17x16xf32> -> vector<17x16xf32>
    %c0_37 = arith.constant 0 : index
    %c0_38 = arith.constant 0 : index
    %c0_39 = arith.constant 0 : index
    %89 = vector.load %arg5[%c0_37, %c0_38, %c0_39] : memref<2x32x32xf32, #tpu.memory_space<vmem>>, vector<1x16x32xf32>
    %90 = vector.shape_cast %89 : vector<1x16x32xf32> to vector<16x32xf32>
    %cst_40 = arith.constant dense<0.000000e+00> : vector<17x32xf32>
    %91 = tpu.matmul %88, %90, %cst_40 {dimension_numbers = #tpu.dot_dimension_numbers<[1], [0], [0], [1], [0, 0, 1, 1], [], []>} : vector<17x16xf32>, vector<16x32xf32>, vector<17x32xf32> -> vector<17x32xf32>
    %92 = arith.addf %70, %91 : vector<17x32xf32>
    %93 = vector.extract_strided_slice %69 {offsets = [0, 16], sizes = [17, 16], strides = [1, 1]} : vector<17x96xf32> to vector<17x16xf32>
    %94 = vector.extract_strided_slice %69 {offsets = [0, 48], sizes = [17, 16], strides = [1, 1]} : vector<17x96xf32> to vector<17x16xf32>
    %95 = vector.extract_strided_slice %69 {offsets = [0, 80], sizes = [17, 16], strides = [1, 1]} : vector<17x96xf32> to vector<17x16xf32>
    %96 = tpu.transpose %94, [1, 0] : vector<17x16xf32> -> vector<16x17xf32>
    %cst_41 = arith.constant dense<0.000000e+00> : vector<17x17xf32>
    %97 = tpu.matmul %93, %96, %cst_41 {dimension_numbers = #tpu.dot_dimension_numbers<[1], [0], [0], [1], [0, 0, 1, 1], [], []>} : vector<17x16xf32>, vector<16x17xf32>, vector<17x17xf32> -> vector<17x17xf32>
    %cst_42 = arith.constant 0.176776692 : f32
    %98 = vector.broadcast %cst_42 : f32 to vector<17x17xf32>
    %99 = arith.mulf %97, %98 : vector<17x17xf32>
    %cst_43 = arith.constant dense<0xFF800000> : vector<17xf32>
    %100 = vector.multi_reduction <maximumf>, %99, %cst_43 [1] : vector<17x17xf32> to vector<17xf32>
    %101 = vector.shape_cast %100 : vector<17xf32> to vector<17x1xf32>
    %102 = vector.broadcast %101 : vector<17x1xf32> to vector<17x17xf32>
    %103 = arith.subf %99, %102 : vector<17x17xf32>
    %104 = math.exp %103 : vector<17x17xf32>
    %cst_44 = arith.constant dense<0.000000e+00> : vector<17xf32>
    %105 = vector.multi_reduction <add>, %104, %cst_44 [1] : vector<17x17xf32> to vector<17xf32>
    %106 = vector.shape_cast %105 : vector<17xf32> to vector<17x1xf32>
    %107 = tpu.reciprocal %106 {approx = true} : vector<17x1xf32> -> vector<17x1xf32>
    %108 = vector.broadcast %107 : vector<17x1xf32> to vector<17x17xf32>
    %109 = arith.mulf %104, %108 : vector<17x17xf32>
    %cst_45 = arith.constant dense<0.000000e+00> : vector<17x16xf32>
    %110 = tpu.matmul %109, %95, %cst_45 {dimension_numbers = #tpu.dot_dimension_numbers<[1], [0], [0], [1], [0, 0, 1, 1], [], []>} : vector<17x17xf32>, vector<17x16xf32>, vector<17x16xf32> -> vector<17x16xf32>
    %c0_46 = arith.constant 0 : index
    %c16_47 = arith.constant 16 : index
    %c0_48 = arith.constant 0 : index
    %111 = vector.load %arg5[%c0_46, %c16_47, %c0_48] : memref<2x32x32xf32, #tpu.memory_space<vmem>>, vector<1x16x32xf32>
    %112 = vector.shape_cast %111 : vector<1x16x32xf32> to vector<16x32xf32>
    %cst_49 = arith.constant dense<0.000000e+00> : vector<17x32xf32>
    %113 = tpu.matmul %110, %112, %cst_49 {dimension_numbers = #tpu.dot_dimension_numbers<[1], [0], [0], [1], [0, 0, 1, 1], [], []>} : vector<17x16xf32>, vector<16x32xf32>, vector<17x32xf32> -> vector<17x32xf32>
    %114 = arith.addf %92, %113 : vector<17x32xf32>
    %115 = vector.extract_strided_slice %42 {offsets = [4, 0], sizes = [1, 32], strides = [1, 1]} : vector<6x32xf32> to vector<1x32xf32>
    %116 = vector.broadcast %115 : vector<1x32xf32> to vector<17x32xf32>
    %117 = arith.addf %114, %116 : vector<17x32xf32>
    %118 = arith.addf %40, %117 : vector<17x32xf32>
    %119 = vector.extract_strided_slice %42 {offsets = [2, 0], sizes = [1, 32], strides = [1, 1]} : vector<6x32xf32> to vector<1x32xf32>
    %120 = vector.extract_strided_slice %42 {offsets = [3, 0], sizes = [1, 32], strides = [1, 1]} : vector<6x32xf32> to vector<1x32xf32>
    %cst_50 = arith.constant dense<0.000000e+00> : vector<17xf32>
    %121 = vector.multi_reduction <add>, %118, %cst_50 [1] : vector<17x32xf32> to vector<17xf32>
    %122 = vector.shape_cast %121 : vector<17xf32> to vector<17x1xf32>
    %cst_51 = arith.constant 3.200000e+01 : f32
    %123 = vector.broadcast %cst_51 : f32 to vector<17x1xf32>
    %124 = arith.divf %122, %123 : vector<17x1xf32>
    %125 = vector.broadcast %124 : vector<17x1xf32> to vector<17x32xf32>
    %126 = arith.subf %118, %125 : vector<17x32xf32>
    %127 = arith.mulf %126, %126 : vector<17x32xf32>
    %cst_52 = arith.constant dense<0.000000e+00> : vector<17xf32>
    %128 = vector.multi_reduction <add>, %127, %cst_52 [1] : vector<17x32xf32> to vector<17xf32>
    %129 = vector.shape_cast %128 : vector<17xf32> to vector<17x1xf32>
    %cst_53 = arith.constant 3.200000e+01 : f32
    %130 = vector.broadcast %cst_53 : f32 to vector<17x1xf32>
    %131 = arith.divf %129, %130 : vector<17x1xf32>
    %132 = vector.broadcast %124 : vector<17x1xf32> to vector<17x32xf32>
    %133 = arith.subf %118, %132 : vector<17x32xf32>
    %cst_54 = arith.constant 9.99999974E-6 : f32
    %134 = vector.broadcast %cst_54 : f32 to vector<17x1xf32>
    %135 = arith.addf %131, %134 : vector<17x1xf32>
    %136 = math.rsqrt %135 : vector<17x1xf32>
    %137 = vector.broadcast %136 : vector<17x1xf32> to vector<17x32xf32>
    %138 = arith.mulf %133, %137 : vector<17x32xf32>
    %139 = vector.broadcast %119 : vector<1x32xf32> to vector<17x32xf32>
    %140 = arith.mulf %138, %139 : vector<17x32xf32>
    %141 = vector.broadcast %120 : vector<1x32xf32> to vector<17x32xf32>
    %142 = arith.addf %140, %141 : vector<17x32xf32>
    %c0_55 = arith.constant 0 : index
    %c0_56 = arith.constant 0 : index
    %c0_57 = arith.constant 0 : index
    %143 = vector.load %arg6[%c0_55, %c0_56, %c0_57] : memref<2x32x128xf32, #tpu.memory_space<vmem>>, vector<1x32x128xf32>
    %144 = vector.shape_cast %143 : vector<1x32x128xf32> to vector<32x128xf32>
    %cst_58 = arith.constant dense<0.000000e+00> : vector<17x128xf32>
    %145 = tpu.matmul %142, %144, %cst_58 {dimension_numbers = #tpu.dot_dimension_numbers<[1], [0], [0], [1], [0, 0, 1, 1], [], []>} : vector<17x32xf32>, vector<32x128xf32>, vector<17x128xf32> -> vector<17x128xf32>
    %c0_59 = arith.constant 0 : index
    %c0_60 = arith.constant 0 : index
    %c0_61 = arith.constant 0 : index
    %146 = vector.load %arg9[%c0_59, %c0_60, %c0_61] : memref<2x1x128xf32, #tpu.memory_space<vmem>>, vector<1x1x128xf32>
    %147 = vector.shape_cast %146 : vector<1x1x128xf32> to vector<1x128xf32>
    %148 = vector.broadcast %147 : vector<1x128xf32> to vector<17x128xf32>
    %149 = arith.addf %145, %148 : vector<17x128xf32>
    %cst_62 = arith.constant 5.000000e-01 : f32
    %150 = vector.broadcast %cst_62 : f32 to vector<17x128xf32>
    %151 = arith.mulf %150, %149 : vector<17x128xf32>
    %cst_63 = arith.constant 0.707106769 : f32
    %152 = vector.broadcast %cst_63 : f32 to vector<17x128xf32>
    %153 = arith.mulf %149, %152 : vector<17x128xf32>
    %154 = math.erf %153 : vector<17x128xf32>
    %cst_64 = arith.constant 1.000000e+00 : f32
    %155 = vector.broadcast %cst_64 : f32 to vector<17x128xf32>
    %156 = arith.addf %155, %154 : vector<17x128xf32>
    %157 = arith.mulf %151, %156 : vector<17x128xf32>
    %c0_65 = arith.constant 0 : index
    %c0_66 = arith.constant 0 : index
    %c0_67 = arith.constant 0 : index
    %158 = vector.load %arg7[%c0_65, %c0_66, %c0_67] : memref<2x128x32xf32, #tpu.memory_space<vmem>>, vector<1x128x32xf32>
    %159 = vector.shape_cast %158 : vector<1x128x32xf32> to vector<128x32xf32>
    %cst_68 = arith.constant dense<0.000000e+00> : vector<17x32xf32>
    %160 = tpu.matmul %157, %159, %cst_68 {dimension_numbers = #tpu.dot_dimension_numbers<[1], [0], [0], [1], [0, 0, 1, 1], [], []>} : vector<17x128xf32>, vector<128x32xf32>, vector<17x32xf32> -> vector<17x32xf32>
    %161 = vector.extract_strided_slice %42 {offsets = [5, 0], sizes = [1, 32], strides = [1, 1]} : vector<6x32xf32> to vector<1x32xf32>
    %162 = vector.broadcast %161 : vector<1x32xf32> to vector<17x32xf32>
    %163 = arith.addf %160, %162 : vector<17x32xf32>
    %164 = arith.addf %118, %163 : vector<17x32xf32>
    %c1 = arith.constant 1 : index
    %c0_69 = arith.constant 0 : index
    %c0_70 = arith.constant 0 : index
    %165 = vector.load %arg8[%c1, %c0_69, %c0_70] : memref<2x6x32xf32, #tpu.memory_space<vmem>>, vector<1x6x32xf32>
    %166 = vector.shape_cast %165 : vector<1x6x32xf32> to vector<6x32xf32>
    %167 = vector.extract_strided_slice %166 {offsets = [0, 0], sizes = [1, 32], strides = [1, 1]} : vector<6x32xf32> to vector<1x32xf32>
    %168 = vector.extract_strided_slice %166 {offsets = [1, 0], sizes = [1, 32], strides = [1, 1]} : vector<6x32xf32> to vector<1x32xf32>
    %cst_71 = arith.constant dense<0.000000e+00> : vector<17xf32>
    %169 = vector.multi_reduction <add>, %164, %cst_71 [1] : vector<17x32xf32> to vector<17xf32>
    %170 = vector.shape_cast %169 : vector<17xf32> to vector<17x1xf32>
    %cst_72 = arith.constant 3.200000e+01 : f32
    %171 = vector.broadcast %cst_72 : f32 to vector<17x1xf32>
    %172 = arith.divf %170, %171 : vector<17x1xf32>
    %173 = vector.broadcast %172 : vector<17x1xf32> to vector<17x32xf32>
    %174 = arith.subf %164, %173 : vector<17x32xf32>
    %175 = arith.mulf %174, %174 : vector<17x32xf32>
    %cst_73 = arith.constant dense<0.000000e+00> : vector<17xf32>
    %176 = vector.multi_reduction <add>, %175, %cst_73 [1] : vector<17x32xf32> to vector<17xf32>
    %177 = vector.shape_cast %176 : vector<17xf32> to vector<17x1xf32>
    %cst_74 = arith.constant 3.200000e+01 : f32
    %178 = vector.broadcast %cst_74 : f32 to vector<17x1xf32>
    %179 = arith.divf %177, %178 : vector<17x1xf32>
    %180 = vector.broadcast %172 : vector<17x1xf32> to vector<17x32xf32>
    %181 = arith.subf %164, %180 : vector<17x32xf32>
    %cst_75 = arith.constant 9.99999974E-6 : f32
    %182 = vector.broadcast %cst_75 : f32 to vector<17x1xf32>
    %183 = arith.addf %179, %182 : vector<17x1xf32>
    %184 = math.rsqrt %183 : vector<17x1xf32>
    %185 = vector.broadcast %184 : vector<17x1xf32> to vector<17x32xf32>
    %186 = arith.mulf %181, %185 : vector<17x32xf32>
    %187 = vector.broadcast %167 : vector<1x32xf32> to vector<17x32xf32>
    %188 = arith.mulf %186, %187 : vector<17x32xf32>
    %189 = vector.broadcast %168 : vector<1x32xf32> to vector<17x32xf32>
    %190 = arith.addf %188, %189 : vector<17x32xf32>
    %c1_76 = arith.constant 1 : index
    %c0_77 = arith.constant 0 : index
    %c0_78 = arith.constant 0 : index
    %191 = vector.load %arg4[%c1_76, %c0_77, %c0_78] : memref<2x32x96xf32, #tpu.memory_space<vmem>>, vector<1x32x96xf32>
    %192 = vector.shape_cast %191 : vector<1x32x96xf32> to vector<32x96xf32>
    %cst_79 = arith.constant dense<0.000000e+00> : vector<17x96xf32>
    %193 = tpu.matmul %190, %192, %cst_79 {dimension_numbers = #tpu.dot_dimension_numbers<[1], [0], [0], [1], [0, 0, 1, 1], [], []>} : vector<17x32xf32>, vector<32x96xf32>, vector<17x96xf32> -> vector<17x96xf32>
    %cst_80 = arith.constant 0.000000e+00 : f32
    %194 = vector.broadcast %cst_80 : f32 to vector<17x32xf32>
    %195 = vector.extract_strided_slice %193 {offsets = [0, 0], sizes = [17, 16], strides = [1, 1]} : vector<17x96xf32> to vector<17x16xf32>
    %196 = vector.extract_strided_slice %193 {offsets = [0, 32], sizes = [17, 16], strides = [1, 1]} : vector<17x96xf32> to vector<17x16xf32>
    %197 = vector.extract_strided_slice %193 {offsets = [0, 64], sizes = [17, 16], strides = [1, 1]} : vector<17x96xf32> to vector<17x16xf32>
    %198 = tpu.transpose %196, [1, 0] : vector<17x16xf32> -> vector<16x17xf32>
    %cst_81 = arith.constant dense<0.000000e+00> : vector<17x17xf32>
    %199 = tpu.matmul %195, %198, %cst_81 {dimension_numbers = #tpu.dot_dimension_numbers<[1], [0], [0], [1], [0, 0, 1, 1], [], []>} : vector<17x16xf32>, vector<16x17xf32>, vector<17x17xf32> -> vector<17x17xf32>
    %cst_82 = arith.constant 0.176776692 : f32
    %200 = vector.broadcast %cst_82 : f32 to vector<17x17xf32>
    %201 = arith.mulf %199, %200 : vector<17x17xf32>
    %cst_83 = arith.constant dense<0xFF800000> : vector<17xf32>
    %202 = vector.multi_reduction <maximumf>, %201, %cst_83 [1] : vector<17x17xf32> to vector<17xf32>
    %203 = vector.shape_cast %202 : vector<17xf32> to vector<17x1xf32>
    %204 = vector.broadcast %203 : vector<17x1xf32> to vector<17x17xf32>
    %205 = arith.subf %201, %204 : vector<17x17xf32>
    %206 = math.exp %205 : vector<17x17xf32>
    %cst_84 = arith.constant dense<0.000000e+00> : vector<17xf32>
    %207 = vector.multi_reduction <add>, %206, %cst_84 [1] : vector<17x17xf32> to vector<17xf32>
    %208 = vector.shape_cast %207 : vector<17xf32> to vector<17x1xf32>
    %209 = tpu.reciprocal %208 {approx = true} : vector<17x1xf32> -> vector<17x1xf32>
    %210 = vector.broadcast %209 : vector<17x1xf32> to vector<17x17xf32>
    %211 = arith.mulf %206, %210 : vector<17x17xf32>
    %cst_85 = arith.constant dense<0.000000e+00> : vector<17x16xf32>
    %212 = tpu.matmul %211, %197, %cst_85 {dimension_numbers = #tpu.dot_dimension_numbers<[1], [0], [0], [1], [0, 0, 1, 1], [], []>} : vector<17x17xf32>, vector<17x16xf32>, vector<17x16xf32> -> vector<17x16xf32>
    %c1_86 = arith.constant 1 : index
    %c0_87 = arith.constant 0 : index
    %c0_88 = arith.constant 0 : index
    %213 = vector.load %arg5[%c1_86, %c0_87, %c0_88] : memref<2x32x32xf32, #tpu.memory_space<vmem>>, vector<1x16x32xf32>
    %214 = vector.shape_cast %213 : vector<1x16x32xf32> to vector<16x32xf32>
    %cst_89 = arith.constant dense<0.000000e+00> : vector<17x32xf32>
    %215 = tpu.matmul %212, %214, %cst_89 {dimension_numbers = #tpu.dot_dimension_numbers<[1], [0], [0], [1], [0, 0, 1, 1], [], []>} : vector<17x16xf32>, vector<16x32xf32>, vector<17x32xf32> -> vector<17x32xf32>
    %216 = arith.addf %194, %215 : vector<17x32xf32>
    %217 = vector.extract_strided_slice %193 {offsets = [0, 16], sizes = [17, 16], strides = [1, 1]} : vector<17x96xf32> to vector<17x16xf32>
    %218 = vector.extract_strided_slice %193 {offsets = [0, 48], sizes = [17, 16], strides = [1, 1]} : vector<17x96xf32> to vector<17x16xf32>
    %219 = vector.extract_strided_slice %193 {offsets = [0, 80], sizes = [17, 16], strides = [1, 1]} : vector<17x96xf32> to vector<17x16xf32>
    %220 = tpu.transpose %218, [1, 0] : vector<17x16xf32> -> vector<16x17xf32>
    %cst_90 = arith.constant dense<0.000000e+00> : vector<17x17xf32>
    %221 = tpu.matmul %217, %220, %cst_90 {dimension_numbers = #tpu.dot_dimension_numbers<[1], [0], [0], [1], [0, 0, 1, 1], [], []>} : vector<17x16xf32>, vector<16x17xf32>, vector<17x17xf32> -> vector<17x17xf32>
    %cst_91 = arith.constant 0.176776692 : f32
    %222 = vector.broadcast %cst_91 : f32 to vector<17x17xf32>
    %223 = arith.mulf %221, %222 : vector<17x17xf32>
    %cst_92 = arith.constant dense<0xFF800000> : vector<17xf32>
    %224 = vector.multi_reduction <maximumf>, %223, %cst_92 [1] : vector<17x17xf32> to vector<17xf32>
    %225 = vector.shape_cast %224 : vector<17xf32> to vector<17x1xf32>
    %226 = vector.broadcast %225 : vector<17x1xf32> to vector<17x17xf32>
    %227 = arith.subf %223, %226 : vector<17x17xf32>
    %228 = math.exp %227 : vector<17x17xf32>
    %cst_93 = arith.constant dense<0.000000e+00> : vector<17xf32>
    %229 = vector.multi_reduction <add>, %228, %cst_93 [1] : vector<17x17xf32> to vector<17xf32>
    %230 = vector.shape_cast %229 : vector<17xf32> to vector<17x1xf32>
    %231 = tpu.reciprocal %230 {approx = true} : vector<17x1xf32> -> vector<17x1xf32>
    %232 = vector.broadcast %231 : vector<17x1xf32> to vector<17x17xf32>
    %233 = arith.mulf %228, %232 : vector<17x17xf32>
    %cst_94 = arith.constant dense<0.000000e+00> : vector<17x16xf32>
    %234 = tpu.matmul %233, %219, %cst_94 {dimension_numbers = #tpu.dot_dimension_numbers<[1], [0], [0], [1], [0, 0, 1, 1], [], []>} : vector<17x17xf32>, vector<17x16xf32>, vector<17x16xf32> -> vector<17x16xf32>
    %c1_95 = arith.constant 1 : index
    %c16_96 = arith.constant 16 : index
    %c0_97 = arith.constant 0 : index
    %235 = vector.load %arg5[%c1_95, %c16_96, %c0_97] : memref<2x32x32xf32, #tpu.memory_space<vmem>>, vector<1x16x32xf32>
    %236 = vector.shape_cast %235 : vector<1x16x32xf32> to vector<16x32xf32>
    %cst_98 = arith.constant dense<0.000000e+00> : vector<17x32xf32>
    %237 = tpu.matmul %234, %236, %cst_98 {dimension_numbers = #tpu.dot_dimension_numbers<[1], [0], [0], [1], [0, 0, 1, 1], [], []>} : vector<17x16xf32>, vector<16x32xf32>, vector<17x32xf32> -> vector<17x32xf32>
    %238 = arith.addf %216, %237 : vector<17x32xf32>
    %239 = vector.extract_strided_slice %166 {offsets = [4, 0], sizes = [1, 32], strides = [1, 1]} : vector<6x32xf32> to vector<1x32xf32>
    %240 = vector.broadcast %239 : vector<1x32xf32> to vector<17x32xf32>
    %241 = arith.addf %238, %240 : vector<17x32xf32>
    %242 = arith.addf %164, %241 : vector<17x32xf32>
    %243 = vector.extract_strided_slice %166 {offsets = [2, 0], sizes = [1, 32], strides = [1, 1]} : vector<6x32xf32> to vector<1x32xf32>
    %244 = vector.extract_strided_slice %166 {offsets = [3, 0], sizes = [1, 32], strides = [1, 1]} : vector<6x32xf32> to vector<1x32xf32>
    %cst_99 = arith.constant dense<0.000000e+00> : vector<17xf32>
    %245 = vector.multi_reduction <add>, %242, %cst_99 [1] : vector<17x32xf32> to vector<17xf32>
    %246 = vector.shape_cast %245 : vector<17xf32> to vector<17x1xf32>
    %cst_100 = arith.constant 3.200000e+01 : f32
    %247 = vector.broadcast %cst_100 : f32 to vector<17x1xf32>
    %248 = arith.divf %246, %247 : vector<17x1xf32>
    %249 = vector.broadcast %248 : vector<17x1xf32> to vector<17x32xf32>
    %250 = arith.subf %242, %249 : vector<17x32xf32>
    %251 = arith.mulf %250, %250 : vector<17x32xf32>
    %cst_101 = arith.constant dense<0.000000e+00> : vector<17xf32>
    %252 = vector.multi_reduction <add>, %251, %cst_101 [1] : vector<17x32xf32> to vector<17xf32>
    %253 = vector.shape_cast %252 : vector<17xf32> to vector<17x1xf32>
    %cst_102 = arith.constant 3.200000e+01 : f32
    %254 = vector.broadcast %cst_102 : f32 to vector<17x1xf32>
    %255 = arith.divf %253, %254 : vector<17x1xf32>
    %256 = vector.broadcast %248 : vector<17x1xf32> to vector<17x32xf32>
    %257 = arith.subf %242, %256 : vector<17x32xf32>
    %cst_103 = arith.constant 9.99999974E-6 : f32
    %258 = vector.broadcast %cst_103 : f32 to vector<17x1xf32>
    %259 = arith.addf %255, %258 : vector<17x1xf32>
    %260 = math.rsqrt %259 : vector<17x1xf32>
    %261 = vector.broadcast %260 : vector<17x1xf32> to vector<17x32xf32>
    %262 = arith.mulf %257, %261 : vector<17x32xf32>
    %263 = vector.broadcast %243 : vector<1x32xf32> to vector<17x32xf32>
    %264 = arith.mulf %262, %263 : vector<17x32xf32>
    %265 = vector.broadcast %244 : vector<1x32xf32> to vector<17x32xf32>
    %266 = arith.addf %264, %265 : vector<17x32xf32>
    %c1_104 = arith.constant 1 : index
    %c0_105 = arith.constant 0 : index
    %c0_106 = arith.constant 0 : index
    %267 = vector.load %arg6[%c1_104, %c0_105, %c0_106] : memref<2x32x128xf32, #tpu.memory_space<vmem>>, vector<1x32x128xf32>
    %268 = vector.shape_cast %267 : vector<1x32x128xf32> to vector<32x128xf32>
    %cst_107 = arith.constant dense<0.000000e+00> : vector<17x128xf32>
    %269 = tpu.matmul %266, %268, %cst_107 {dimension_numbers = #tpu.dot_dimension_numbers<[1], [0], [0], [1], [0, 0, 1, 1], [], []>} : vector<17x32xf32>, vector<32x128xf32>, vector<17x128xf32> -> vector<17x128xf32>
    %c1_108 = arith.constant 1 : index
    %c0_109 = arith.constant 0 : index
    %c0_110 = arith.constant 0 : index
    %270 = vector.load %arg9[%c1_108, %c0_109, %c0_110] : memref<2x1x128xf32, #tpu.memory_space<vmem>>, vector<1x1x128xf32>
    %271 = vector.shape_cast %270 : vector<1x1x128xf32> to vector<1x128xf32>
    %272 = vector.broadcast %271 : vector<1x128xf32> to vector<17x128xf32>
    %273 = arith.addf %269, %272 : vector<17x128xf32>
    %cst_111 = arith.constant 5.000000e-01 : f32
    %274 = vector.broadcast %cst_111 : f32 to vector<17x128xf32>
    %275 = arith.mulf %274, %273 : vector<17x128xf32>
    %cst_112 = arith.constant 0.707106769 : f32
    %276 = vector.broadcast %cst_112 : f32 to vector<17x128xf32>
    %277 = arith.mulf %273, %276 : vector<17x128xf32>
    %278 = math.erf %277 : vector<17x128xf32>
    %cst_113 = arith.constant 1.000000e+00 : f32
    %279 = vector.broadcast %cst_113 : f32 to vector<17x128xf32>
    %280 = arith.addf %279, %278 : vector<17x128xf32>
    %281 = arith.mulf %275, %280 : vector<17x128xf32>
    %c1_114 = arith.constant 1 : index
    %c0_115 = arith.constant 0 : index
    %c0_116 = arith.constant 0 : index
    %282 = vector.load %arg7[%c1_114, %c0_115, %c0_116] : memref<2x128x32xf32, #tpu.memory_space<vmem>>, vector<1x128x32xf32>
    %283 = vector.shape_cast %282 : vector<1x128x32xf32> to vector<128x32xf32>
    %cst_117 = arith.constant dense<0.000000e+00> : vector<17x32xf32>
    %284 = tpu.matmul %281, %283, %cst_117 {dimension_numbers = #tpu.dot_dimension_numbers<[1], [0], [0], [1], [0, 0, 1, 1], [], []>} : vector<17x128xf32>, vector<128x32xf32>, vector<17x32xf32> -> vector<17x32xf32>
    %285 = vector.extract_strided_slice %166 {offsets = [5, 0], sizes = [1, 32], strides = [1, 1]} : vector<6x32xf32> to vector<1x32xf32>
    %286 = vector.broadcast %285 : vector<1x32xf32> to vector<17x32xf32>
    %287 = arith.addf %284, %286 : vector<17x32xf32>
    %288 = arith.addf %242, %287 : vector<17x32xf32>
    %c0_118 = arith.constant 0 : index
    %c0_119 = arith.constant 0 : index
    %c0_120 = arith.constant 0 : index
    %289 = vector.load %arg10[%c0_118, %c0_119, %c0_120] : memref<1x17x32xf32, #tpu.memory_space<vmem>>, vector<1x17x32xf32>
    %290 = vector.shape_cast %289 : vector<1x17x32xf32> to vector<17x32xf32>
    %291 = vector.shape_cast %288 : vector<17x32xf32> to vector<1x17x32xf32>
    tpu.vector_store %arg10[%c0_118, %c0_119, %c0_120], %291 {strides = array<i32>} : memref<1x17x32xf32, #tpu.memory_space<vmem>>, vector<1x17x32xf32>,
    return
  }
  func.func @transform_0(%arg0: i32) -> (i32, i32, i32) {
    %c0_i32 = arith.constant 0 : i32
    %c0_i32_0 = arith.constant 0 : i32
    %c0_i32_1 = arith.constant 0 : i32
    return %arg0, %c0_i32, %c0_i32_0 : i32, i32, i32
  }
  func.func @transform_1(%arg0: i32) -> (i32, i32) {
    %c0_i32 = arith.constant 0 : i32
    %c0_i32_0 = arith.constant 0 : i32
    %c0_i32_1 = arith.constant 0 : i32
    return %c0_i32, %c0_i32_0 : i32, i32
  }
  func.func @transform_2(%arg0: i32) -> (i32, i32) {
    %c0_i32 = arith.constant 0 : i32
    %c0_i32_0 = arith.constant 0 : i32
    %c0_i32_1 = arith.constant 0 : i32
    return %c0_i32, %c0_i32_0 : i32, i32
  }
  func.func @transform_3(%arg0: i32) -> (i32, i32, i32) {
    %c0_i32 = arith.constant 0 : i32
    %c0_i32_0 = arith.constant 0 : i32
    %c0_i32_1 = arith.constant 0 : i32
    %c0_i32_2 = arith.constant 0 : i32
    return %c0_i32, %c0_i32_0, %c0_i32_1 : i32, i32, i32
  }
  func.func @transform_4(%arg0: i32) -> (i32, i32, i32) {
    %c0_i32 = arith.constant 0 : i32
    %c0_i32_0 = arith.constant 0 : i32
    %c0_i32_1 = arith.constant 0 : i32
    %c0_i32_2 = arith.constant 0 : i32
    return %c0_i32, %c0_i32_0, %c0_i32_1 : i32, i32, i32
  }
  func.func @transform_5(%arg0: i32) -> (i32, i32, i32) {
    %c0_i32 = arith.constant 0 : i32
    %c0_i32_0 = arith.constant 0 : i32
    %c0_i32_1 = arith.constant 0 : i32
    %c0_i32_2 = arith.constant 0 : i32
    return %c0_i32, %c0_i32_0, %c0_i32_1 : i32, i32, i32
  }
  func.func @transform_6(%arg0: i32) -> (i32, i32, i32) {
    %c0_i32 = arith.constant 0 : i32
    %c0_i32_0 = arith.constant 0 : i32
    %c0_i32_1 = arith.constant 0 : i32
    %c0_i32_2 = arith.constant 0 : i32
    return %c0_i32, %c0_i32_0, %c0_i32_1 : i32, i32, i32
  }
  func.func @transform_7(%arg0: i32) -> (i32, i32, i32) {
    %c0_i32 = arith.constant 0 : i32
    %c0_i32_0 = arith.constant 0 : i32
    %c0_i32_1 = arith.constant 0 : i32
    %c0_i32_2 = arith.constant 0 : i32
    return %c0_i32, %c0_i32_0, %c0_i32_1 : i32, i32, i32
  }
  func.func @transform_8(%arg0: i32) -> (i32, i32, i32) {
    %c0_i32 = arith.constant 0 : i32
    %c0_i32_0 = arith.constant 0 : i32
    %c0_i32_1 = arith.constant 0 : i32
    %c0_i32_2 = arith.constant 0 : i32
    return %c0_i32, %c0_i32_0, %c0_i32_1 : i32, i32, i32
  }
  func.func @transform_9(%arg0: i32) -> (i32, i32, i32) {
    %c0_i32 = arith.constant 0 : i32
    %c0_i32_0 = arith.constant 0 : i32
    %c0_i32_1 = arith.constant 0 : i32
    return %arg0, %c0_i32, %c0_i32_0 : i32, i32, i32
  }
}

</mosaic_0001>

<llo_original>
// kernel: vision_transformer_forward.1
$region0: #{vision_transformer_forward.1}
  #allocation0 [shape = 'u32[]', space=smem, size = 0x4, offset = 0x4, fixed_abs, tag = 'smem constant byte address 0x4 - core index']
  #allocation1 [shape = 'u32[144,128]{1,0:T(1,128)}', space=vmem, size = 0x12000, scoped, tag = 'internal scratch']
  %s0 = inlined_call_operand.vmem [shape: f32[2,16,64], index: 0, kind: input, shape index: {}]
  %s1 = inlined_call_operand.vmem [shape: f32[64,32], index: 1, kind: input, shape index: {}]
  %s2 = inlined_call_operand.vmem [shape: f32[4,32], index: 2, kind: input, shape index: {}]
  %s3 = inlined_call_operand.vmem [shape: f32[2,32,96], index: 3, kind: input, shape index: {}]
  %s4 = inlined_call_operand.vmem [shape: f32[2,32,32], index: 4, kind: input, shape index: {}]
  %s5 = inlined_call_operand.vmem [shape: f32[2,32,128], index: 5, kind: input, shape index: {}]
  %s6 = inlined_call_operand.vmem [shape: f32[2,128,32], index: 6, kind: input, shape index: {}]
  %s7 = inlined_call_operand.vmem [shape: f32[2,6,32], index: 7, kind: input, shape index: {}]
  %s8 = inlined_call_operand.vmem [shape: f32[2,1,128], index: 8, kind: input, shape index: {}]
  %s9 = inlined_call_operand.vmem [shape: f32[2,17,32], index: 9, kind: output, shape index: {}]
  %s10 = sld [smem:[#allocation0]]
  $region69: #{vision_transformer_forward.1} parent=0
    _
  %s12 = ssub.s32 1, %s10
  %s13 = scalar_select 0, %s12, %s10
  loop: start=0, step=1, limit=4
  $region2: #{vision_transformer_forward.1} parent=0 // loop_pre_header
    _
  $region3: #{vision_transformer_forward.1} parent=0 // loop_header
    %s15 = sphi 0, %s19
    %p16 = scmp.ge.s32.totalorder %s15, 4
    %s25 = sphi 0, %s27
    %s28 = sphi 0, %s25
    %s29 = sphi 0, %s28
    %s45 = sphi 0, %s29
    %s49 = sphi 0, %s49
    %s51 = sphi 0, %s49
    %s52 = sphi 0, %s51
    %s66 = sphi 0, %s52
    %s70 = sphi 0, %s70
    %s72 = sphi 0, %s70
    %s73 = sphi 0, %s72
    %s87 = sphi 0, %s73
    %s91 = sphi 0, %s91
    %s93 = sphi 0, %s91
    %s94 = sphi 0, %s93
    %s108 = sphi 0, %s94
    %s112 = sphi 0, %s112
    %s114 = sphi 0, %s112
    %s115 = sphi 0, %s114
    %s129 = sphi 0, %s115
    %s133 = sphi 0, %s133
    %s135 = sphi 0, %s133
    %s136 = sphi 0, %s135
    %s150 = sphi 0, %s136
    %s154 = sphi 0, %s154
    %s156 = sphi 0, %s154
    %s157 = sphi 0, %s156
    %s171 = sphi 0, %s157
    %s175 = sphi 0, %s175
    %s177 = sphi 0, %s175
    %s178 = sphi 0, %s177
    %s192 = sphi 0, %s178
    %s196 = sphi 0, %s196
    %s198 = sphi 0, %s196
    %s199 = sphi 0, %s198
    %s213 = sphi 0, %s199
    %s219 = sphi 0, %s221
    %s222 = sphi 0, %s219
    %s223 = sphi 0, %s222
    %s239 = sphi 0, %s223
  $region4: #{vision_transformer_forward.1} parent=0 // loop_header_branch
    %18 = sbr.rel (%p16) target = $region8
  $region5: #{vision_transformer_forward.1} parent=0 // loop_body
    %s20 = ssub.s32 %s15, 1
    %s21 = ssub.s32 %s15, 2
    %s22 = sadd.s32 %s15, 1
    %s23 = ssub.s32 %s15, %s22
    %p24 = scmp.eq.s32.totalorder %s23, 0
    %s26 = sadd.s32 %s25, 1
    %s27 = scalar_select %p24, %s25, %s26
    %p30 = pneg %p24
    %p31 = scmp.eq.s32.totalorder %s15, 1
    %p32 = por %p30, %p31
    %p33 = scmp.ne.s32.totalorder %s25, %s28
    %p34 = scmp.eq.s32.totalorder %s15, 0
    %p35 = por %p33, %p34
    %p36 = scmp.ne.s32.totalorder %s25, %s28
    %p37 = scmp.eq.s32.totalorder %s20, 1
    %p38 = por %p36, %p37
    %p39 = scmp.ne.s32.totalorder %s28, %s29
    %p40 = scmp.eq.s32.totalorder %s20, 0
    %p41 = por %p39, %p40
    %p42 = scmp.ne.s32.totalorder %s28, %s29
    %p43 = scmp.eq.s32.totalorder %s21, 1
    %p44 = por %p42, %p43
    %p46 = scmp.ne.s32.totalorder %s29, %s45
    %p47 = scmp.eq.s32.totalorder %s21, 0
    %p48 = por %p46, %p47
    %s50 = sadd.s32 %s49, 1
    %p53 = scmp.eq.s32.totalorder %s15, 1
    %p54 = scmp.ne.s32.totalorder %s49, %s51
    %p55 = scmp.eq.s32.totalorder %s15, 0
    %p56 = por %p54, %p55
    %p57 = scmp.ne.s32.totalorder %s49, %s51
    %p58 = scmp.eq.s32.totalorder %s20, 1
    %p59 = por %p57, %p58
    %p60 = scmp.ne.s32.totalorder %s51, %s52
    %p61 = scmp.eq.s32.totalorder %s20, 0
    %p62 = por %p60, %p61
    %p63 = scmp.ne.s32.totalorder %s51, %s52
    %p64 = scmp.eq.s32.totalorder %s21, 1
    %p65 = por %p63, %p64
    %p67 = scmp.ne.s32.totalorder %s52, %s66
    %p68 = scmp.eq.s32.totalorder %s21, 0
    %p69 = por %p67, %p68
    %s71 = sadd.s32 %s70, 1
    %p74 = scmp.eq.s32.totalorder %s15, 1
    %p75 = scmp.ne.s32.totalorder %s70, %s72
    %p76 = scmp.eq.s32.totalorder %s15, 0
    %p77 = por %p75, %p76
    %p78 = scmp.ne.s32.totalorder %s70, %s72
    %p79 = scmp.eq.s32.totalorder %s20, 1
    %p80 = por %p78, %p79
    %p81 = scmp.ne.s32.totalorder %s72, %s73
    %p82 = scmp.eq.s32.totalorder %s20, 0
    %p83 = por %p81, %p82
    %p84 = scmp.ne.s32.totalorder %s72, %s73
    %p85 = scmp.eq.s32.totalorder %s21, 1
    %p86 = por %p84, %p85
    %p88 = scmp.ne.s32.totalorder %s73, %s87
    %p89 = scmp.eq.s32.totalorder %s21, 0
    %p90 = por %p88, %p89
    %s92 = sadd.s32 %s91, 1
    %p95 = scmp.eq.s32.totalorder %s15, 1
    %p96 = scmp.ne.s32.totalorder %s91, %s93
    %p97 = scmp.eq.s32.totalorder %s15, 0
    %p98 = por %p96, %p97
    %p99 = scmp.ne.s32.totalorder %s91, %s93
    %p100 = scmp.eq.s32.totalorder %s20, 1
    %p101 = por %p99, %p100
    %p102 = scmp.ne.s32.totalorder %s93, %s94
    %p103 = scmp.eq.s32.totalorder %s20, 0
    %p104 = por %p102, %p103
    %p105 = scmp.ne.s32.totalorder %s93, %s94
    %p106 = scmp.eq.s32.totalorder %s21, 1
    %p107 = por %p105, %p106
    %p109 = scmp.ne.s32.totalorder %s94, %s108
    %p110 = scmp.eq.s32.totalorder %s21, 0
    %p111 = por %p109, %p110
    %s113 = sadd.s32 %s112, 1
    %p116 = scmp.eq.s32.totalorder %s15, 1
    %p117 = scmp.ne.s32.totalorder %s112, %s114
    %p118 = scmp.eq.s32.totalorder %s15, 0
    %p119 = por %p117, %p118
    %p120 = scmp.ne.s32.totalorder %s112, %s114
    %p121 = scmp.eq.s32.totalorder %s20, 1
    %p122 = por %p120, %p121
    %p123 = scmp.ne.s32.totalorder %s114, %s115
    %p124 = scmp.eq.s32.totalorder %s20, 0
    %p125 = por %p123, %p124
    %p126 = scmp.ne.s32.totalorder %s114, %s115
    %p127 = scmp.eq.s32.totalorder %s21, 1
    %p128 = por %p126, %p127
    %p130 = scmp.ne.s32.totalorder %s115, %s129
    %p131 = scmp.eq.s32.totalorder %s21, 0
    %p132 = por %p130, %p131
    %s134 = sadd.s32 %s133, 1
    %p137 = scmp.eq.s32.totalorder %s15, 1
    %p138 = scmp.ne.s32.totalorder %s133, %s135
    %p139 = scmp.eq.s32.totalorder %s15, 0
    %p140 = por %p138, %p139
    %p141 = scmp.ne.s32.totalorder %s133, %s135
    %p142 = scmp.eq.s32.totalorder %s20, 1
    %p143 = por %p141, %p142
    %p144 = scmp.ne.s32.totalorder %s135, %s136
    %p145 = scmp.eq.s32.totalorder %s20, 0
    %p146 = por %p144, %p145
    %p147 = scmp.ne.s32.totalorder %s135, %s136
    %p148 = scmp.eq.s32.totalorder %s21, 1
    %p149 = por %p147, %p148
    %p151 = scmp.ne.s32.totalorder %s136, %s150
    %p152 = scmp.eq.s32.totalorder %s21, 0
    %p153 = por %p151, %p152
    %s155 = sadd.s32 %s154, 1
    %p158 = scmp.eq.s32.totalorder %s15, 1
    %p159 = scmp.ne.s32.totalorder %s154, %s156
    %p160 = scmp.eq.s32.totalorder %s15, 0
    %p161 = por %p159, %p160
    %p162 = scmp.ne.s32.totalorder %s154, %s156
    %p163 = scmp.eq.s32.totalorder %s20, 1
    %p164 = por %p162, %p163
    %p165 = scmp.ne.s32.totalorder %s156, %s157
    %p166 = scmp.eq.s32.totalorder %s20, 0
    %p167 = por %p165, %p166
    %p168 = scmp.ne.s32.totalorder %s156, %s157
    %p169 = scmp.eq.s32.totalorder %s21, 1
    %p170 = por %p168, %p169
    %p172 = scmp.ne.s32.totalorder %s157, %s171
    %p173 = scmp.eq.s32.totalorder %s21, 0
    %p174 = por %p172, %p173
    %s176 = sadd.s32 %s175, 1
    %p179 = scmp.eq.s32.totalorder %s15, 1
    %p180 = scmp.ne.s32.totalorder %s175, %s177
    %p181 = scmp.eq.s32.totalorder %s15, 0
    %p182 = por %p180, %p181
    %p183 = scmp.ne.s32.totalorder %s175, %s177
    %p184 = scmp.eq.s32.totalorder %s20, 1
    %p185 = por %p183, %p184
    %p186 = scmp.ne.s32.totalorder %s177, %s178
    %p187 = scmp.eq.s32.totalorder %s20, 0
    %p188 = por %p186, %p187
    %p189 = scmp.ne.s32.totalorder %s177, %s178
    %p190 = scmp.eq.s32.totalorder %s21, 1
    %p191 = por %p189, %p190
    %p193 = scmp.ne.s32.totalorder %s178, %s192
    %p194 = scmp.eq.s32.totalorder %s21, 0
    %p195 = por %p193, %p194
    %s197 = sadd.s32 %s196, 1
    %p200 = scmp.eq.s32.totalorder %s15, 1
    %p201 = scmp.ne.s32.totalorder %s196, %s198
    %p202 = scmp.eq.s32.totalorder %s15, 0
    %p203 = por %p201, %p202
    %p204 = scmp.ne.s32.totalorder %s196, %s198
    %p205 = scmp.eq.s32.totalorder %s20, 1
    %p206 = por %p204, %p205
    %p207 = scmp.ne.s32.totalorder %s198, %s199
    %p208 = scmp.eq.s32.totalorder %s20, 0
    %p209 = por %p207, %p208
    %p210 = scmp.ne.s32.totalorder %s198, %s199
    %p211 = scmp.eq.s32.totalorder %s21, 1
    %p212 = por %p210, %p211
    %p214 = scmp.ne.s32.totalorder %s199, %s213
    %p215 = scmp.eq.s32.totalorder %s21, 0
    %p216 = por %p214, %p215
    %s217 = ssub.s32 %s15, %s22
    %p218 = scmp.eq.s32.totalorder %s217, 0
    %s220 = sadd.s32 %s219, 1
    %s221 = scalar_select %p218, %s219, %s220
    %p224 = pneg %p218
    %p225 = scmp.eq.s32.totalorder %s15, 1
    %p226 = por %p224, %p225
    %p227 = scmp.ne.s32.totalorder %s219, %s222
    %p228 = scmp.eq.s32.totalorder %s15, 0
    %p229 = por %p227, %p228
    %p230 = scmp.ne.s32.totalorder %s219, %s222
    %p231 = scmp.eq.s32.totalorder %s20, 1
    %p232 = por %p230, %p231
    %p233 = scmp.ne.s32.totalorder %s222, %s223
    %p234 = scmp.eq.s32.totalorder %s20, 0
    %p235 = por %p233, %p234
    %p236 = scmp.ne.s32.totalorder %s222, %s223
    %p237 = scmp.eq.s32.totalorder %s21, 1
    %p238 = por %p236, %p237
    %p240 = scmp.ne.s32.totalorder %s223, %s239
    %p241 = scmp.eq.s32.totalorder %s21, 0
    %p242 = por %p240, %p241
    %p243 = scmp.le.s32.totalorder 1, %s15
    %p244 = scmp.lt.s32.totalorder %s15, 3
    %p245 = pnand %p243, %p244
    %p246 = pneg %p245
    // Predicated region
    $region9: #{vision_transformer_forward.1} parent=5 // pred_check
      _
    $region10: #{vision_transformer_forward.1} parent=5 // pred_check_branch
      %248 = sbr.rel (%p245) target = $region12
    $region11: #{vision_transformer_forward.1} parent=5 // pred_region
      %s249 = ssub.s32 %s15, 1
      // Predicated region
      $region13: #{vision_transformer_forward.1} parent=11 // pred_check
        %p250 = pneg %p62
      $region14: #{vision_transformer_forward.1} parent=11 // pred_check_branch
        %252 = sbr.rel (%p250) target = $region16
      $region15: #{vision_transformer_forward.1} parent=11 // pred_region
        _
      $region16: #{vision_transformer_forward.1} parent=11 // pred_fallthru
        _
      // Predicated region
      $region17: #{vision_transformer_forward.1} parent=11 // pred_check
        %p253 = pneg %p83
      $region18: #{vision_transformer_forward.1} parent=11 // pred_check_branch
        %255 = sbr.rel (%p253) target = $region20
      $region19: #{vision_transformer_forward.1} parent=11 // pred_region
        _
      $region20: #{vision_transformer_forward.1} parent=11 // pred_fallthru
        _
      // Predicated region
      $region21: #{vision_transformer_forward.1} parent=11 // pred_check
        %p256 = pneg %p104
      $region22: #{vision_transformer_forward.1} parent=11 // pred_check_branch
        %258 = sbr.rel (%p256) target = $region24
      $region23: #{vision_transformer_forward.1} parent=11 // pred_region
        _
      $region24: #{vision_transformer_forward.1} parent=11 // pred_fallthru
        _
      // Predicated region
      $region25: #{vision_transformer_forward.1} parent=11 // pred_check
        %p259 = pneg %p125
      $region26: #{vision_transformer_forward.1} parent=11 // pred_check_branch
        %261 = sbr.rel (%p259) target = $region28
      $region27: #{vision_transformer_forward.1} parent=11 // pred_region
        _
      $region28: #{vision_transformer_forward.1} parent=11 // pred_fallthru
        _
      // Predicated region
      $region29: #{vision_transformer_forward.1} parent=11 // pred_check
        %p262 = pneg %p146
      $region30: #{vision_transformer_forward.1} parent=11 // pred_check_branch
        %264 = sbr.rel (%p262) target = $region32
      $region31: #{vision_transformer_forward.1} parent=11 // pred_region
        _
      $region32: #{vision_transformer_forward.1} parent=11 // pred_fallthru
        _
      // Predicated region
      $region33: #{vision_transformer_forward.1} parent=11 // pred_check
        %p265 = pneg %p167
      $region34: #{vision_transformer_forward.1} parent=11 // pred_check_branch
        %267 = sbr.rel (%p265) target = $region36
      $region35: #{vision_transformer_forward.1} parent=11 // pred_region
        _
      $region36: #{vision_transformer_forward.1} parent=11 // pred_fallthru
        _
      // Predicated region
      $region37: #{vision_transformer_forward.1} parent=11 // pred_check
        %p268 = pneg %p188
      $region38: #{vision_transformer_forward.1} parent=11 // pred_check_branch
        %270 = sbr.rel (%p268) target = $region40
      $region39: #{vision_transformer_forward.1} parent=11 // pred_region
        _
      $region40: #{vision_transformer_forward.1} parent=11 // pred_fallthru
        _
      // Predicated region
      $region41: #{vision_transformer_forward.1} parent=11 // pred_check
        %p271 = pneg %p209
      $region42: #{vision_transformer_forward.1} parent=11 // pred_check_branch
        %273 = sbr.rel (%p271) target = $region44
      $region43: #{vision_transformer_forward.1} parent=11 // pred_region
        _
      $region44: #{vision_transformer_forward.1} parent=11 // pred_fallthru
        _
    $region12: #{vision_transformer_forward.1} parent=5 // pred_fallthru
      _
    %p274 = scmp.lt.s32.totalorder %s15, 2
    // Predicated region
    $region45: #{vision_transformer_forward.1} parent=5 // pred_check
      %p275 = pneg %p274
    $region46: #{vision_transformer_forward.1} parent=5 // pred_check_branch
      %277 = sbr.rel (%p275) target = $region48
    $region47: #{vision_transformer_forward.1} parent=5 // pred_region
      // Predicated region
      $region49: #{vision_transformer_forward.1} parent=47 // pred_check
        %p278 = pneg %p35
      $region50: #{vision_transformer_forward.1} parent=47 // pred_check_branch
        %280 = sbr.rel (%p278) target = $region52
      $region51: #{vision_transformer_forward.1} parent=47 // pred_region
        %p281 = scmp.lt.s32.totalorder %s15, 1
        %s282 = scalar_select %p281, %s15, 1
        %s283 = smul.addr %s282, 2
        %s284 = smul.addr %s283, 8
        %s285 = scalar_lea.vmem %s0, %s284
      $region52: #{vision_transformer_forward.1} parent=47 // pred_fallthru
        _
    $region48: #{vision_transformer_forward.1} parent=5 // pred_fallthru
      _
    %p286 = scmp.le.s32.totalorder 1, %s15
    %p287 = scmp.lt.s32.totalorder %s15, 3
    %p288 = pnand %p286, %p287
    %p289 = pneg %p288
    // Predicated region
    $region53: #{vision_transformer_forward.1} parent=5 // pred_check
      _
    $region54: #{vision_transformer_forward.1} parent=5 // pred_check_branch
      %291 = sbr.rel (%p288) target = $region56
    $region55: #{vision_transformer_forward.1} parent=5 // pred_region
      %s292 = ssub.s32 %s15, 1
      %p293 = scmp.lt.s32.totalorder %s20, 1
      %s294 = scalar_select %p293, %s20, 1
      %s295 = smul.addr %s294, 2
      %s296 = smul.addr %s295, 8
      %s297 = scalar_lea.vmem %s0, %s296
      %p298 = pneg %p41
      %p299 = pneg %p38
      %p300 = pneg %p62
      %p301 = pneg %p59
      %p302 = pneg %p83
      %p303 = pneg %p80
      %p304 = pneg %p104
      %p305 = pneg %p101
      %p306 = pneg %p125
      %p307 = pneg %p122
      %p308 = pneg %p146
      %p309 = pneg %p143
      %p310 = pneg %p167
      %p311 = pneg %p164
      %p312 = pneg %p188
      %p313 = pneg %p185
      %p314 = pneg %p209
      %p315 = pneg %p206
      %p316 = pneg %p235
      %p317 = pneg %p232
      %p318 = scmp.lt.s32.totalorder %s20, 1
      %s319 = scalar_select %p318, %s20, 1
      %s320 = smul.addr %s319, 3
      %s321 = smul.addr %s320, 8
      %s322 = scalar_lea.vmem %s9, %s321
      %p323 = scmp.lt.s32.totalorder %s20, 1
      %s324 = scalar_select %p323, %s20, 1
      %s325 = smul.addr %s324, 2
      %s326 = smul.addr %s325, 8
      %s327 = scalar_lea.vmem %s0, %s326
      %p328 = scmp.lt.s32.totalorder %s20, 1
      %s329 = scalar_select %p328, %s20, 1
      %s330 = smul.addr %s329, 3
      %s331 = smul.addr %s330, 8
      %s332 = scalar_lea.vmem %s9, %s331
      %v333 = vld [vmem:[%s327] sm:$0xff]
      %v334 = vld [vmem:[%s327 + $0x8] sm:$0xff]
      %v335 = vld [vmem:[%s1] sm:$0xff]
      %v336 = vld [vmem:[%s1 + $0x8] sm:$0xff]
      %v337 = vld [vmem:[%s1 + $0x10] sm:$0xff]
      %v338 = vld [vmem:[%s1 + $0x18] sm:$0xff]
      %v339 = vld [vmem:[%s1 + $0x20] sm:$0xff]
      %v340 = vld [vmem:[%s1 + $0x28] sm:$0xff]
      %v341 = vld [vmem:[%s1 + $0x30] sm:$0xff]
      %v342 = vld [vmem:[%s1 + $0x38] sm:$0xff]
      %v343 = vld [vmem:[%s2] sm:$0xf]
      %v344 = vlaneseq
      %v345 = vshrl.u32 %v344, 7
      %v346 = vsub.s32 0, %v345
      %v347 = vrot.slane %v343, %v346
      %vm348 = vcmask 523264
      %v350 = vsel %vm348, %v333, 0
      %v353 = vsel %vm348, %v334, 0
      %355 = vmatprep.subr.mxu0 0.0
      %356 = vmatpush1.msra.mxu0 %v335
      %357 = vmatprep.subr.mxu0 0.0
      %358 = vmatpush1.msra.mxu0 %v336
      %359 = vmatprep.subr.mxu0 0.0
      %360 = vmatpush1.msra.mxu0 %v337
      %361 = vmatprep.subr.mxu0 0.0
      %362 = vmatpush1.msra.mxu0 %v338
      %363 = vmatprep.subr.mxu0 0.0
      %364 = vmatpush1.msra.mxu0 %v339
      %365 = vmatprep.subr.mxu0 0.0
      %366 = vmatpush1.msra.mxu0 %v340
      %367 = vmatprep.subr.mxu0 0.0
      %368 = vmatpush1.msra.mxu0 %v341
      %369 = vmatprep.subr.mxu0 0.0
      %370 = vmatpush1.msra.mxu0 %v342
      %371 = vmatprep.subr.mxu0 0.0
      %372 = vmatpush1.msra.mxu0 0.0
      %373 = vmatprep.subr.mxu0 0.0
      %374 = vmatpush1.msra.mxu0 0.0
      %375 = vmatprep.subr.mxu0 0.0
      %376 = vmatpush1.msra.mxu0 0.0
      %377 = vmatprep.subr.mxu0 0.0
      %378 = vmatpush1.msra.mxu0 0.0
      %379 = vmatprep.subr.mxu0 0.0
      %380 = vmatpush1.msra.mxu0 0.0
      %381 = vmatprep.subr.mxu0 0.0
      %382 = vmatpush1.msra.mxu0 0.0
      %383 = vmatprep.subr.mxu0 0.0
      %384 = vmatpush1.msra.mxu0 0.0
      %385 = vmatprep.subr.mxu0 0.0
      %386 = vmatpush1.msra.mxu0 0.0
      %387 = vmatprep.subr.mxu0 0.0
      %388 = vmatpush1.msra.mxu0 0.0
      %389 = vmatprep.subr.mxu0 0.0
      %390 = vmatpush1.msra.mxu0 0.0
      %391 = vmatprep.subr.mxu0 0.0
      %392 = vmatpush1.msra.mxu0 0.0
      %393 = vmatprep.subr.mxu0 0.0
      %394 = vmatpush1.msra.mxu0 0.0
      %395 = vmatprep.subr.mxu0 0.0
      %396 = vmatpush1.msra.mxu0 0.0
      %397 = vmatprep.subr.mxu0 0.0
      %398 = vmatpush1.msra.mxu0 0.0
      %399 = vmatprep.subr.mxu0 0.0
      %400 = vmatpush1.msra.mxu0 0.0
      %401 = vmatprep.subr.mxu0 0.0
      %402 = vmatpush1.msra.mxu0 0.0
      %403 = vmatprep.subr.mxu0 0.0
      %404 = vmatpush1.msra.mxu0 0.0
      %405 = vmatprep.subr.mxu0 0.0
      %406 = vmatpush1.msra.mxu0 0.0
      %407 = vmatprep.subr.mxu0 0.0
      %408 = vmatpush1.msra.mxu0 0.0
      %409 = vmatprep.subr.mxu0 0.0
      %410 = vmatpush1.msra.mxu0 0.0
      %411 = vmatprep.subr.mxu0 0.0
      %412 = vmatpush1.msra.mxu0 0.0
      %413 = vmatprep.subr.mxu0 0.0
      %414 = vmatpush1.msra.mxu0 0.0
      %415 = vmatprep.subr.mxu0 0.0
      %416 = vmatpush1.msra.mxu0 0.0
      %417 = vmatprep.subr.mxu0 0.0
      %418 = vmatpush1.msra.mxu0 0.0
      %419 = vmatprep.mubr.f32.mxu0 0.0
      %420 = vmatmul.mubr.f32.gmra.mrb[0].mxu0 %v350
      %v421 = vpop.f32.mrb[0].mxu0
      %v422 = vadd.f32 %v347, %v421
      %v423 = vpop.f32.mrb[0].mxu0
      %424 = vmatprep.mubr.f32.mxu0 0.0
      %425 = vmatmul.mubr.f32.gmra.mrb[0].mxu0 %v353
      %v426 = vpop.f32.mrb[0].mxu0
      %v427 = vadd.f32 %v347, %v426
      %v428 = vpop.f32.mrb[0].mxu0
      %429 = vdwg.mxu0
      %vm430 = vcmask 261120
      %v431 = vsel %vm430, %v422, 0.0
      %432 = vadd.xlane.f32.xlu0 %v431
      %v433 = vpop.xlane.xlu0 %432
      %v434 = vsel %vm430, %v427, 0.0
      %435 = vadd.xlane.f32.xlu0 %v434
      %v436 = vpop.xlane.xlu0 %435
      %v437 = vrcp.pop 32.0
      %v438 = vmul.f32 %v433, %v437
      %v439 = vmul.f32 %v436, %v437
      %v440 = vsub.f32 %v422, %v438
      %v441 = vsub.f32 %v427, %v439
      %v442 = vmul.f32 %v440, %v440
      %v443 = vmul.f32 %v441, %v441
      %v444 = vsel %vm430, %v442, 0.0
      %445 = vadd.xlane.f32.xlu0 %v444
      %v446 = vpop.xlane.xlu0 %445
      %v447 = vsel %vm430, %v443, 0.0
      %448 = vadd.xlane.f32.xlu0 %v447
      %v449 = vpop.xlane.xlu0 %448
      %v450 = vmul.f32 %v446, %v437
      %v451 = vmul.f32 %v449, %v437
      %v452 = vadd.f32 %v450, 1e-05
      %v453 = vadd.f32 %v451, 1e-05
      %v454 = vrsqrt.pop %v452
      %v455 = vrsqrt.pop %v453
      %v456 = vmul.f32 %v440, %v454
      %v457 = vmul.f32 %v441, %v455
      %v458 = vlaneseq
      %v459 = vshrl.u32 %v458, 7
      %v460 = vsub.s32 1, %v459
      %v461 = vrot.slane %v343, %v460
      %v462 = vmul.f32 %v456, %v461
      %v463 = vmul.f32 %v457, %v461
      %v464 = vlaneseq
      %v465 = vshrl.u32 %v464, 7
      %v466 = vsub.s32 2, %v465
      %v467 = vrot.slane %v343, %v466
      %v468 = vadd.f32 %v462, %v467
      %v469 = vadd.f32 %v463, %v467
      %470 = vst.msk [vmem:[%s332] sm:$0xff] %vm430, %v468
      %471 = vst.msk [vmem:[%s332 + $0x8] sm:$0xff] %vm430, %v469
      %vm472 = vcmask 257027
      %473 = vst.msk [vmem:[%s332 + $0xd] sm:$0x8] %vm472, %v343
      %v474 = vld [vmem:[%s332] sm:$0xff]
      %v475 = vld [vmem:[%s332 + $0x8] sm:$0xff]
      %v476 = vld [vmem:[%s332 + $0x10] sm:$0x1]
      %v477 = vld [vmem:[%s7] sm:$0x3f]
      %v478 = vsel %vm430, %v474, 0.0
      %479 = vadd.xlane.f32.xlu0 %v478
      %v480 = vpop.xlane.xlu0 %479
      %v481 = vsel %vm430, %v475, 0.0
      %482 = vadd.xlane.f32.xlu0 %v481
      %v483 = vpop.xlane.xlu0 %482
      %vm484 = vcmask 253952
      %v485 = vsel %vm484, %v476, 0.0
      %486 = vadd.xlane.f32.xlu0 %v485
      %v487 = vpop.xlane.xlu0 %486
      %v488 = vmul.f32 %v480, %v437
      %v489 = vmul.f32 %v483, %v437
      %v490 = vmul.f32 %v487, %v437
      %v491 = vsub.f32 %v474, %v488
      %v492 = vsub.f32 %v475, %v489
      %v493 = vsub.f32 %v476, %v490
      %v494 = vmul.f32 %v491, %v491
      %v495 = vmul.f32 %v492, %v492
      %v496 = vmul.f32 %v493, %v493
      %v497 = vsel %vm430, %v494, 0.0
      %498 = vadd.xlane.f32.xlu0 %v497
      %v499 = vpop.xlane.xlu0 %498
      %v500 = vsel %vm430, %v495, 0.0
      %501 = vadd.xlane.f32.xlu0 %v500
      %v502 = vpop.xlane.xlu0 %501
      %v503 = vsel %vm484, %v496, 0.0
      %504 = vadd.xlane.f32.xlu0 %v503
      %v505 = vpop.xlane.xlu0 %504
      %v506 = vmul.f32 %v499, %v437
      %v507 = vmul.f32 %v502, %v437
      %v508 = vmul.f32 %v505, %v437
      %v509 = vadd.f32 %v506, 1e-05
      %v510 = vadd.f32 %v507, 1e-05
      %v511 = vadd.f32 %v508, 1e-05
      %v512 = vrsqrt.pop %v509
      %v513 = vrsqrt.pop %v510
      %v514 = vrsqrt.pop %v511
      %v515 = vmul.f32 %v491, %v512
      %v516 = vmul.f32 %v492, %v513
      %v517 = vmul.f32 %v493, %v514
      %v518 = vlaneseq
      %v519 = vshrl.u32 %v518, 7
      %v520 = vsub.s32 0, %v519
      %v521 = vrot.slane %v477, %v520
      %v522 = vmul.f32 %v515, %v521
      %v523 = vmul.f32 %v516, %v521
      %v524 = vmul.f32 %v517, %v521
      %v525 = vlaneseq
      %v526 = vshrl.u32 %v525, 7
      %v527 = vsub.s32 1, %v526
      %v528 = vrot.slane %v477, %v527
      %v529 = vadd.f32 %v522, %v528
      %v530 = vadd.f32 %v523, %v528
      %v531 = vadd.f32 %v524, %v528
      %v532 = vld [vmem:[%s3] sm:$0xff]
      %v533 = vld [vmem:[%s3 + $0x8] sm:$0xff]
      %v534 = vld [vmem:[%s3 + $0x10] sm:$0xff]
      %v535 = vld [vmem:[%s3 + $0x18] sm:$0xff]
      %v537 = vsel %vm430, %v529, 0
      %v540 = vsel %vm430, %v530, 0
      %v543 = vsel %vm430, %v531, 0
      %545 = vmatprep.subr.mxu0 0.0
      %546 = vmatpush1.msra.mxu0 %v532
      %547 = vmatprep.subr.mxu0 0.0
      %548 = vmatpush1.msra.mxu0 %v533
      %549 = vmatprep.subr.mxu0 0.0
      %550 = vmatpush1.msra.mxu0 %v534
      %551 = vmatprep.subr.mxu0 0.0
      %552 = vmatpush1.msra.mxu0 %v535
      %553 = vmatprep.subr.mxu0 0.0
      %554 = vmatpush1.msra.mxu0 0.0
      %555 = vmatprep.subr.mxu0 0.0
      %556 = vmatpush1.msra.mxu0 0.0
      %557 = vmatprep.subr.mxu0 0.0
      %558 = vmatpush1.msra.mxu0 0.0
      %559 = vmatprep.subr.mxu0 0.0
      %560 = vmatpush1.msra.mxu0 0.0
      %561 = vmatprep.subr.mxu0 0.0
      %562 = vmatpush1.msra.mxu0 0.0
      %563 = vmatprep.subr.mxu0 0.0
      %564 = vmatpush1.msra.mxu0 0.0
      %565 = vmatprep.subr.mxu0 0.0
      %566 = vmatpush1.msra.mxu0 0.0
      %567 = vmatprep.subr.mxu0 0.0
      %568 = vmatpush1.msra.mxu0 0.0
      %569 = vmatprep.subr.mxu0 0.0
      %570 = vmatpush1.msra.mxu0 0.0
      %571 = vmatprep.subr.mxu0 0.0
      %572 = vmatpush1.msra.mxu0 0.0
      %573 = vmatprep.subr.mxu0 0.0
      %574 = vmatpush1.msra.mxu0 0.0
      %575 = vmatprep.subr.mxu0 0.0
      %576 = vmatpush1.msra.mxu0 0.0
      %577 = vmatprep.subr.mxu0 0.0
      %578 = vmatpush1.msra.mxu0 0.0
      %579 = vmatprep.subr.mxu0 0.0
      %580 = vmatpush1.msra.mxu0 0.0
      %581 = vmatprep.subr.mxu0 0.0
      %582 = vmatpush1.msra.mxu0 0.0
      %583 = vmatprep.subr.mxu0 0.0
      %584 = vmatpush1.msra.mxu0 0.0
      %585 = vmatprep.subr.mxu0 0.0
      %586 = vmatpush1.msra.mxu0 0.0
      %587 = vmatprep.subr.mxu0 0.0
      %588 = vmatpush1.msra.mxu0 0.0
      %589 = vmatprep.subr.mxu0 0.0
      %590 = vmatpush1.msra.mxu0 0.0
      %591 = vmatprep.subr.mxu0 0.0
      %592 = vmatpush1.msra.mxu0 0.0
      %593 = vmatprep.subr.mxu0 0.0
      %594 = vmatpush1.msra.mxu0 0.0
      %595 = vmatprep.subr.mxu0 0.0
      %596 = vmatpush1.msra.mxu0 0.0
      %597 = vmatprep.subr.mxu0 0.0
      %598 = vmatpush1.msra.mxu0 0.0
      %599 = vmatprep.subr.mxu0 0.0
      %600 = vmatpush1.msra.mxu0 0.0
      %601 = vmatprep.subr.mxu0 0.0
      %602 = vmatpush1.msra.mxu0 0.0
      %603 = vmatprep.subr.mxu0 0.0
      %604 = vmatpush1.msra.mxu0 0.0
      %605 = vmatprep.subr.mxu0 0.0
      %606 = vmatpush1.msra.mxu0 0.0
      %607 = vmatprep.subr.mxu0 0.0
      %608 = vmatpush1.msra.mxu0 0.0
      %609 = vmatprep.mubr.f32.mxu0 0.0
      %610 = vmatmul.mubr.f32.gmra.mrb[0].mxu0 %v537
      %v611 = vpop.f32.mrb[0].mxu0
      %v612 = vadd.f32 0.0, %v611
      %v613 = vpop.f32.mrb[0].mxu0
      %614 = vmatprep.mubr.f32.mxu0 0.0
      %615 = vmatmul.mubr.f32.gmra.mrb[0].mxu0 %v540
      %v616 = vpop.f32.mrb[0].mxu0
      %v617 = vadd.f32 0.0, %v616
      %v618 = vpop.f32.mrb[0].mxu0
      %619 = vmatprep.mubr.f32.mxu0 0.0
      %620 = vmatmul.mubr.f32.gmra.mrb[0].mxu0 %v543
      %v621 = vpop.f32.mrb[0].mxu0
      %v622 = vadd.f32 0.0, %v621
      %v623 = vpop.f32.mrb[0].mxu0
      %624 = vdwg.mxu0
      %628 = vrot.lane.b32.xlu0 %v612, 96
      %v629 = vpop.permute.xlu0 %628
      %630 = vrot.lane.b32.xlu0 %v617, 96
      %v631 = vpop.permute.xlu0 %630
      %632 = vrot.lane.b32.xlu0 %v622, 96
      %v633 = vpop.permute.xlu0 %632
      %vm634 = vcmask 130048
      %v635 = vsel %vm634, %v612, 0
      %v637 = vsel %vm634, %v617, 0
      %v639 = vsel %vm634, %v622, 0
      %v641 = vsel %vm634, %v629, 0
      %v643 = vsel %vm634, %v631, 0
      %v645 = vsel %vm634, %v633, 0
      %647 = vmatprep.subr.mxu0 0.0
      %648 = vmatpush1.xpose.msra.mxu0 %v641
      %649 = vmatprep.subr.mxu0 0.0
      %650 = vmatpush1.xpose.msra.mxu0 %v643
      %651 = vmatprep.subr.mxu0 0.0
      %652 = vmatpush1.xpose.msra.mxu0 %v645
      %653 = vmatprep.subr.mxu0 0.0
      %654 = vmatpush1.xpose.msra.mxu0 0.0
      %655 = vmatprep.subr.mxu0 0.0
      %656 = vmatpush1.xpose.msra.mxu0 0.0
      %657 = vmatprep.subr.mxu0 0.0
      %658 = vmatpush1.xpose.msra.mxu0 0.0
      %659 = vmatprep.subr.mxu0 0.0
      %660 = vmatpush1.xpose.msra.mxu0 0.0
      %661 = vmatprep.subr.mxu0 0.0
      %662 = vmatpush1.xpose.msra.mxu0 0.0
      %663 = vmatprep.subr.mxu0 0.0
      %664 = vmatpush1.xpose.msra.mxu0 0.0
      %665 = vmatprep.subr.mxu0 0.0
      %666 = vmatpush1.xpose.msra.mxu0 0.0
      %667 = vmatprep.subr.mxu0 0.0
      %668 = vmatpush1.xpose.msra.mxu0 0.0
      %669 = vmatprep.subr.mxu0 0.0
      %670 = vmatpush1.xpose.msra.mxu0 0.0
      %671 = vmatprep.subr.mxu0 0.0
      %672 = vmatpush1.xpose.msra.mxu0 0.0
      %673 = vmatprep.subr.mxu0 0.0
      %674 = vmatpush1.xpose.msra.mxu0 0.0
      %675 = vmatprep.subr.mxu0 0.0
      %676 = vmatpush1.xpose.msra.mxu0 0.0
      %677 = vmatprep.subr.mxu0 0.0
      %678 = vmatpush1.xpose.msra.mxu0 0.0
      %679 = vmatprep.subr.mxu0 0.0
      %680 = vmatpush1.xpose.msra.mxu0 0.0
      %681 = vmatprep.subr.mxu0 0.0
      %682 = vmatpush1.xpose.msra.mxu0 0.0
      %683 = vmatprep.subr.mxu0 0.0
      %684 = vmatpush1.xpose.msra.mxu0 0.0
      %685 = vmatprep.subr.mxu0 0.0
      %686 = vmatpush1.xpose.msra.mxu0 0.0
      %687 = vmatprep.subr.mxu0 0.0
      %688 = vmatpush1.xpose.msra.mxu0 0.0
      %689 = vmatprep.subr.mxu0 0.0
      %690 = vmatpush1.xpose.msra.mxu0 0.0
      %691 = vmatprep.subr.mxu0 0.0
      %692 = vmatpush1.xpose.msra.mxu0 0.0
      %693 = vmatprep.subr.mxu0 0.0
      %694 = vmatpush1.xpose.msra.mxu0 0.0
      %695 = vmatprep.subr.mxu0 0.0
      %696 = vmatpush1.xpose.msra.mxu0 0.0
      %697 = vmatprep.subr.mxu0 0.0
      %698 = vmatpush1.xpose.msra.mxu0 0.0
      %699 = vmatprep.subr.mxu0 0.0
      %700 = vmatpush1.xpose.msra.mxu0 0.0
      %701 = vmatprep.subr.mxu0 0.0
      %702 = vmatpush1.xpose.msra.mxu0 0.0
      %703 = vmatprep.subr.mxu0 0.0
      %704 = vmatpush1.xpose.msra.mxu0 0.0
      %705 = vmatprep.subr.mxu0 0.0
      %706 = vmatpush1.xpose.msra.mxu0 0.0
      %707 = vmatprep.subr.mxu0 0.0
      %708 = vmatpush1.xpose.msra.mxu0 0.0
      %709 = vmatprep.subr.mxu0 0.0
      %710 = vmatpush1.xpose.msra.mxu0 0.0
      %711 = vmatprep.mubr.f32.mxu0 0.0
      %712 = vmatmul.mubr.f32.gmra.mrb[0].mxu0 %v635
      %v713 = vpop.f32.mrb[0].mxu0
      %v714 = vadd.f32 0.0, %v713
      %v715 = vpop.f32.mrb[0].mxu0
      %716 = vmatprep.mubr.f32.mxu0 0.0
      %717 = vmatmul.mubr.f32.gmra.mrb[0].mxu0 %v637
      %v718 = vpop.f32.mrb[0].mxu0
      %v719 = vadd.f32 0.0, %v718
      %v720 = vpop.f32.mrb[0].mxu0
      %721 = vmatprep.mubr.f32.mxu0 0.0
      %722 = vmatmul.mubr.f32.gmra.mrb[0].mxu0 %v639
      %v723 = vpop.f32.mrb[0].mxu0
      %v724 = vadd.f32 0.0, %v723
      %v725 = vpop.f32.mrb[0].mxu0
      %726 = vdwg.mxu0
      %v727 = vmul.f32 %v714, 0.17677669
      %v728 = vmul.f32 %v719, 0.17677669
      %v729 = vmul.f32 %v724, 0.17677669
      %vm730 = vcmask 138240
      %v731 = vsel %vm730, %v727, -inf
      %732 = vmax.xlane.f32.xlu0 %v731
      %v733 = vpop.xlane.xlu0 %732
      %v734 = vsel %vm730, %v728, -inf
      %735 = vmax.xlane.f32.xlu0 %v734
      %v736 = vpop.xlane.xlu0 %735
      %vm737 = vcmask 131072
      %v738 = vsel %vm737, %v729, -inf
      %739 = vmax.xlane.f32.xlu0 %v738
      %v740 = vpop.xlane.xlu0 %739
      %v741 = vsub.f32 %v727, %v733
      %v742 = vsub.f32 %v728, %v736
      %v743 = vsub.f32 %v729, %v740
      %v744 = vmul.f32 %v741, 1.442695
      %v745 = vpow.pop %v744
      %v746 = vmul.f32 %v742, 1.442695
      %v747 = vpow.pop %v746
      %v748 = vmul.f32 %v743, 1.442695
      %v749 = vpow.pop %v748
      %v750 = vsel %vm730, %v745, 0.0
      %751 = vadd.xlane.f32.xlu0 %v750
      %v752 = vpop.xlane.xlu0 %751
      %v753 = vsel %vm730, %v747, 0.0
      %754 = vadd.xlane.f32.xlu0 %v753
      %v755 = vpop.xlane.xlu0 %754
      %v756 = vsel %vm737, %v749, 0.0
      %757 = vadd.xlane.f32.xlu0 %v756
      %v758 = vpop.xlane.xlu0 %757
      %v759 = vrcp.pop %v752
      %v760 = vrcp.pop %v755
      %v761 = vrcp.pop %v758
      %v762 = vmul.f32 %v745, %v759
      %v763 = vmul.f32 %v747, %v760
      %v764 = vmul.f32 %v749, %v761
      %765 = vrot.lane.b32.xlu0 %v612, 64
      %v766 = vpop.permute.xlu0 %765
      %767 = vrot.lane.b32.xlu0 %v617, 64
      %v768 = vpop.permute.xlu0 %767
      %769 = vrot.lane.b32.xlu0 %v622, 64
      %v770 = vpop.permute.xlu0 %769
      %v774 = vsel %vm730, %v762, 0
      %v777 = vsel %vm730, %v763, 0
      %v780 = vsel %vm730, %v764, 0
      %vm782 = vcmask 1040384
      %v783 = vsel %vm782, %v770, 0
      %785 = vmatprep.subr.mxu0 0.0
      %786 = vmatpush1.msra.mxu0 %v766
      %787 = vmatprep.subr.mxu0 0.0
      %788 = vmatpush1.msra.mxu0 %v768
      %789 = vmatprep.subr.mxu0 0.0
      %790 = vmatpush1.msra.mxu0 %v783
      %791 = vmatprep.subr.mxu0 0.0
      %792 = vmatpush1.msra.mxu0 0.0
      %793 = vmatprep.subr.mxu0 0.0
      %794 = vmatpush1.msra.mxu0 0.0
      %795 = vmatprep.subr.mxu0 0.0
      %796 = vmatpush1.msra.mxu0 0.0
      %797 = vmatprep.subr.mxu0 0.0
      %798 = vmatpush1.msra.mxu0 0.0
      %799 = vmatprep.subr.mxu0 0.0
      %800 = vmatpush1.msra.mxu0 0.0
      %801 = vmatprep.subr.mxu0 0.0
      %802 = vmatpush1.msra.mxu0 0.0
      %803 = vmatprep.subr.mxu0 0.0
      %804 = vmatpush1.msra.mxu0 0.0
      %805 = vmatprep.subr.mxu0 0.0
      %806 = vmatpush1.msra.mxu0 0.0
      %807 = vmatprep.subr.mxu0 0.0
      %808 = vmatpush1.msra.mxu0 0.0
      %809 = vmatprep.subr.mxu0 0.0
      %810 = vmatpush1.msra.mxu0 0.0
      %811 = vmatprep.subr.mxu0 0.0
      %812 = vmatpush1.msra.mxu0 0.0
      %813 = vmatprep.subr.mxu0 0.0
      %814 = vmatpush1.msra.mxu0 0.0
      %815 = vmatprep.subr.mxu0 0.0
      %816 = vmatpush1.msra.mxu0 0.0
      %817 = vmatprep.subr.mxu0 0.0
      %818 = vmatpush1.msra.mxu0 0.0
      %819 = vmatprep.subr.mxu0 0.0
      %820 = vmatpush1.msra.mxu0 0.0
      %821 = vmatprep.subr.mxu0 0.0
      %822 = vmatpush1.msra.mxu0 0.0
      %823 = vmatprep.subr.mxu0 0.0
      %824 = vmatpush1.msra.mxu0 0.0
      %825 = vmatprep.subr.mxu0 0.0
      %826 = vmatpush1.msra.mxu0 0.0
      %827 = vmatprep.subr.mxu0 0.0
      %828 = vmatpush1.msra.mxu0 0.0
      %829 = vmatprep.subr.mxu0 0.0
      %830 = vmatpush1.msra.mxu0 0.0
      %831 = vmatprep.subr.mxu0 0.0
      %832 = vmatpush1.msra.mxu0 0.0
      %833 = vmatprep.subr.mxu0 0.0
      %834 = vmatpush1.msra.mxu0 0.0
      %835 = vmatprep.subr.mxu0 0.0
      %836 = vmatpush1.msra.mxu0 0.0
      %837 = vmatprep.subr.mxu0 0.0
      %838 = vmatpush1.msra.mxu0 0.0
      %839 = vmatprep.subr.mxu0 0.0
      %840 = vmatpush1.msra.mxu0 0.0
      %841 = vmatprep.subr.mxu0 0.0
      %842 = vmatpush1.msra.mxu0 0.0
      %843 = vmatprep.subr.mxu0 0.0
      %844 = vmatpush1.msra.mxu0 0.0
      %845 = vmatprep.subr.mxu0 0.0
      %846 = vmatpush1.msra.mxu0 0.0
      %847 = vmatprep.subr.mxu0 0.0
      %848 = vmatpush1.msra.mxu0 0.0
      %849 = vmatprep.mubr.f32.mxu0 0.0
      %850 = vmatmul.mubr.f32.gmra.mrb[0].mxu0 %v774
      %v851 = vpop.f32.mrb[0].mxu0
      %v852 = vadd.f32 0.0, %v851
      %v853 = vpop.f32.mrb[0].mxu0
      %854 = vmatprep.mubr.f32.mxu0 0.0
      %855 = vmatmul.mubr.f32.gmra.mrb[0].mxu0 %v777
      %v856 = vpop.f32.mrb[0].mxu0
      %v857 = vadd.f32 0.0, %v856
      %v858 = vpop.f32.mrb[0].mxu0
      %859 = vmatprep.mubr.f32.mxu0 0.0
      %860 = vmatmul.mubr.f32.gmra.mrb[0].mxu0 %v780
      %v861 = vpop.f32.mrb[0].mxu0
      %v862 = vadd.f32 0.0, %v861
      %v863 = vpop.f32.mrb[0].mxu0
      %864 = vdwg.mxu0
      %v865 = vld [vmem:[%s4] sm:$0xff]
      %v866 = vld [vmem:[%s4 + $0x8] sm:$0xff]
      %867 = vrot.lane.b32.xlu0 %v612, 112
      %v868 = vpop.permute.xlu0 %867
      %869 = vrot.lane.b32.xlu0 %v617, 112
      %v870 = vpop.permute.xlu0 %869
      %871 = vrot.lane.b32.xlu0 %v622, 112
      %v872 = vpop.permute.xlu0 %871
      %873 = vrot.lane.b32.xlu0 %v612, 80
      %v874 = vpop.permute.xlu0 %873
      %875 = vrot.lane.b32.xlu0 %v617, 80
      %v876 = vpop.permute.xlu0 %875
      %877 = vrot.lane.b32.xlu0 %v622, 80
      %v878 = vpop.permute.xlu0 %877
      %v879 = vsel %vm634, %v868, 0
      %v881 = vsel %vm634, %v870, 0
      %v883 = vsel %vm634, %v872, 0
      %v885 = vsel %vm634, %v874, 0
      %v887 = vsel %vm634, %v876, 0
      %v889 = vsel %vm634, %v878, 0
      %891 = vmatprep.subr.mxu0 0.0
      %892 = vmatpush1.xpose.msra.mxu0 %v885
      %893 = vmatprep.subr.mxu0 0.0
      %894 = vmatpush1.xpose.msra.mxu0 %v887
      %895 = vmatprep.subr.mxu0 0.0
      %896 = vmatpush1.xpose.msra.mxu0 %v889
      %897 = vmatprep.subr.mxu0 0.0
      %898 = vmatpush1.xpose.msra.mxu0 0.0
      %899 = vmatprep.subr.mxu0 0.0
      %900 = vmatpush1.xpose.msra.mxu0 0.0
      %901 = vmatprep.subr.mxu0 0.0
      %902 = vmatpush1.xpose.msra.mxu0 0.0
      %903 = vmatprep.subr.mxu0 0.0
      %904 = vmatpush1.xpose.msra.mxu0 0.0
      %905 = vmatprep.subr.mxu0 0.0
      %906 = vmatpush1.xpose.msra.mxu0 0.0
      %907 = vmatprep.subr.mxu0 0.0
      %908 = vmatpush1.xpose.msra.mxu0 0.0
      %909 = vmatprep.subr.mxu0 0.0
      %910 = vmatpush1.xpose.msra.mxu0 0.0
      %911 = vmatprep.subr.mxu0 0.0
      %912 = vmatpush1.xpose.msra.mxu0 0.0
      %913 = vmatprep.subr.mxu0 0.0
      %914 = vmatpush1.xpose.msra.mxu0 0.0
      %915 = vmatprep.subr.mxu0 0.0
      %916 = vmatpush1.xpose.msra.mxu0 0.0
      %917 = vmatprep.subr.mxu0 0.0
      %918 = vmatpush1.xpose.msra.mxu0 0.0
      %919 = vmatprep.subr.mxu0 0.0
      %920 = vmatpush1.xpose.msra.mxu0 0.0
      %921 = vmatprep.subr.mxu0 0.0
      %922 = vmatpush1.xpose.msra.mxu0 0.0
      %923 = vmatprep.subr.mxu0 0.0
      %924 = vmatpush1.xpose.msra.mxu0 0.0
      %925 = vmatprep.subr.mxu0 0.0
      %926 = vmatpush1.xpose.msra.mxu0 0.0
      %927 = vmatprep.subr.mxu0 0.0
      %928 = vmatpush1.xpose.msra.mxu0 0.0
      %929 = vmatprep.subr.mxu0 0.0
      %930 = vmatpush1.xpose.msra.mxu0 0.0
      %931 = vmatprep.subr.mxu0 0.0
      %932 = vmatpush1.xpose.msra.mxu0 0.0
      %933 = vmatprep.subr.mxu0 0.0
      %934 = vmatpush1.xpose.msra.mxu0 0.0
      %935 = vmatprep.subr.mxu0 0.0
      %936 = vmatpush1.xpose.msra.mxu0 0.0
      %937 = vmatprep.subr.mxu0 0.0
      %938 = vmatpush1.xpose.msra.mxu0 0.0
      %939 = vmatprep.subr.mxu0 0.0
      %940 = vmatpush1.xpose.msra.mxu0 0.0
      %941 = vmatprep.subr.mxu0 0.0
      %942 = vmatpush1.xpose.msra.mxu0 0.0
      %943 = vmatprep.subr.mxu0 0.0
      %944 = vmatpush1.xpose.msra.mxu0 0.0
      %945 = vmatprep.subr.mxu0 0.0
      %946 = vmatpush1.xpose.msra.mxu0 0.0
      %947 = vmatprep.subr.mxu0 0.0
      %948 = vmatpush1.xpose.msra.mxu0 0.0
      %949 = vmatprep.subr.mxu0 0.0
      %950 = vmatpush1.xpose.msra.mxu0 0.0
      %951 = vmatprep.subr.mxu0 0.0
      %952 = vmatpush1.xpose.msra.mxu0 0.0
      %953 = vmatprep.subr.mxu0 0.0
      %954 = vmatpush1.xpose.msra.mxu0 0.0
      %955 = vmatprep.mubr.f32.mxu0 0.0
      %956 = vmatmul.mubr.f32.gmra.mrb[0].mxu0 %v879
      %v957 = vpop.f32.mrb[0].mxu0
      %v958 = vadd.f32 0.0, %v957
      %v959 = vpop.f32.mrb[0].mxu0
      %960 = vmatprep.mubr.f32.mxu0 0.0
      %961 = vmatmul.mubr.f32.gmra.mrb[0].mxu0 %v881
      %v962 = vpop.f32.mrb[0].mxu0
      %v963 = vadd.f32 0.0, %v962
      %v964 = vpop.f32.mrb[0].mxu0
      %965 = vmatprep.mubr.f32.mxu0 0.0
      %966 = vmatmul.mubr.f32.gmra.mrb[0].mxu0 %v883
      %v967 = vpop.f32.mrb[0].mxu0
      %v968 = vadd.f32 0.0, %v967
      %v969 = vpop.f32.mrb[0].mxu0
      %970 = vdwg.mxu0
      %v971 = vmul.f32 %v958, 0.17677669
      %v972 = vmul.f32 %v963, 0.17677669
      %v973 = vmul.f32 %v968, 0.17677669
      %v974 = vsel %vm730, %v971, -inf
      %975 = vmax.xlane.f32.xlu0 %v974
      %v976 = vpop.xlane.xlu0 %975
      %v977 = vsel %vm730, %v972, -inf
      %978 = vmax.xlane.f32.xlu0 %v977
      %v979 = vpop.xlane.xlu0 %978
      %v980 = vsel %vm737, %v973, -inf
      %981 = vmax.xlane.f32.xlu0 %v980
      %v982 = vpop.xlane.xlu0 %981
      %v983 = vsub.f32 %v971, %v976
      %v984 = vsub.f32 %v972, %v979
      %v985 = vsub.f32 %v973, %v982
      %v986 = vmul.f32 %v983, 1.442695
      %v987 = vpow.pop %v986
      %v988 = vmul.f32 %v984, 1.442695
      %v989 = vpow.pop %v988
      %v990 = vmul.f32 %v985, 1.442695
      %v991 = vpow.pop %v990
      %v992 = vsel %vm730, %v987, 0.0
      %993 = vadd.xlane.f32.xlu0 %v992
      %v994 = vpop.xlane.xlu0 %993
      %v995 = vsel %vm730, %v989, 0.0
      %996 = vadd.xlane.f32.xlu0 %v995
      %v997 = vpop.xlane.xlu0 %996
      %v998 = vsel %vm737, %v991, 0.0
      %999 = vadd.xlane.f32.xlu0 %v998
      %v1000 = vpop.xlane.xlu0 %999
      %v1001 = vrcp.pop %v994
      %v1002 = vrcp.pop %v997
      %v1003 = vrcp.pop %v1000
      %v1004 = vmul.f32 %v987, %v1001
      %v1005 = vmul.f32 %v989, %v1002
      %v1006 = vmul.f32 %v991, %v1003
      %1007 = vrot.lane.b32.xlu0 %v612, 48
      %v1008 = vpop.permute.xlu0 %1007
      %1009 = vrot.lane.b32.xlu0 %v617, 48
      %v1010 = vpop.permute.xlu0 %1009
      %1011 = vrot.lane.b32.xlu0 %v622, 48
      %v1012 = vpop.permute.xlu0 %1011
      %v1016 = vsel %vm730, %v1004, 0
      %v1019 = vsel %vm730, %v1005, 0
      %v1022 = vsel %vm730, %v1006, 0
      %v1024 = vsel %vm782, %v1012, 0
      %1026 = vmatprep.subr.mxu0 0.0
      %1027 = vmatpush1.msra.mxu0 %v1008
      %1028 = vmatprep.subr.mxu0 0.0
      %1029 = vmatpush1.msra.mxu0 %v1010
      %1030 = vmatprep.subr.mxu0 0.0
      %1031 = vmatpush1.msra.mxu0 %v1024
      %1032 = vmatprep.subr.mxu0 0.0
      %1033 = vmatpush1.msra.mxu0 0.0
      %1034 = vmatprep.subr.mxu0 0.0
      %1035 = vmatpush1.msra.mxu0 0.0
      %1036 = vmatprep.subr.mxu0 0.0
      %1037 = vmatpush1.msra.mxu0 0.0
      %1038 = vmatprep.subr.mxu0 0.0
      %1039 = vmatpush1.msra.mxu0 0.0
      %1040 = vmatprep.subr.mxu0 0.0
      %1041 = vmatpush1.msra.mxu0 0.0
      %1042 = vmatprep.subr.mxu0 0.0
      %1043 = vmatpush1.msra.mxu0 0.0
      %1044 = vmatprep.subr.mxu0 0.0
      %1045 = vmatpush1.msra.mxu0 0.0
      %1046 = vmatprep.subr.mxu0 0.0
      %1047 = vmatpush1.msra.mxu0 0.0
      %1048 = vmatprep.subr.mxu0 0.0
      %1049 = vmatpush1.msra.mxu0 0.0
      %1050 = vmatprep.subr.mxu0 0.0
      %1051 = vmatpush1.msra.mxu0 0.0
      %1052 = vmatprep.subr.mxu0 0.0
      %1053 = vmatpush1.msra.mxu0 0.0
      %1054 = vmatprep.subr.mxu0 0.0
      %1055 = vmatpush1.msra.mxu0 0.0
      %1056 = vmatprep.subr.mxu0 0.0
      %1057 = vmatpush1.msra.mxu0 0.0
      %1058 = vmatprep.subr.mxu0 0.0
      %1059 = vmatpush1.msra.mxu0 0.0
      %1060 = vmatprep.subr.mxu0 0.0
      %1061 = vmatpush1.msra.mxu0 0.0
      %1062 = vmatprep.subr.mxu0 0.0
      %1063 = vmatpush1.msra.mxu0 0.0
      %1064 = vmatprep.subr.mxu0 0.0
      %1065 = vmatpush1.msra.mxu0 0.0
      %1066 = vmatprep.subr.mxu0 0.0
      %1067 = vmatpush1.msra.mxu0 0.0
      %1068 = vmatprep.subr.mxu0 0.0
      %1069 = vmatpush1.msra.mxu0 0.0
      %1070 = vmatprep.subr.mxu0 0.0
      %1071 = vmatpush1.msra.mxu0 0.0
      %1072 = vmatprep.subr.mxu0 0.0
      %1073 = vmatpush1.msra.mxu0 0.0
      %1074 = vmatprep.subr.mxu0 0.0
      %1075 = vmatpush1.msra.mxu0 0.0
      %1076 = vmatprep.subr.mxu0 0.0
      %1077 = vmatpush1.msra.mxu0 0.0
      %1078 = vmatprep.subr.mxu0 0.0
      %1079 = vmatpush1.msra.mxu0 0.0
      %1080 = vmatprep.subr.mxu0 0.0
      %1081 = vmatpush1.msra.mxu0 0.0
      %1082 = vmatprep.subr.mxu0 0.0
      %1083 = vmatpush1.msra.mxu0 0.0
      %1084 = vmatprep.subr.mxu0 0.0
      %1085 = vmatpush1.msra.mxu0 0.0
      %1086 = vmatprep.subr.mxu0 0.0
      %1087 = vmatpush1.msra.mxu0 0.0
      %1088 = vmatprep.subr.mxu0 0.0
      %1089 = vmatpush1.msra.mxu0 0.0
      %1090 = vmatprep.mubr.f32.mxu0 0.0
      %1091 = vmatmul.mubr.f32.gmra.mrb[0].mxu0 %v1016
      %v1092 = vpop.f32.mrb[0].mxu0
      %v1093 = vadd.f32 0.0, %v1092
      %v1094 = vpop.f32.mrb[0].mxu0
      %1095 = vmatprep.mubr.f32.mxu0 0.0
      %1096 = vmatmul.mubr.f32.gmra.mrb[0].mxu0 %v1019
      %v1097 = vpop.f32.mrb[0].mxu0
      %v1098 = vadd.f32 0.0, %v1097
      %v1099 = vpop.f32.mrb[0].mxu0
      %1100 = vmatprep.mubr.f32.mxu0 0.0
      %1101 = vmatmul.mubr.f32.gmra.mrb[0].mxu0 %v1022
      %v1102 = vpop.f32.mrb[0].mxu0
      %v1103 = vadd.f32 0.0, %v1102
      %v1104 = vpop.f32.mrb[0].mxu0
      %1105 = vdwg.mxu0
      %v1106 = vld [vmem:[%s4 + $0x10] sm:$0xff]
      %v1107 = vld [vmem:[%s4 + $0x18] sm:$0xff]
      %v1109 = vsel %vm634, %v1093, 0
      %v1112 = vsel %vm634, %v1098, 0
      %v1115 = vsel %vm634, %v1103, 0
      %1117 = vmatprep.subr.mxu0 0.0
      %1118 = vmatpush1.msra.mxu0 %v1106
      %1119 = vmatprep.subr.mxu0 0.0
      %1120 = vmatpush1.msra.mxu0 %v1107
      %1121 = vmatprep.subr.mxu0 0.0
      %1122 = vmatpush1.msra.mxu0 0.0
      %1123 = vmatprep.subr.mxu0 0.0
      %1124 = vmatpush1.msra.mxu0 0.0
      %1125 = vmatprep.subr.mxu0 0.0
      %1126 = vmatpush1.msra.mxu0 0.0
      %1127 = vmatprep.subr.mxu0 0.0
      %1128 = vmatpush1.msra.mxu0 0.0
      %1129 = vmatprep.subr.mxu0 0.0
      %1130 = vmatpush1.msra.mxu0 0.0
      %1131 = vmatprep.subr.mxu0 0.0
      %1132 = vmatpush1.msra.mxu0 0.0
      %1133 = vmatprep.subr.mxu0 0.0
      %1134 = vmatpush1.msra.mxu0 0.0
      %1135 = vmatprep.subr.mxu0 0.0
      %1136 = vmatpush1.msra.mxu0 0.0
      %1137 = vmatprep.subr.mxu0 0.0
      %1138 = vmatpush1.msra.mxu0 0.0
      %1139 = vmatprep.subr.mxu0 0.0
      %1140 = vmatpush1.msra.mxu0 0.0
      %1141 = vmatprep.subr.mxu0 0.0
      %1142 = vmatpush1.msra.mxu0 0.0
      %1143 = vmatprep.subr.mxu0 0.0
      %1144 = vmatpush1.msra.mxu0 0.0
      %1145 = vmatprep.subr.mxu0 0.0
      %1146 = vmatpush1.msra.mxu0 0.0
      %1147 = vmatprep.subr.mxu0 0.0
      %1148 = vmatpush1.msra.mxu0 0.0
      %1149 = vmatprep.subr.mxu0 0.0
      %1150 = vmatpush1.msra.mxu0 0.0
      %1151 = vmatprep.subr.mxu0 0.0
      %1152 = vmatpush1.msra.mxu0 0.0
      %1153 = vmatprep.subr.mxu0 0.0
      %1154 = vmatpush1.msra.mxu0 0.0
      %1155 = vmatprep.subr.mxu0 0.0
      %1156 = vmatpush1.msra.mxu0 0.0
      %1157 = vmatprep.subr.mxu0 0.0
      %1158 = vmatpush1.msra.mxu0 0.0
      %1159 = vmatprep.subr.mxu0 0.0
      %1160 = vmatpush1.msra.mxu0 0.0
      %1161 = vmatprep.subr.mxu0 0.0
      %1162 = vmatpush1.msra.mxu0 0.0
      %1163 = vmatprep.subr.mxu0 0.0
      %1164 = vmatpush1.msra.mxu0 0.0
      %1165 = vmatprep.subr.mxu0 0.0
      %1166 = vmatpush1.msra.mxu0 0.0
      %1167 = vmatprep.subr.mxu0 0.0
      %1168 = vmatpush1.msra.mxu0 0.0
      %1169 = vmatprep.subr.mxu0 0.0
      %1170 = vmatpush1.msra.mxu0 0.0
      %1171 = vmatprep.subr.mxu0 0.0
      %1172 = vmatpush1.msra.mxu0 0.0
      %1173 = vmatprep.subr.mxu0 0.0
      %1174 = vmatpush1.msra.mxu0 0.0
      %1175 = vmatprep.subr.mxu0 0.0
      %1176 = vmatpush1.msra.mxu0 0.0
      %1177 = vmatprep.subr.mxu0 0.0
      %1178 = vmatpush1.msra.mxu0 0.0
      %1179 = vmatprep.subr.mxu0 0.0
      %1180 = vmatpush1.msra.mxu0 0.0
      %1181 = vmatprep.mubr.f32.mxu0 0.0
      %1182 = vmatmul.mubr.f32.gmra.mrb[0].mxu0 %v1109
      %v1183 = vpop.f32.mrb[0].mxu0
      %v1184 = vadd.f32 0.0, %v1183
      %v1185 = vpop.f32.mrb[0].mxu0
      %1186 = vmatprep.mubr.f32.mxu0 0.0
      %1187 = vmatmul.mubr.f32.gmra.mrb[0].mxu0 %v1112
      %v1188 = vpop.f32.mrb[0].mxu0
      %v1189 = vadd.f32 0.0, %v1188
      %v1190 = vpop.f32.mrb[0].mxu0
      %1191 = vmatprep.mubr.f32.mxu0 0.0
      %1192 = vmatmul.mubr.f32.gmra.mrb[0].mxu0 %v1115
      %v1193 = vpop.f32.mrb[0].mxu0
      %v1194 = vadd.f32 0.0, %v1193
      %v1195 = vpop.f32.mrb[0].mxu0
      %1196 = vdwg.mxu0
      %v1198 = vsel %vm634, %v852, 0
      %v1201 = vsel %vm634, %v857, 0
      %v1204 = vsel %vm634, %v862, 0
      %1206 = vmatprep.subr.mxu0 0.0
      %1207 = vmatpush1.msra.mxu0 %v865
      %1208 = vmatprep.subr.mxu0 0.0
      %1209 = vmatpush1.msra.mxu0 %v866
      %1210 = vmatprep.subr.mxu0 0.0
      %1211 = vmatpush1.msra.mxu0 0.0
      %1212 = vmatprep.subr.mxu0 0.0
      %1213 = vmatpush1.msra.mxu0 0.0
      %1214 = vmatprep.subr.mxu0 0.0
      %1215 = vmatpush1.msra.mxu0 0.0
      %1216 = vmatprep.subr.mxu0 0.0
      %1217 = vmatpush1.msra.mxu0 0.0
      %1218 = vmatprep.subr.mxu0 0.0
      %1219 = vmatpush1.msra.mxu0 0.0
      %1220 = vmatprep.subr.mxu0 0.0
      %1221 = vmatpush1.msra.mxu0 0.0
      %1222 = vmatprep.subr.mxu0 0.0
      %1223 = vmatpush1.msra.mxu0 0.0
      %1224 = vmatprep.subr.mxu0 0.0
      %1225 = vmatpush1.msra.mxu0 0.0
      %1226 = vmatprep.subr.mxu0 0.0
      %1227 = vmatpush1.msra.mxu0 0.0
      %1228 = vmatprep.subr.mxu0 0.0
      %1229 = vmatpush1.msra.mxu0 0.0
      %1230 = vmatprep.subr.mxu0 0.0
      %1231 = vmatpush1.msra.mxu0 0.0
      %1232 = vmatprep.subr.mxu0 0.0
      %1233 = vmatpush1.msra.mxu0 0.0
      %1234 = vmatprep.subr.mxu0 0.0
      %1235 = vmatpush1.msra.mxu0 0.0
      %1236 = vmatprep.subr.mxu0 0.0
      %1237 = vmatpush1.msra.mxu0 0.0
      %1238 = vmatprep.subr.mxu0 0.0
      %1239 = vmatpush1.msra.mxu0 0.0
      %1240 = vmatprep.subr.mxu0 0.0
      %1241 = vmatpush1.msra.mxu0 0.0
      %1242 = vmatprep.subr.mxu0 0.0
      %1243 = vmatpush1.msra.mxu0 0.0
      %1244 = vmatprep.subr.mxu0 0.0
      %1245 = vmatpush1.msra.mxu0 0.0
      %1246 = vmatprep.subr.mxu0 0.0
      %1247 = vmatpush1.msra.mxu0 0.0
      %1248 = vmatprep.subr.mxu0 0.0
      %1249 = vmatpush1.msra.mxu0 0.0
      %1250 = vmatprep.subr.mxu0 0.0
      %1251 = vmatpush1.msra.mxu0 0.0
      %1252 = vmatprep.subr.mxu0 0.0
      %1253 = vmatpush1.msra.mxu0 0.0
      %1254 = vmatprep.subr.mxu0 0.0
      %1255 = vmatpush1.msra.mxu0 0.0
      %1256 = vmatprep.subr.mxu0 0.0
      %1257 = vmatpush1.msra.mxu0 0.0
      %1258 = vmatprep.subr.mxu0 0.0
      %1259 = vmatpush1.msra.mxu0 0.0
      %1260 = vmatprep.subr.mxu0 0.0
      %1261 = vmatpush1.msra.mxu0 0.0
      %1262 = vmatprep.subr.mxu0 0.0
      %1263 = vmatpush1.msra.mxu0 0.0
      %1264 = vmatprep.subr.mxu0 0.0
      %1265 = vmatpush1.msra.mxu0 0.0
      %1266 = vmatprep.subr.mxu0 0.0
      %1267 = vmatpush1.msra.mxu0 0.0
      %1268 = vmatprep.subr.mxu0 0.0
      %1269 = vmatpush1.msra.mxu0 0.0
      %1270 = vmatprep.mubr.f32.mxu0 0.0
      %1271 = vmatmul.mubr.f32.gmra.mrb[0].mxu0 %v1198
      %v1272 = vpop.f32.mrb[0].mxu0
      %v1273 = vadd.f32 %v1184, %v1272
      %v1274 = vpop.f32.mrb[0].mxu0
      %1275 = vmatprep.mubr.f32.mxu0 0.0
      %1276 = vmatmul.mubr.f32.gmra.mrb[0].mxu0 %v1201
      %v1277 = vpop.f32.mrb[0].mxu0
      %v1278 = vadd.f32 %v1189, %v1277
      %v1279 = vpop.f32.mrb[0].mxu0
      %1280 = vmatprep.mubr.f32.mxu0 0.0
      %1281 = vmatmul.mubr.f32.gmra.mrb[0].mxu0 %v1204
      %v1282 = vpop.f32.mrb[0].mxu0
      %v1283 = vadd.f32 %v1194, %v1282
      %v1284 = vpop.f32.mrb[0].mxu0
      %1285 = vdwg.mxu0
      %v1286 = vlaneseq
      %v1287 = vshrl.u32 %v1286, 7
      %v1288 = vsub.s32 4, %v1287
      %v1289 = vrot.slane %v477, %v1288
      %v1290 = vadd.f32 %v1273, %v1289
      %v1291 = vadd.f32 %v1278, %v1289
      %v1292 = vadd.f32 %v1283, %v1289
      %v1293 = vadd.f32 %v474, %v1290
      %v1294 = vadd.f32 %v475, %v1291
      %v1295 = vadd.f32 %v476, %v1292
      %v1296 = vsel %vm430, %v1293, 0.0
      %1297 = vadd.xlane.f32.xlu0 %v1296
      %v1298 = vpop.xlane.xlu0 %1297
      %v1299 = vsel %vm430, %v1294, 0.0
      %1300 = vadd.xlane.f32.xlu0 %v1299
      %v1301 = vpop.xlane.xlu0 %1300
      %v1302 = vsel %vm484, %v1295, 0.0
      %1303 = vadd.xlane.f32.xlu0 %v1302
      %v1304 = vpop.xlane.xlu0 %1303
      %v1305 = vmul.f32 %v1298, %v437
      %v1306 = vmul.f32 %v1301, %v437
      %v1307 = vmul.f32 %v1304, %v437
      %v1308 = vsub.f32 %v1293, %v1305
      %v1309 = vsub.f32 %v1294, %v1306
      %v1310 = vsub.f32 %v1295, %v1307
      %v1311 = vmul.f32 %v1308, %v1308
      %v1312 = vmul.f32 %v1309, %v1309
      %v1313 = vmul.f32 %v1310, %v1310
      %v1314 = vsel %vm430, %v1311, 0.0
      %1315 = vadd.xlane.f32.xlu0 %v1314
      %v1316 = vpop.xlane.xlu0 %1315
      %v1317 = vsel %vm430, %v1312, 0.0
      %1318 = vadd.xlane.f32.xlu0 %v1317
      %v1319 = vpop.xlane.xlu0 %1318
      %v1320 = vsel %vm484, %v1313, 0.0
      %1321 = vadd.xlane.f32.xlu0 %v1320
      %v1322 = vpop.xlane.xlu0 %1321
      %v1323 = vmul.f32 %v1316, %v437
      %v1324 = vmul.f32 %v1319, %v437
      %v1325 = vmul.f32 %v1322, %v437
      %v1326 = vadd.f32 %v1323, 1e-05
      %v1327 = vadd.f32 %v1324, 1e-05
      %v1328 = vadd.f32 %v1325, 1e-05
      %v1329 = vrsqrt.pop %v1326
      %v1330 = vrsqrt.pop %v1327
      %v1331 = vrsqrt.pop %v1328
      %v1332 = vmul.f32 %v1308, %v1329
      %v1333 = vmul.f32 %v1309, %v1330
      %v1334 = vmul.f32 %v1310, %v1331
      %v1335 = vlaneseq
      %v1336 = vshrl.u32 %v1335, 7
      %v1337 = vsub.s32 2, %v1336
      %v1338 = vrot.slane %v477, %v1337
      %v1339 = vmul.f32 %v1332, %v1338
      %v1340 = vmul.f32 %v1333, %v1338
      %v1341 = vmul.f32 %v1334, %v1338
      %v1342 = vlaneseq
      %v1343 = vshrl.u32 %v1342, 7
      %v1344 = vsub.s32 3, %v1343
      %v1345 = vrot.slane %v477, %v1344
      %v1346 = vadd.f32 %v1339, %v1345
      %v1347 = vadd.f32 %v1340, %v1345
      %v1348 = vadd.f32 %v1341, %v1345
      %v1349 = vld [vmem:[%s5] sm:$0xff]
      %v1350 = vld [vmem:[%s5 + $0x8] sm:$0xff]
      %v1351 = vld [vmem:[%s5 + $0x10] sm:$0xff]
      %v1352 = vld [vmem:[%s5 + $0x18] sm:$0xff]
      %v1353 = vld [vmem:[%s8] sm:$0x1]
      %v1355 = vlaneseq
      %v1356 = vshrl.u32 %v1355, 7
      %v1357 = vsub.s32 0, %v1356
      %v1358 = vrot.slane %v1353, %v1357
      %v1361 = vsel %vm430, %v1346, 0
      %v1364 = vsel %vm430, %v1347, 0
      %v1367 = vsel %vm430, %v1348, 0
      %1369 = vmatprep.subr.mxu0 0.0
      %1370 = vmatpush1.msra.mxu0 %v1349
      %1371 = vmatprep.subr.mxu0 0.0
      %1372 = vmatpush1.msra.mxu0 %v1350
      %1373 = vmatprep.subr.mxu0 0.0
      %1374 = vmatpush1.msra.mxu0 %v1351
      %1375 = vmatprep.subr.mxu0 0.0
      %1376 = vmatpush1.msra.mxu0 %v1352
      %1377 = vmatprep.subr.mxu0 0.0
      %1378 = vmatpush1.msra.mxu0 0.0
      %1379 = vmatprep.subr.mxu0 0.0
      %1380 = vmatpush1.msra.mxu0 0.0
      %1381 = vmatprep.subr.mxu0 0.0
      %1382 = vmatpush1.msra.mxu0 0.0
      %1383 = vmatprep.subr.mxu0 0.0
      %1384 = vmatpush1.msra.mxu0 0.0
      %1385 = vmatprep.subr.mxu0 0.0
      %1386 = vmatpush1.msra.mxu0 0.0
      %1387 = vmatprep.subr.mxu0 0.0
      %1388 = vmatpush1.msra.mxu0 0.0
      %1389 = vmatprep.subr.mxu0 0.0
      %1390 = vmatpush1.msra.mxu0 0.0
      %1391 = vmatprep.subr.mxu0 0.0
      %1392 = vmatpush1.msra.mxu0 0.0
      %1393 = vmatprep.subr.mxu0 0.0
      %1394 = vmatpush1.msra.mxu0 0.0
      %1395 = vmatprep.subr.mxu0 0.0
      %1396 = vmatpush1.msra.mxu0 0.0
      %1397 = vmatprep.subr.mxu0 0.0
      %1398 = vmatpush1.msra.mxu0 0.0
      %1399 = vmatprep.subr.mxu0 0.0
      %1400 = vmatpush1.msra.mxu0 0.0
      %1401 = vmatprep.subr.mxu0 0.0
      %1402 = vmatpush1.msra.mxu0 0.0
      %1403 = vmatprep.subr.mxu0 0.0
      %1404 = vmatpush1.msra.mxu0 0.0
      %1405 = vmatprep.subr.mxu0 0.0
      %1406 = vmatpush1.msra.mxu0 0.0
      %1407 = vmatprep.subr.mxu0 0.0
      %1408 = vmatpush1.msra.mxu0 0.0
      %1409 = vmatprep.subr.mxu0 0.0
      %1410 = vmatpush1.msra.mxu0 0.0
      %1411 = vmatprep.subr.mxu0 0.0
      %1412 = vmatpush1.msra.mxu0 0.0
      %1413 = vmatprep.subr.mxu0 0.0
      %1414 = vmatpush1.msra.mxu0 0.0
      %1415 = vmatprep.subr.mxu0 0.0
      %1416 = vmatpush1.msra.mxu0 0.0
      %1417 = vmatprep.subr.mxu0 0.0
      %1418 = vmatpush1.msra.mxu0 0.0
      %1419 = vmatprep.subr.mxu0 0.0
      %1420 = vmatpush1.msra.mxu0 0.0
      %1421 = vmatprep.subr.mxu0 0.0
      %1422 = vmatpush1.msra.mxu0 0.0
      %1423 = vmatprep.subr.mxu0 0.0
      %1424 = vmatpush1.msra.mxu0 0.0
      %1425 = vmatprep.subr.mxu0 0.0
      %1426 = vmatpush1.msra.mxu0 0.0
      %1427 = vmatprep.subr.mxu0 0.0
      %1428 = vmatpush1.msra.mxu0 0.0
      %1429 = vmatprep.subr.mxu0 0.0
      %1430 = vmatpush1.msra.mxu0 0.0
      %1431 = vmatprep.subr.mxu0 0.0
      %1432 = vmatpush1.msra.mxu0 0.0
      %1433 = vmatprep.mubr.f32.mxu0 0.0
      %1434 = vmatmul.mubr.f32.gmra.mrb[0].mxu0 %v1361
      %v1435 = vpop.f32.mrb[0].mxu0
      %v1436 = vadd.f32 %v1358, %v1435
      %v1437 = vpop.f32.mrb[0].mxu0
      %1438 = vmatprep.mubr.f32.mxu0 0.0
      %1439 = vmatmul.mubr.f32.gmra.mrb[0].mxu0 %v1364
      %v1440 = vpop.f32.mrb[0].mxu0
      %v1441 = vadd.f32 %v1358, %v1440
      %v1442 = vpop.f32.mrb[0].mxu0
      %1443 = vmatprep.mubr.f32.mxu0 0.0
      %1444 = vmatmul.mubr.f32.gmra.mrb[0].mxu0 %v1367
      %v1445 = vpop.f32.mrb[0].mxu0
      %v1446 = vadd.f32 %v1358, %v1445
      %v1447 = vpop.f32.mrb[0].mxu0
      %1448 = vdwg.mxu0
      %v1449 = vmul.f32 %v1436, 0.5
      %v1450 = vmul.f32 %v1441, 0.5
      %v1451 = vmul.f32 %v1446, 0.5
      %v1452 = vmul.f32 %v1436, 0.70710677
      %v1453 = vmul.f32 %v1441, 0.70710677
      %v1454 = vmul.f32 %v1446, 0.70710677
      %v1455 = verf.f32.pop %v1452
      %v1456 = verf.f32.pop %v1453
      %v1457 = verf.f32.pop %v1454
      %v1458 = vadd.f32 %v1455, 1.0
      %v1459 = vadd.f32 %v1456, 1.0
      %v1460 = vadd.f32 %v1457, 1.0
      %v1461 = vmul.f32 %v1449, %v1458
      %v1462 = vmul.f32 %v1450, %v1459
      %v1463 = vmul.f32 %v1451, %v1460
      %v1464 = vld [vmem:[%s6] sm:$0xff]
      %v1465 = vld [vmem:[%s6 + $0x8] sm:$0xff]
      %v1466 = vld [vmem:[%s6 + $0x10] sm:$0xff]
      %v1467 = vld [vmem:[%s6 + $0x18] sm:$0xff]
      %v1468 = vld [vmem:[%s6 + $0x20] sm:$0xff]
      %v1469 = vld [vmem:[%s6 + $0x28] sm:$0xff]
      %v1470 = vld [vmem:[%s6 + $0x30] sm:$0xff]
      %v1471 = vld [vmem:[%s6 + $0x38] sm:$0xff]
      %v1472 = vld [vmem:[%s6 + $0x40] sm:$0xff]
      %v1473 = vld [vmem:[%s6 + $0x48] sm:$0xff]
      %v1474 = vld [vmem:[%s6 + $0x50] sm:$0xff]
      %v1475 = vld [vmem:[%s6 + $0x58] sm:$0xff]
      %v1476 = vld [vmem:[%s6 + $0x60] sm:$0xff]
      %v1477 = vld [vmem:[%s6 + $0x68] sm:$0xff]
      %v1478 = vld [vmem:[%s6 + $0x70] sm:$0xff]
      %v1479 = vld [vmem:[%s6 + $0x78] sm:$0xff]
      %v1480 = vlaneseq
      %v1481 = vshrl.u32 %v1480, 7
      %v1482 = vsub.s32 5, %v1481
      %v1483 = vrot.slane %v477, %v1482
      %1484 = vmatprep.subr.mxu0 0.0
      %1485 = vmatpush1.msra.mxu0 %v1464
      %1486 = vmatprep.subr.mxu0 0.0
      %1487 = vmatpush1.msra.mxu0 %v1465
      %1488 = vmatprep.subr.mxu0 0.0
      %1489 = vmatpush1.msra.mxu0 %v1466
      %1490 = vmatprep.subr.mxu0 0.0
      %1491 = vmatpush1.msra.mxu0 %v1467
      %1492 = vmatprep.subr.mxu0 0.0
      %1493 = vmatpush1.msra.mxu0 %v1468
      %1494 = vmatprep.subr.mxu0 0.0
      %1495 = vmatpush1.msra.mxu0 %v1469
      %1496 = vmatprep.subr.mxu0 0.0
      %1497 = vmatpush1.msra.mxu0 %v1470
      %1498 = vmatprep.subr.mxu0 0.0
      %1499 = vmatpush1.msra.mxu0 %v1471
      %1500 = vmatprep.subr.mxu0 0.0
      %1501 = vmatpush1.msra.mxu0 %v1472
      %1502 = vmatprep.subr.mxu0 0.0
      %1503 = vmatpush1.msra.mxu0 %v1473
      %1504 = vmatprep.subr.mxu0 0.0
      %1505 = vmatpush1.msra.mxu0 %v1474
      %1506 = vmatprep.subr.mxu0 0.0
      %1507 = vmatpush1.msra.mxu0 %v1475
      %1508 = vmatprep.subr.mxu0 0.0
      %1509 = vmatpush1.msra.mxu0 %v1476
      %1510 = vmatprep.subr.mxu0 0.0
      %1511 = vmatpush1.msra.mxu0 %v1477
      %1512 = vmatprep.subr.mxu0 0.0
      %1513 = vmatpush1.msra.mxu0 %v1478
      %1514 = vmatprep.subr.mxu0 0.0
      %1515 = vmatpush1.msra.mxu0 %v1479
      %1516 = vmatprep.subr.mxu0 0.0
      %1517 = vmatpush1.msra.mxu0 0.0
      %1518 = vmatprep.subr.mxu0 0.0
      %1519 = vmatpush1.msra.mxu0 0.0
      %1520 = vmatprep.subr.mxu0 0.0
      %1521 = vmatpush1.msra.mxu0 0.0
      %1522 = vmatprep.subr.mxu0 0.0
      %1523 = vmatpush1.msra.mxu0 0.0
      %1524 = vmatprep.subr.mxu0 0.0
      %1525 = vmatpush1.msra.mxu0 0.0
      %1526 = vmatprep.subr.mxu0 0.0
      %1527 = vmatpush1.msra.mxu0 0.0
      %1528 = vmatprep.subr.mxu0 0.0
      %1529 = vmatpush1.msra.mxu0 0.0
      %1530 = vmatprep.subr.mxu0 0.0
      %1531 = vmatpush1.msra.mxu0 0.0
      %1532 = vmatprep.subr.mxu0 0.0
      %1533 = vmatpush1.msra.mxu0 0.0
      %1534 = vmatprep.subr.mxu0 0.0
      %1535 = vmatpush1.msra.mxu0 0.0
      %1536 = vmatprep.subr.mxu0 0.0
      %1537 = vmatpush1.msra.mxu0 0.0
      %1538 = vmatprep.subr.mxu0 0.0
      %1539 = vmatpush1.msra.mxu0 0.0
      %1540 = vmatprep.subr.mxu0 0.0
      %1541 = vmatpush1.msra.mxu0 0.0
      %1542 = vmatprep.subr.mxu0 0.0
      %1543 = vmatpush1.msra.mxu0 0.0
      %1544 = vmatprep.subr.mxu0 0.0
      %1545 = vmatpush1.msra.mxu0 0.0
      %1546 = vmatprep.subr.mxu0 0.0
      %1547 = vmatpush1.msra.mxu0 0.0
      %1548 = vmatprep.mubr.f32.mxu0 0.0
      %1549 = vmatmul.mubr.f32.gmra.mrb[0].mxu0 %v1461
      %v1550 = vpop.f32.mrb[0].mxu0
      %v1551 = vadd.f32 %v1483, %v1550
      %v1552 = vpop.f32.mrb[0].mxu0
      %1553 = vmatprep.mubr.f32.mxu0 0.0
      %1554 = vmatmul.mubr.f32.gmra.mrb[0].mxu0 %v1462
      %v1555 = vpop.f32.mrb[0].mxu0
      %v1556 = vadd.f32 %v1483, %v1555
      %v1557 = vpop.f32.mrb[0].mxu0
      %1558 = vmatprep.mubr.f32.mxu0 0.0
      %1559 = vmatmul.mubr.f32.gmra.mrb[0].mxu0 %v1463
      %v1560 = vpop.f32.mrb[0].mxu0
      %v1561 = vadd.f32 %v1483, %v1560
      %v1562 = vpop.f32.mrb[0].mxu0
      %1563 = vdwg.mxu0
      %v1564 = vadd.f32 %v1293, %v1551
      %v1565 = vadd.f32 %v1294, %v1556
      %v1566 = vadd.f32 %v1295, %v1561
      %s1567 = scalar_lea.vmem %s7, 8
      %v1568 = vld [vmem:[%s1567] sm:$0x3f]
      %v1569 = vsel %vm430, %v1564, 0.0
      %1570 = vadd.xlane.f32.xlu0 %v1569
      %v1571 = vpop.xlane.xlu0 %1570
      %v1572 = vsel %vm430, %v1565, 0.0
      %1573 = vadd.xlane.f32.xlu0 %v1572
      %v1574 = vpop.xlane.xlu0 %1573
      %v1575 = vsel %vm484, %v1566, 0.0
      %1576 = vadd.xlane.f32.xlu0 %v1575
      %v1577 = vpop.xlane.xlu0 %1576
      %v1578 = vmul.f32 %v1571, %v437
      %v1579 = vmul.f32 %v1574, %v437
      %v1580 = vmul.f32 %v1577, %v437
      %v1581 = vsub.f32 %v1564, %v1578
      %v1582 = vsub.f32 %v1565, %v1579
      %v1583 = vsub.f32 %v1566, %v1580
      %v1584 = vmul.f32 %v1581, %v1581
      %v1585 = vmul.f32 %v1582, %v1582
      %v1586 = vmul.f32 %v1583, %v1583
      %v1587 = vsel %vm430, %v1584, 0.0
      %1588 = vadd.xlane.f32.xlu0 %v1587
      %v1589 = vpop.xlane.xlu0 %1588
      %v1590 = vsel %vm430, %v1585, 0.0
      %1591 = vadd.xlane.f32.xlu0 %v1590
      %v1592 = vpop.xlane.xlu0 %1591
      %v1593 = vsel %vm484, %v1586, 0.0
      %1594 = vadd.xlane.f32.xlu0 %v1593
      %v1595 = vpop.xlane.xlu0 %1594
      %v1596 = vmul.f32 %v1589, %v437
      %v1597 = vmul.f32 %v1592, %v437
      %v1598 = vmul.f32 %v1595, %v437
      %v1599 = vadd.f32 %v1596, 1e-05
      %v1600 = vadd.f32 %v1597, 1e-05
      %v1601 = vadd.f32 %v1598, 1e-05
      %v1602 = vrsqrt.pop %v1599
      %v1603 = vrsqrt.pop %v1600
      %v1604 = vrsqrt.pop %v1601
      %v1605 = vmul.f32 %v1581, %v1602
      %v1606 = vmul.f32 %v1582, %v1603
      %v1607 = vmul.f32 %v1583, %v1604
      %v1608 = vlaneseq
      %v1609 = vshrl.u32 %v1608, 7
      %v1610 = vsub.s32 0, %v1609
      %v1611 = vrot.slane %v1568, %v1610
      %v1612 = vmul.f32 %v1605, %v1611
      %v1613 = vmul.f32 %v1606, %v1611
      %v1614 = vmul.f32 %v1607, %v1611
      %v1615 = vlaneseq
      %v1616 = vshrl.u32 %v1615, 7
      %v1617 = vsub.s32 1, %v1616
      %v1618 = vrot.slane %v1568, %v1617
      %v1619 = vadd.f32 %v1612, %v1618
      %v1620 = vadd.f32 %v1613, %v1618
      %v1621 = vadd.f32 %v1614, %v1618
      %s1622 = scalar_lea.vmem %s3, 32
      %v1623 = vld [vmem:[%s1622] sm:$0xff]
      %v1624 = vld [vmem:[%s1622 + $0x8] sm:$0xff]
      %v1625 = vld [vmem:[%s1622 + $0x10] sm:$0xff]
      %v1626 = vld [vmem:[%s1622 + $0x18] sm:$0xff]
      %v1628 = vsel %vm430, %v1619, 0
      %v1631 = vsel %vm430, %v1620, 0
      %v1634 = vsel %vm430, %v1621, 0
      %1636 = vmatprep.subr.mxu0 0.0
      %1637 = vmatpush1.msra.mxu0 %v1623
      %1638 = vmatprep.subr.mxu0 0.0
      %1639 = vmatpush1.msra.mxu0 %v1624
      %1640 = vmatprep.subr.mxu0 0.0
      %1641 = vmatpush1.msra.mxu0 %v1625
      %1642 = vmatprep.subr.mxu0 0.0
      %1643 = vmatpush1.msra.mxu0 %v1626
      %1644 = vmatprep.subr.mxu0 0.0
      %1645 = vmatpush1.msra.mxu0 0.0
      %1646 = vmatprep.subr.mxu0 0.0
      %1647 = vmatpush1.msra.mxu0 0.0
      %1648 = vmatprep.subr.mxu0 0.0
      %1649 = vmatpush1.msra.mxu0 0.0
      %1650 = vmatprep.subr.mxu0 0.0
      %1651 = vmatpush1.msra.mxu0 0.0
      %1652 = vmatprep.subr.mxu0 0.0
      %1653 = vmatpush1.msra.mxu0 0.0
      %1654 = vmatprep.subr.mxu0 0.0
      %1655 = vmatpush1.msra.mxu0 0.0
      %1656 = vmatprep.subr.mxu0 0.0
      %1657 = vmatpush1.msra.mxu0 0.0
      %1658 = vmatprep.subr.mxu0 0.0
      %1659 = vmatpush1.msra.mxu0 0.0
      %1660 = vmatprep.subr.mxu0 0.0
      %1661 = vmatpush1.msra.mxu0 0.0
      %1662 = vmatprep.subr.mxu0 0.0
      %1663 = vmatpush1.msra.mxu0 0.0
      %1664 = vmatprep.subr.mxu0 0.0
      %1665 = vmatpush1.msra.mxu0 0.0
      %1666 = vmatprep.subr.mxu0 0.0
      %1667 = vmatpush1.msra.mxu0 0.0
      %1668 = vmatprep.subr.mxu0 0.0
      %1669 = vmatpush1.msra.mxu0 0.0
      %1670 = vmatprep.subr.mxu0 0.0
      %1671 = vmatpush1.msra.mxu0 0.0
      %1672 = vmatprep.subr.mxu0 0.0
      %1673 = vmatpush1.msra.mxu0 0.0
      %1674 = vmatprep.subr.mxu0 0.0
      %1675 = vmatpush1.msra.mxu0 0.0
      %1676 = vmatprep.subr.mxu0 0.0
      %1677 = vmatpush1.msra.mxu0 0.0
      %1678 = vmatprep.subr.mxu0 0.0
      %1679 = vmatpush1.msra.mxu0 0.0
      %1680 = vmatprep.subr.mxu0 0.0
      %1681 = vmatpush1.msra.mxu0 0.0
      %1682 = vmatprep.subr.mxu0 0.0
      %1683 = vmatpush1.msra.mxu0 0.0
      %1684 = vmatprep.subr.mxu0 0.0
      %1685 = vmatpush1.msra.mxu0 0.0
      %1686 = vmatprep.subr.mxu0 0.0
      %1687 = vmatpush1.msra.mxu0 0.0
      %1688 = vmatprep.subr.mxu0 0.0
      %1689 = vmatpush1.msra.mxu0 0.0
      %1690 = vmatprep.subr.mxu0 0.0
      %1691 = vmatpush1.msra.mxu0 0.0
      %1692 = vmatprep.subr.mxu0 0.0
      %1693 = vmatpush1.msra.mxu0 0.0
      %1694 = vmatprep.subr.mxu0 0.0
      %1695 = vmatpush1.msra.mxu0 0.0
      %1696 = vmatprep.subr.mxu0 0.0
      %1697 = vmatpush1.msra.mxu0 0.0
      %1698 = vmatprep.subr.mxu0 0.0
      %1699 = vmatpush1.msra.mxu0 0.0
      %1700 = vmatprep.mubr.f32.mxu0 0.0
      %1701 = vmatmul.mubr.f32.gmra.mrb[0].mxu0 %v1628
      %v1702 = vpop.f32.mrb[0].mxu0
      %v1703 = vadd.f32 0.0, %v1702
      %v1704 = vpop.f32.mrb[0].mxu0
      %1705 = vmatprep.mubr.f32.mxu0 0.0
      %1706 = vmatmul.mubr.f32.gmra.mrb[0].mxu0 %v1631
      %v1707 = vpop.f32.mrb[0].mxu0
      %v1708 = vadd.f32 0.0, %v1707
      %v1709 = vpop.f32.mrb[0].mxu0
      %1710 = vmatprep.mubr.f32.mxu0 0.0
      %1711 = vmatmul.mubr.f32.gmra.mrb[0].mxu0 %v1634
      %v1712 = vpop.f32.mrb[0].mxu0
      %v1713 = vadd.f32 0.0, %v1712
      %v1714 = vpop.f32.mrb[0].mxu0
      %1715 = vdwg.mxu0
      %1719 = vrot.lane.b32.xlu0 %v1703, 96
      %v1720 = vpop.permute.xlu0 %1719
      %1721 = vrot.lane.b32.xlu0 %v1708, 96
      %v1722 = vpop.permute.xlu0 %1721
      %1723 = vrot.lane.b32.xlu0 %v1713, 96
      %v1724 = vpop.permute.xlu0 %1723
      %v1725 = vsel %vm634, %v1703, 0
      %v1727 = vsel %vm634, %v1708, 0
      %v1729 = vsel %vm634, %v1713, 0
      %v1731 = vsel %vm634, %v1720, 0
      %v1733 = vsel %vm634, %v1722, 0
      %v1735 = vsel %vm634, %v1724, 0
      %1737 = vmatprep.subr.mxu0 0.0
      %1738 = vmatpush1.xpose.msra.mxu0 %v1731
      %1739 = vmatprep.subr.mxu0 0.0
      %1740 = vmatpush1.xpose.msra.mxu0 %v1733
      %1741 = vmatprep.subr.mxu0 0.0
      %1742 = vmatpush1.xpose.msra.mxu0 %v1735
      %1743 = vmatprep.subr.mxu0 0.0
      %1744 = vmatpush1.xpose.msra.mxu0 0.0
      %1745 = vmatprep.subr.mxu0 0.0
      %1746 = vmatpush1.xpose.msra.mxu0 0.0
      %1747 = vmatprep.subr.mxu0 0.0
      %1748 = vmatpush1.xpose.msra.mxu0 0.0
      %1749 = vmatprep.subr.mxu0 0.0
      %1750 = vmatpush1.xpose.msra.mxu0 0.0
      %1751 = vmatprep.subr.mxu0 0.0
      %1752 = vmatpush1.xpose.msra.mxu0 0.0
      %1753 = vmatprep.subr.mxu0 0.0
      %1754 = vmatpush1.xpose.msra.mxu0 0.0
      %1755 = vmatprep.subr.mxu0 0.0
      %1756 = vmatpush1.xpose.msra.mxu0 0.0
      %1757 = vmatprep.subr.mxu0 0.0
      %1758 = vmatpush1.xpose.msra.mxu0 0.0
      %1759 = vmatprep.subr.mxu0 0.0
      %1760 = vmatpush1.xpose.msra.mxu0 0.0
      %1761 = vmatprep.subr.mxu0 0.0
      %1762 = vmatpush1.xpose.msra.mxu0 0.0
      %1763 = vmatprep.subr.mxu0 0.0
      %1764 = vmatpush1.xpose.msra.mxu0 0.0
      %1765 = vmatprep.subr.mxu0 0.0
      %1766 = vmatpush1.xpose.msra.mxu0 0.0
      %1767 = vmatprep.subr.mxu0 0.0
      %1768 = vmatpush1.xpose.msra.mxu0 0.0
      %1769 = vmatprep.subr.mxu0 0.0
      %1770 = vmatpush1.xpose.msra.mxu0 0.0
      %1771 = vmatprep.subr.mxu0 0.0
      %1772 = vmatpush1.xpose.msra.mxu0 0.0
      %1773 = vmatprep.subr.mxu0 0.0
      %1774 = vmatpush1.xpose.msra.mxu0 0.0
      %1775 = vmatprep.subr.mxu0 0.0
      %1776 = vmatpush1.xpose.msra.mxu0 0.0
      %1777 = vmatprep.subr.mxu0 0.0
      %1778 = vmatpush1.xpose.msra.mxu0 0.0
      %1779 = vmatprep.subr.mxu0 0.0
      %1780 = vmatpush1.xpose.msra.mxu0 0.0
      %1781 = vmatprep.subr.mxu0 0.0
      %1782 = vmatpush1.xpose.msra.mxu0 0.0
      %1783 = vmatprep.subr.mxu0 0.0
      %1784 = vmatpush1.xpose.msra.mxu0 0.0
      %1785 = vmatprep.subr.mxu0 0.0
      %1786 = vmatpush1.xpose.msra.mxu0 0.0
      %1787 = vmatprep.subr.mxu0 0.0
      %1788 = vmatpush1.xpose.msra.mxu0 0.0
      %1789 = vmatprep.subr.mxu0 0.0
      %1790 = vmatpush1.xpose.msra.mxu0 0.0
      %1791 = vmatprep.subr.mxu0 0.0
      %1792 = vmatpush1.xpose.msra.mxu0 0.0
      %1793 = vmatprep.subr.mxu0 0.0
      %1794 = vmatpush1.xpose.msra.mxu0 0.0
      %1795 = vmatprep.subr.mxu0 0.0
      %1796 = vmatpush1.xpose.msra.mxu0 0.0
      %1797 = vmatprep.subr.mxu0 0.0
      %1798 = vmatpush1.xpose.msra.mxu0 0.0
      %1799 = vmatprep.subr.mxu0 0.0
      %1800 = vmatpush1.xpose.msra.mxu0 0.0
      %1801 = vmatprep.mubr.f32.mxu0 0.0
      %1802 = vmatmul.mubr.f32.gmra.mrb[0].mxu0 %v1725
      %v1803 = vpop.f32.mrb[0].mxu0
      %v1804 = vadd.f32 0.0, %v1803
      %v1805 = vpop.f32.mrb[0].mxu0
      %1806 = vmatprep.mubr.f32.mxu0 0.0
      %1807 = vmatmul.mubr.f32.gmra.mrb[0].mxu0 %v1727
      %v1808 = vpop.f32.mrb[0].mxu0
      %v1809 = vadd.f32 0.0, %v1808
      %v1810 = vpop.f32.mrb[0].mxu0
      %1811 = vmatprep.mubr.f32.mxu0 0.0
      %1812 = vmatmul.mubr.f32.gmra.mrb[0].mxu0 %v1729
      %v1813 = vpop.f32.mrb[0].mxu0
      %v1814 = vadd.f32 0.0, %v1813
      %v1815 = vpop.f32.mrb[0].mxu0
      %1816 = vdwg.mxu0
      %v1817 = vmul.f32 %v1804, 0.17677669
      %v1818 = vmul.f32 %v1809, 0.17677669
      %v1819 = vmul.f32 %v1814, 0.17677669
      %v1820 = vsel %vm730, %v1817, -inf
      %1821 = vmax.xlane.f32.xlu0 %v1820
      %v1822 = vpop.xlane.xlu0 %1821
      %v1823 = vsel %vm730, %v1818, -inf
      %1824 = vmax.xlane.f32.xlu0 %v1823
      %v1825 = vpop.xlane.xlu0 %1824
      %v1826 = vsel %vm737, %v1819, -inf
      %1827 = vmax.xlane.f32.xlu0 %v1826
      %v1828 = vpop.xlane.xlu0 %1827
      %v1829 = vsub.f32 %v1817, %v1822
      %v1830 = vsub.f32 %v1818, %v1825
      %v1831 = vsub.f32 %v1819, %v1828
      %v1832 = vmul.f32 %v1829, 1.442695
      %v1833 = vpow.pop %v1832
      %v1834 = vmul.f32 %v1830, 1.442695
      %v1835 = vpow.pop %v1834
      %v1836 = vmul.f32 %v1831, 1.442695
      %v1837 = vpow.pop %v1836
      %v1838 = vsel %vm730, %v1833, 0.0
      %1839 = vadd.xlane.f32.xlu0 %v1838
      %v1840 = vpop.xlane.xlu0 %1839
      %v1841 = vsel %vm730, %v1835, 0.0
      %1842 = vadd.xlane.f32.xlu0 %v1841
      %v1843 = vpop.xlane.xlu0 %1842
      %v1844 = vsel %vm737, %v1837, 0.0
      %1845 = vadd.xlane.f32.xlu0 %v1844
      %v1846 = vpop.xlane.xlu0 %1845
      %v1847 = vrcp.pop %v1840
      %v1848 = vrcp.pop %v1843
      %v1849 = vrcp.pop %v1846
      %v1850 = vmul.f32 %v1833, %v1847
      %v1851 = vmul.f32 %v1835, %v1848
      %v1852 = vmul.f32 %v1837, %v1849
      %1853 = vrot.lane.b32.xlu0 %v1703, 64
      %v1854 = vpop.permute.xlu0 %1853
      %1855 = vrot.lane.b32.xlu0 %v1708, 64
      %v1856 = vpop.permute.xlu0 %1855
      %1857 = vrot.lane.b32.xlu0 %v1713, 64
      %v1858 = vpop.permute.xlu0 %1857
      %v1862 = vsel %vm730, %v1850, 0
      %v1865 = vsel %vm730, %v1851, 0
      %v1868 = vsel %vm730, %v1852, 0
      %v1870 = vsel %vm782, %v1858, 0
      %1872 = vmatprep.subr.mxu0 0.0
      %1873 = vmatpush1.msra.mxu0 %v1854
      %1874 = vmatprep.subr.mxu0 0.0
      %1875 = vmatpush1.msra.mxu0 %v1856
      %1876 = vmatprep.subr.mxu0 0.0
      %1877 = vmatpush1.msra.mxu0 %v1870
      %1878 = vmatprep.subr.mxu0 0.0
      %1879 = vmatpush1.msra.mxu0 0.0
      %1880 = vmatprep.subr.mxu0 0.0
      %1881 = vmatpush1.msra.mxu0 0.0
      %1882 = vmatprep.subr.mxu0 0.0
      %1883 = vmatpush1.msra.mxu0 0.0
      %1884 = vmatprep.subr.mxu0 0.0
      %1885 = vmatpush1.msra.mxu0 0.0
      %1886 = vmatprep.subr.mxu0 0.0
      %1887 = vmatpush1.msra.mxu0 0.0
      %1888 = vmatprep.subr.mxu0 0.0
      %1889 = vmatpush1.msra.mxu0 0.0
      %1890 = vmatprep.subr.mxu0 0.0
      %1891 = vmatpush1.msra.mxu0 0.0
      %1892 = vmatprep.subr.mxu0 0.0
      %1893 = vmatpush1.msra.mxu0 0.0
      %1894 = vmatprep.subr.mxu0 0.0
      %1895 = vmatpush1.msra.mxu0 0.0
      %1896 = vmatprep.subr.mxu0 0.0
      %1897 = vmatpush1.msra.mxu0 0.0
      %1898 = vmatprep.subr.mxu0 0.0
      %1899 = vmatpush1.msra.mxu0 0.0
      %1900 = vmatprep.subr.mxu0 0.0
      %1901 = vmatpush1.msra.mxu0 0.0
      %1902 = vmatprep.subr.mxu0 0.0
      %1903 = vmatpush1.msra.mxu0 0.0
      %1904 = vmatprep.subr.mxu0 0.0
      %1905 = vmatpush1.msra.mxu0 0.0
      %1906 = vmatprep.subr.mxu0 0.0
      %1907 = vmatpush1.msra.mxu0 0.0
      %1908 = vmatprep.subr.mxu0 0.0
      %1909 = vmatpush1.msra.mxu0 0.0
      %1910 = vmatprep.subr.mxu0 0.0
      %1911 = vmatpush1.msra.mxu0 0.0
      %1912 = vmatprep.subr.mxu0 0.0
      %1913 = vmatpush1.msra.mxu0 0.0
      %1914 = vmatprep.subr.mxu0 0.0
      %1915 = vmatpush1.msra.mxu0 0.0
      %1916 = vmatprep.subr.mxu0 0.0
      %1917 = vmatpush1.msra.mxu0 0.0
      %1918 = vmatprep.subr.mxu0 0.0
      %1919 = vmatpush1.msra.mxu0 0.0
      %1920 = vmatprep.subr.mxu0 0.0
      %1921 = vmatpush1.msra.mxu0 0.0
      %1922 = vmatprep.subr.mxu0 0.0
      %1923 = vmatpush1.msra.mxu0 0.0
      %1924 = vmatprep.subr.mxu0 0.0
      %1925 = vmatpush1.msra.mxu0 0.0
      %1926 = vmatprep.subr.mxu0 0.0
      %1927 = vmatpush1.msra.mxu0 0.0
      %1928 = vmatprep.subr.mxu0 0.0
      %1929 = vmatpush1.msra.mxu0 0.0
      %1930 = vmatprep.subr.mxu0 0.0
      %1931 = vmatpush1.msra.mxu0 0.0
      %1932 = vmatprep.subr.mxu0 0.0
      %1933 = vmatpush1.msra.mxu0 0.0
      %1934 = vmatprep.subr.mxu0 0.0
      %1935 = vmatpush1.msra.mxu0 0.0
      %1936 = vmatprep.mubr.f32.mxu0 0.0
      %1937 = vmatmul.mubr.f32.gmra.mrb[0].mxu0 %v1862
      %v1938 = vpop.f32.mrb[0].mxu0
      %v1939 = vadd.f32 0.0, %v1938
      %v1940 = vpop.f32.mrb[0].mxu0
      %1941 = vmatprep.mubr.f32.mxu0 0.0
      %1942 = vmatmul.mubr.f32.gmra.mrb[0].mxu0 %v1865
      %v1943 = vpop.f32.mrb[0].mxu0
      %v1944 = vadd.f32 0.0, %v1943
      %v1945 = vpop.f32.mrb[0].mxu0
      %1946 = vmatprep.mubr.f32.mxu0 0.0
      %1947 = vmatmul.mubr.f32.gmra.mrb[0].mxu0 %v1868
      %v1948 = vpop.f32.mrb[0].mxu0
      %v1949 = vadd.f32 0.0, %v1948
      %v1950 = vpop.f32.mrb[0].mxu0
      %1951 = vdwg.mxu0
      %s1952 = scalar_lea.vmem %s4, 32
      %v1953 = vld [vmem:[%s1952] sm:$0xff]
      %v1954 = vld [vmem:[%s1952 + $0x8] sm:$0xff]
      %1955 = vrot.lane.b32.xlu0 %v1703, 112
      %v1956 = vpop.permute.xlu0 %1955
      %1957 = vrot.lane.b32.xlu0 %v1708, 112
      %v1958 = vpop.permute.xlu0 %1957
      %1959 = vrot.lane.b32.xlu0 %v1713, 112
      %v1960 = vpop.permute.xlu0 %1959
      %1961 = vrot.lane.b32.xlu0 %v1703, 80
      %v1962 = vpop.permute.xlu0 %1961
      %1963 = vrot.lane.b32.xlu0 %v1708, 80
      %v1964 = vpop.permute.xlu0 %1963
      %1965 = vrot.lane.b32.xlu0 %v1713, 80
      %v1966 = vpop.permute.xlu0 %1965
      %v1967 = vsel %vm634, %v1956, 0
      %v1969 = vsel %vm634, %v1958, 0
      %v1971 = vsel %vm634, %v1960, 0
      %v1973 = vsel %vm634, %v1962, 0
      %v1975 = vsel %vm634, %v1964, 0
      %v1977 = vsel %vm634, %v1966, 0
      %1979 = vmatprep.subr.mxu0 0.0
      %1980 = vmatpush1.xpose.msra.mxu0 %v1973
      %1981 = vmatprep.subr.mxu0 0.0
      %1982 = vmatpush1.xpose.msra.mxu0 %v1975
      %1983 = vmatprep.subr.mxu0 0.0
      %1984 = vmatpush1.xpose.msra.mxu0 %v1977
      %1985 = vmatprep.subr.mxu0 0.0
      %1986 = vmatpush1.xpose.msra.mxu0 0.0
      %1987 = vmatprep.subr.mxu0 0.0
      %1988 = vmatpush1.xpose.msra.mxu0 0.0
      %1989 = vmatprep.subr.mxu0 0.0
      %1990 = vmatpush1.xpose.msra.mxu0 0.0
      %1991 = vmatprep.subr.mxu0 0.0
      %1992 = vmatpush1.xpose.msra.mxu0 0.0
      %1993 = vmatprep.subr.mxu0 0.0
      %1994 = vmatpush1.xpose.msra.mxu0 0.0
      %1995 = vmatprep.subr.mxu0 0.0
      %1996 = vmatpush1.xpose.msra.mxu0 0.0
      %1997 = vmatprep.subr.mxu0 0.0
      %1998 = vmatpush1.xpose.msra.mxu0 0.0
      %1999 = vmatprep.subr.mxu0 0.0
      %2000 = vmatpush1.xpose.msra.mxu0 0.0
      %2001 = vmatprep.subr.mxu0 0.0
      %2002 = vmatpush1.xpose.msra.mxu0 0.0
      %2003 = vmatprep.subr.mxu0 0.0
      %2004 = vmatpush1.xpose.msra.mxu0 0.0
      %2005 = vmatprep.subr.mxu0 0.0
      %2006 = vmatpush1.xpose.msra.mxu0 0.0
      %2007 = vmatprep.subr.mxu0 0.0
      %2008 = vmatpush1.xpose.msra.mxu0 0.0
      %2009 = vmatprep.subr.mxu0 0.0
      %2010 = vmatpush1.xpose.msra.mxu0 0.0
      %2011 = vmatprep.subr.mxu0 0.0
      %2012 = vmatpush1.xpose.msra.mxu0 0.0
      %2013 = vmatprep.subr.mxu0 0.0
      %2014 = vmatpush1.xpose.msra.mxu0 0.0
      %2015 = vmatprep.subr.mxu0 0.0
      %2016 = vmatpush1.xpose.msra.mxu0 0.0
      %2017 = vmatprep.subr.mxu0 0.0
      %2018 = vmatpush1.xpose.msra.mxu0 0.0
      %2019 = vmatprep.subr.mxu0 0.0
      %2020 = vmatpush1.xpose.msra.mxu0 0.0
      %2021 = vmatprep.subr.mxu0 0.0
      %2022 = vmatpush1.xpose.msra.mxu0 0.0
      %2023 = vmatprep.subr.mxu0 0.0
      %2024 = vmatpush1.xpose.msra.mxu0 0.0
      %2025 = vmatprep.subr.mxu0 0.0
      %2026 = vmatpush1.xpose.msra.mxu0 0.0
      %2027 = vmatprep.subr.mxu0 0.0
      %2028 = vmatpush1.xpose.msra.mxu0 0.0
      %2029 = vmatprep.subr.mxu0 0.0
      %2030 = vmatpush1.xpose.msra.mxu0 0.0
      %2031 = vmatprep.subr.mxu0 0.0
      %2032 = vmatpush1.xpose.msra.mxu0 0.0
      %2033 = vmatprep.subr.mxu0 0.0
      %2034 = vmatpush1.xpose.msra.mxu0 0.0
      %2035 = vmatprep.subr.mxu0 0.0
      %2036 = vmatpush1.xpose.msra.mxu0 0.0
      %2037 = vmatprep.subr.mxu0 0.0
      %2038 = vmatpush1.xpose.msra.mxu0 0.0
      %2039 = vmatprep.subr.mxu0 0.0
      %2040 = vmatpush1.xpose.msra.mxu0 0.0
      %2041 = vmatprep.subr.mxu0 0.0
      %2042 = vmatpush1.xpose.msra.mxu0 0.0
      %2043 = vmatprep.mubr.f32.mxu0 0.0
      %2044 = vmatmul.mubr.f32.gmra.mrb[0].mxu0 %v1967
      %v2045 = vpop.f32.mrb[0].mxu0
      %v2046 = vadd.f32 0.0, %v2045
      %v2047 = vpop.f32.mrb[0].mxu0
      %2048 = vmatprep.mubr.f32.mxu0 0.0
      %2049 = vmatmul.mubr.f32.gmra.mrb[0].mxu0 %v1969
      %v2050 = vpop.f32.mrb[0].mxu0
      %v2051 = vadd.f32 0.0, %v2050
      %v2052 = vpop.f32.mrb[0].mxu0
      %2053 = vmatprep.mubr.f32.mxu0 0.0
      %2054 = vmatmul.mubr.f32.gmra.mrb[0].mxu0 %v1971
      %v2055 = vpop.f32.mrb[0].mxu0
      %v2056 = vadd.f32 0.0, %v2055
      %v2057 = vpop.f32.mrb[0].mxu0
      %2058 = vdwg.mxu0
      %v2059 = vmul.f32 %v2046, 0.17677669
      %v2060 = vmul.f32 %v2051, 0.17677669
      %v2061 = vmul.f32 %v2056, 0.17677669
      %v2062 = vsel %vm730, %v2059, -inf
      %2063 = vmax.xlane.f32.xlu0 %v2062
      %v2064 = vpop.xlane.xlu0 %2063
      %v2065 = vsel %vm730, %v2060, -inf
      %2066 = vmax.xlane.f32.xlu0 %v2065
      %v2067 = vpop.xlane.xlu0 %2066
      %v2068 = vsel %vm737, %v2061, -inf
      %2069 = vmax.xlane.f32.xlu0 %v2068
      %v2070 = vpop.xlane.xlu0 %2069
      %v2071 = vsub.f32 %v2059, %v2064
      %v2072 = vsub.f32 %v2060, %v2067
      %v2073 = vsub.f32 %v2061, %v2070
      %v2074 = vmul.f32 %v2071, 1.442695
      %v2075 = vpow.pop %v2074
      %v2076 = vmul.f32 %v2072, 1.442695
      %v2077 = vpow.pop %v2076
      %v2078 = vmul.f32 %v2073, 1.442695
      %v2079 = vpow.pop %v2078
      %v2080 = vsel %vm730, %v2075, 0.0
      %2081 = vadd.xlane.f32.xlu0 %v2080
      %v2082 = vpop.xlane.xlu0 %2081
      %v2083 = vsel %vm730, %v2077, 0.0
      %2084 = vadd.xlane.f32.xlu0 %v2083
      %v2085 = vpop.xlane.xlu0 %2084
      %v2086 = vsel %vm737, %v2079, 0.0
      %2087 = vadd.xlane.f32.xlu0 %v2086
      %v2088 = vpop.xlane.xlu0 %2087
      %v2089 = vrcp.pop %v2082
      %v2090 = vrcp.pop %v2085
      %v2091 = vrcp.pop %v2088
      %v2092 = vmul.f32 %v2075, %v2089
      %v2093 = vmul.f32 %v2077, %v2090
      %v2094 = vmul.f32 %v2079, %v2091
      %2095 = vrot.lane.b32.xlu0 %v1703, 48
      %v2096 = vpop.permute.xlu0 %2095
      %2097 = vrot.lane.b32.xlu0 %v1708, 48
      %v2098 = vpop.permute.xlu0 %2097
      %2099 = vrot.lane.b32.xlu0 %v1713, 48
      %v2100 = vpop.permute.xlu0 %2099
      %v2104 = vsel %vm730, %v2092, 0
      %v2107 = vsel %vm730, %v2093, 0
      %v2110 = vsel %vm730, %v2094, 0
      %v2112 = vsel %vm782, %v2100, 0
      %2114 = vmatprep.subr.mxu0 0.0
      %2115 = vmatpush1.msra.mxu0 %v2096
      %2116 = vmatprep.subr.mxu0 0.0
      %2117 = vmatpush1.msra.mxu0 %v2098
      %2118 = vmatprep.subr.mxu0 0.0
      %2119 = vmatpush1.msra.mxu0 %v2112
      %2120 = vmatprep.subr.mxu0 0.0
      %2121 = vmatpush1.msra.mxu0 0.0
      %2122 = vmatprep.subr.mxu0 0.0
      %2123 = vmatpush1.msra.mxu0 0.0
      %2124 = vmatprep.subr.mxu0 0.0
      %2125 = vmatpush1.msra.mxu0 0.0
      %2126 = vmatprep.subr.mxu0 0.0
      %2127 = vmatpush1.msra.mxu0 0.0
      %2128 = vmatprep.subr.mxu0 0.0
      %2129 = vmatpush1.msra.mxu0 0.0
      %2130 = vmatprep.subr.mxu0 0.0
      %2131 = vmatpush1.msra.mxu0 0.0
      %2132 = vmatprep.subr.mxu0 0.0
      %2133 = vmatpush1.msra.mxu0 0.0
      %2134 = vmatprep.subr.mxu0 0.0
      %2135 = vmatpush1.msra.mxu0 0.0
      %2136 = vmatprep.subr.mxu0 0.0
      %2137 = vmatpush1.msra.mxu0 0.0
      %2138 = vmatprep.subr.mxu0 0.0
      %2139 = vmatpush1.msra.mxu0 0.0
      %2140 = vmatprep.subr.mxu0 0.0
      %2141 = vmatpush1.msra.mxu0 0.0
      %2142 = vmatprep.subr.mxu0 0.0
      %2143 = vmatpush1.msra.mxu0 0.0
      %2144 = vmatprep.subr.mxu0 0.0
      %2145 = vmatpush1.msra.mxu0 0.0
      %2146 = vmatprep.subr.mxu0 0.0
      %2147 = vmatpush1.msra.mxu0 0.0
      %2148 = vmatprep.subr.mxu0 0.0
      %2149 = vmatpush1.msra.mxu0 0.0
      %2150 = vmatprep.subr.mxu0 0.0
      %2151 = vmatpush1.msra.mxu0 0.0
      %2152 = vmatprep.subr.mxu0 0.0
      %2153 = vmatpush1.msra.mxu0 0.0
      %2154 = vmatprep.subr.mxu0 0.0
      %2155 = vmatpush1.msra.mxu0 0.0
      %2156 = vmatprep.subr.mxu0 0.0
      %2157 = vmatpush1.msra.mxu0 0.0
      %2158 = vmatprep.subr.mxu0 0.0
      %2159 = vmatpush1.msra.mxu0 0.0
      %2160 = vmatprep.subr.mxu0 0.0
      %2161 = vmatpush1.msra.mxu0 0.0
      %2162 = vmatprep.subr.mxu0 0.0
      %2163 = vmatpush1.msra.mxu0 0.0
      %2164 = vmatprep.subr.mxu0 0.0
      %2165 = vmatpush1.msra.mxu0 0.0
      %2166 = vmatprep.subr.mxu0 0.0
      %2167 = vmatpush1.msra.mxu0 0.0
      %2168 = vmatprep.subr.mxu0 0.0
      %2169 = vmatpush1.msra.mxu0 0.0
      %2170 = vmatprep.subr.mxu0 0.0
      %2171 = vmatpush1.msra.mxu0 0.0
      %2172 = vmatprep.subr.mxu0 0.0
      %2173 = vmatpush1.msra.mxu0 0.0
      %2174 = vmatprep.subr.mxu0 0.0
      %2175 = vmatpush1.msra.mxu0 0.0
      %2176 = vmatprep.subr.mxu0 0.0
      %2177 = vmatpush1.msra.mxu0 0.0
      %2178 = vmatprep.mubr.f32.mxu0 0.0
      %2179 = vmatmul.mubr.f32.gmra.mrb[0].mxu0 %v2104
      %v2180 = vpop.f32.mrb[0].mxu0
      %v2181 = vadd.f32 0.0, %v2180
      %v2182 = vpop.f32.mrb[0].mxu0
      %2183 = vmatprep.mubr.f32.mxu0 0.0
      %2184 = vmatmul.mubr.f32.gmra.mrb[0].mxu0 %v2107
      %v2185 = vpop.f32.mrb[0].mxu0
      %v2186 = vadd.f32 0.0, %v2185
      %v2187 = vpop.f32.mrb[0].mxu0
      %2188 = vmatprep.mubr.f32.mxu0 0.0
      %2189 = vmatmul.mubr.f32.gmra.mrb[0].mxu0 %v2110
      %v2190 = vpop.f32.mrb[0].mxu0
      %v2191 = vadd.f32 0.0, %v2190
      %v2192 = vpop.f32.mrb[0].mxu0
      %2193 = vdwg.mxu0
      %v2194 = vld [vmem:[%s1952 + $0x10] sm:$0xff]
      %v2195 = vld [vmem:[%s1952 + $0x18] sm:$0xff]
      %v2197 = vsel %vm634, %v2181, 0
      %v2200 = vsel %vm634, %v2186, 0
      %v2203 = vsel %vm634, %v2191, 0
      %2205 = vmatprep.subr.mxu0 0.0
      %2206 = vmatpush1.msra.mxu0 %v2194
      %2207 = vmatprep.subr.mxu0 0.0
      %2208 = vmatpush1.msra.mxu0 %v2195
      %2209 = vmatprep.subr.mxu0 0.0
      %2210 = vmatpush1.msra.mxu0 0.0
      %2211 = vmatprep.subr.mxu0 0.0
      %2212 = vmatpush1.msra.mxu0 0.0
      %2213 = vmatprep.subr.mxu0 0.0
      %2214 = vmatpush1.msra.mxu0 0.0
      %2215 = vmatprep.subr.mxu0 0.0
      %2216 = vmatpush1.msra.mxu0 0.0
      %2217 = vmatprep.subr.mxu0 0.0
      %2218 = vmatpush1.msra.mxu0 0.0
      %2219 = vmatprep.subr.mxu0 0.0
      %2220 = vmatpush1.msra.mxu0 0.0
      %2221 = vmatprep.subr.mxu0 0.0
      %2222 = vmatpush1.msra.mxu0 0.0
      %2223 = vmatprep.subr.mxu0 0.0
      %2224 = vmatpush1.msra.mxu0 0.0
      %2225 = vmatprep.subr.mxu0 0.0
      %2226 = vmatpush1.msra.mxu0 0.0
      %2227 = vmatprep.subr.mxu0 0.0
      %2228 = vmatpush1.msra.mxu0 0.0
      %2229 = vmatprep.subr.mxu0 0.0
      %2230 = vmatpush1.msra.mxu0 0.0
      %2231 = vmatprep.subr.mxu0 0.0
      %2232 = vmatpush1.msra.mxu0 0.0
      %2233 = vmatprep.subr.mxu0 0.0
      %2234 = vmatpush1.msra.mxu0 0.0
      %2235 = vmatprep.subr.mxu0 0.0
      %2236 = vmatpush1.msra.mxu0 0.0
      %2237 = vmatprep.subr.mxu0 0.0
      %2238 = vmatpush1.msra.mxu0 0.0
      %2239 = vmatprep.subr.mxu0 0.0
      %2240 = vmatpush1.msra.mxu0 0.0
      %2241 = vmatprep.subr.mxu0 0.0
      %2242 = vmatpush1.msra.mxu0 0.0
      %2243 = vmatprep.subr.mxu0 0.0
      %2244 = vmatpush1.msra.mxu0 0.0
      %2245 = vmatprep.subr.mxu0 0.0
      %2246 = vmatpush1.msra.mxu0 0.0
      %2247 = vmatprep.subr.mxu0 0.0
      %2248 = vmatpush1.msra.mxu0 0.0
      %2249 = vmatprep.subr.mxu0 0.0
      %2250 = vmatpush1.msra.mxu0 0.0
      %2251 = vmatprep.subr.mxu0 0.0
      %2252 = vmatpush1.msra.mxu0 0.0
      %2253 = vmatprep.subr.mxu0 0.0
      %2254 = vmatpush1.msra.mxu0 0.0
      %2255 = vmatprep.subr.mxu0 0.0
      %2256 = vmatpush1.msra.mxu0 0.0
      %2257 = vmatprep.subr.mxu0 0.0
      %2258 = vmatpush1.msra.mxu0 0.0
      %2259 = vmatprep.subr.mxu0 0.0
      %2260 = vmatpush1.msra.mxu0 0.0
      %2261 = vmatprep.subr.mxu0 0.0
      %2262 = vmatpush1.msra.mxu0 0.0
      %2263 = vmatprep.subr.mxu0 0.0
      %2264 = vmatpush1.msra.mxu0 0.0
      %2265 = vmatprep.subr.mxu0 0.0
      %2266 = vmatpush1.msra.mxu0 0.0
      %2267 = vmatprep.subr.mxu0 0.0
      %2268 = vmatpush1.msra.mxu0 0.0
      %2269 = vmatprep.mubr.f32.mxu0 0.0
      %2270 = vmatmul.mubr.f32.gmra.mrb[0].mxu0 %v2197
      %v2271 = vpop.f32.mrb[0].mxu0
      %v2272 = vadd.f32 0.0, %v2271
      %v2273 = vpop.f32.mrb[0].mxu0
      %2274 = vmatprep.mubr.f32.mxu0 0.0
      %2275 = vmatmul.mubr.f32.gmra.mrb[0].mxu0 %v2200
      %v2276 = vpop.f32.mrb[0].mxu0
      %v2277 = vadd.f32 0.0, %v2276
      %v2278 = vpop.f32.mrb[0].mxu0
      %2279 = vmatprep.mubr.f32.mxu0 0.0
      %2280 = vmatmul.mubr.f32.gmra.mrb[0].mxu0 %v2203
      %v2281 = vpop.f32.mrb[0].mxu0
      %v2282 = vadd.f32 0.0, %v2281
      %v2283 = vpop.f32.mrb[0].mxu0
      %2284 = vdwg.mxu0
      %v2286 = vsel %vm634, %v1939, 0
      %v2289 = vsel %vm634, %v1944, 0
      %v2292 = vsel %vm634, %v1949, 0
      %2294 = vmatprep.subr.mxu0 0.0
      %2295 = vmatpush1.msra.mxu0 %v1953
      %2296 = vmatprep.subr.mxu0 0.0
      %2297 = vmatpush1.msra.mxu0 %v1954
      %2298 = vmatprep.subr.mxu0 0.0
      %2299 = vmatpush1.msra.mxu0 0.0
      %2300 = vmatprep.subr.mxu0 0.0
      %2301 = vmatpush1.msra.mxu0 0.0
      %2302 = vmatprep.subr.mxu0 0.0
      %2303 = vmatpush1.msra.mxu0 0.0
      %2304 = vmatprep.subr.mxu0 0.0
      %2305 = vmatpush1.msra.mxu0 0.0
      %2306 = vmatprep.subr.mxu0 0.0
      %2307 = vmatpush1.msra.mxu0 0.0
      %2308 = vmatprep.subr.mxu0 0.0
      %2309 = vmatpush1.msra.mxu0 0.0
      %2310 = vmatprep.subr.mxu0 0.0
      %2311 = vmatpush1.msra.mxu0 0.0
      %2312 = vmatprep.subr.mxu0 0.0
      %2313 = vmatpush1.msra.mxu0 0.0
      %2314 = vmatprep.subr.mxu0 0.0
      %2315 = vmatpush1.msra.mxu0 0.0
      %2316 = vmatprep.subr.mxu0 0.0
      %2317 = vmatpush1.msra.mxu0 0.0
      %2318 = vmatprep.subr.mxu0 0.0
      %2319 = vmatpush1.msra.mxu0 0.0
      %2320 = vmatprep.subr.mxu0 0.0
      %2321 = vmatpush1.msra.mxu0 0.0
      %2322 = vmatprep.subr.mxu0 0.0
      %2323 = vmatpush1.msra.mxu0 0.0
      %2324 = vmatprep.subr.mxu0 0.0
      %2325 = vmatpush1.msra.mxu0 0.0
      %2326 = vmatprep.subr.mxu0 0.0
      %2327 = vmatpush1.msra.mxu0 0.0
      %2328 = vmatprep.subr.mxu0 0.0
      %2329 = vmatpush1.msra.mxu0 0.0
      %2330 = vmatprep.subr.mxu0 0.0
      %2331 = vmatpush1.msra.mxu0 0.0
      %2332 = vmatprep.subr.mxu0 0.0
      %2333 = vmatpush1.msra.mxu0 0.0
      %2334 = vmatprep.subr.mxu0 0.0
      %2335 = vmatpush1.msra.mxu0 0.0
      %2336 = vmatprep.subr.mxu0 0.0
      %2337 = vmatpush1.msra.mxu0 0.0
      %2338 = vmatprep.subr.mxu0 0.0
      %2339 = vmatpush1.msra.mxu0 0.0
      %2340 = vmatprep.subr.mxu0 0.0
      %2341 = vmatpush1.msra.mxu0 0.0
      %2342 = vmatprep.subr.mxu0 0.0
      %2343 = vmatpush1.msra.mxu0 0.0
      %2344 = vmatprep.subr.mxu0 0.0
      %2345 = vmatpush1.msra.mxu0 0.0
      %2346 = vmatprep.subr.mxu0 0.0
      %2347 = vmatpush1.msra.mxu0 0.0
      %2348 = vmatprep.subr.mxu0 0.0
      %2349 = vmatpush1.msra.mxu0 0.0
      %2350 = vmatprep.subr.mxu0 0.0
      %2351 = vmatpush1.msra.mxu0 0.0
      %2352 = vmatprep.subr.mxu0 0.0
      %2353 = vmatpush1.msra.mxu0 0.0
      %2354 = vmatprep.subr.mxu0 0.0
      %2355 = vmatpush1.msra.mxu0 0.0
      %2356 = vmatprep.subr.mxu0 0.0
      %2357 = vmatpush1.msra.mxu0 0.0
      %2358 = vmatprep.mubr.f32.mxu0 0.0
      %2359 = vmatmul.mubr.f32.gmra.mrb[0].mxu0 %v2286
      %v2360 = vpop.f32.mrb[0].mxu0
      %v2361 = vadd.f32 %v2272, %v2360
      %v2362 = vpop.f32.mrb[0].mxu0
      %2363 = vmatprep.mubr.f32.mxu0 0.0
      %2364 = vmatmul.mubr.f32.gmra.mrb[0].mxu0 %v2289
      %v2365 = vpop.f32.mrb[0].mxu0
      %v2366 = vadd.f32 %v2277, %v2365
      %v2367 = vpop.f32.mrb[0].mxu0
      %2368 = vmatprep.mubr.f32.mxu0 0.0
      %2369 = vmatmul.mubr.f32.gmra.mrb[0].mxu0 %v2292
      %v2370 = vpop.f32.mrb[0].mxu0
      %v2371 = vadd.f32 %v2282, %v2370
      %v2372 = vpop.f32.mrb[0].mxu0
      %2373 = vdwg.mxu0
      %v2374 = vlaneseq
      %v2375 = vshrl.u32 %v2374, 7
      %v2376 = vsub.s32 4, %v2375
      %v2377 = vrot.slane %v1568, %v2376
      %v2378 = vadd.f32 %v2361, %v2377
      %v2379 = vadd.f32 %v2366, %v2377
      %v2380 = vadd.f32 %v2371, %v2377
      %v2381 = vadd.f32 %v1564, %v2378
      %v2382 = vadd.f32 %v1565, %v2379
      %v2383 = vadd.f32 %v1566, %v2380
      %v2384 = vsel %vm430, %v2381, 0.0
      %2385 = vadd.xlane.f32.xlu0 %v2384
      %v2386 = vpop.xlane.xlu0 %2385
      %v2387 = vsel %vm430, %v2382, 0.0
      %2388 = vadd.xlane.f32.xlu0 %v2387
      %v2389 = vpop.xlane.xlu0 %2388
      %v2390 = vsel %vm484, %v2383, 0.0
      %2391 = vadd.xlane.f32.xlu0 %v2390
      %v2392 = vpop.xlane.xlu0 %2391
      %v2393 = vmul.f32 %v2386, %v437
      %v2394 = vmul.f32 %v2389, %v437
      %v2395 = vmul.f32 %v2392, %v437
      %v2396 = vsub.f32 %v2381, %v2393
      %v2397 = vsub.f32 %v2382, %v2394
      %v2398 = vsub.f32 %v2383, %v2395
      %v2399 = vmul.f32 %v2396, %v2396
      %v2400 = vmul.f32 %v2397, %v2397
      %v2401 = vmul.f32 %v2398, %v2398
      %v2402 = vsel %vm430, %v2399, 0.0
      %2403 = vadd.xlane.f32.xlu0 %v2402
      %v2404 = vpop.xlane.xlu0 %2403
      %v2405 = vsel %vm430, %v2400, 0.0
      %2406 = vadd.xlane.f32.xlu0 %v2405
      %v2407 = vpop.xlane.xlu0 %2406
      %v2408 = vsel %vm484, %v2401, 0.0
      %2409 = vadd.xlane.f32.xlu0 %v2408
      %v2410 = vpop.xlane.xlu0 %2409
      %v2411 = vmul.f32 %v2404, %v437
      %v2412 = vmul.f32 %v2407, %v437
      %v2413 = vmul.f32 %v2410, %v437
      %v2414 = vadd.f32 %v2411, 1e-05
      %v2415 = vadd.f32 %v2412, 1e-05
      %v2416 = vadd.f32 %v2413, 1e-05
      %v2417 = vrsqrt.pop %v2414
      %v2418 = vrsqrt.pop %v2415
      %v2419 = vrsqrt.pop %v2416
      %v2420 = vmul.f32 %v2396, %v2417
      %v2421 = vmul.f32 %v2397, %v2418
      %v2422 = vmul.f32 %v2398, %v2419
      %v2423 = vlaneseq
      %v2424 = vshrl.u32 %v2423, 7
      %v2425 = vsub.s32 2, %v2424
      %v2426 = vrot.slane %v1568, %v2425
      %v2427 = vmul.f32 %v2420, %v2426
      %v2428 = vmul.f32 %v2421, %v2426
      %v2429 = vmul.f32 %v2422, %v2426
      %v2430 = vlaneseq
      %v2431 = vshrl.u32 %v2430, 7
      %v2432 = vsub.s32 3, %v2431
      %v2433 = vrot.slane %v1568, %v2432
      %v2434 = vadd.f32 %v2427, %v2433
      %v2435 = vadd.f32 %v2428, %v2433
      %v2436 = vadd.f32 %v2429, %v2433
      %s2437 = scalar_lea.vmem %s5, 32
      %v2438 = vld [vmem:[%s2437] sm:$0xff]
      %v2439 = vld [vmem:[%s2437 + $0x8] sm:$0xff]
      %v2440 = vld [vmem:[%s2437 + $0x10] sm:$0xff]
      %v2441 = vld [vmem:[%s2437 + $0x18] sm:$0xff]
      %s2442 = scalar_lea.vmem %s8, 1
      %v2443 = vld [vmem:[%s2442] sm:$0x1]
      %v2445 = vlaneseq
      %v2446 = vshrl.u32 %v2445, 7
      %v2447 = vsub.s32 0, %v2446
      %v2448 = vrot.slane %v2443, %v2447
      %v2451 = vsel %vm430, %v2434, 0
      %v2454 = vsel %vm430, %v2435, 0
      %v2457 = vsel %vm430, %v2436, 0
      %2459 = vmatprep.subr.mxu0 0.0
      %2460 = vmatpush1.msra.mxu0 %v2438
      %2461 = vmatprep.subr.mxu0 0.0
      %2462 = vmatpush1.msra.mxu0 %v2439
      %2463 = vmatprep.subr.mxu0 0.0
      %2464 = vmatpush1.msra.mxu0 %v2440
      %2465 = vmatprep.subr.mxu0 0.0
      %2466 = vmatpush1.msra.mxu0 %v2441
      %2467 = vmatprep.subr.mxu0 0.0
      %2468 = vmatpush1.msra.mxu0 0.0
      %2469 = vmatprep.subr.mxu0 0.0
      %2470 = vmatpush1.msra.mxu0 0.0
      %2471 = vmatprep.subr.mxu0 0.0
      %2472 = vmatpush1.msra.mxu0 0.0
      %2473 = vmatprep.subr.mxu0 0.0
      %2474 = vmatpush1.msra.mxu0 0.0
      %2475 = vmatprep.subr.mxu0 0.0
      %2476 = vmatpush1.msra.mxu0 0.0
      %2477 = vmatprep.subr.mxu0 0.0
      %2478 = vmatpush1.msra.mxu0 0.0
      %2479 = vmatprep.subr.mxu0 0.0
      %2480 = vmatpush1.msra.mxu0 0.0
      %2481 = vmatprep.subr.mxu0 0.0
      %2482 = vmatpush1.msra.mxu0 0.0
      %2483 = vmatprep.subr.mxu0 0.0
      %2484 = vmatpush1.msra.mxu0 0.0
      %2485 = vmatprep.subr.mxu0 0.0
      %2486 = vmatpush1.msra.mxu0 0.0
      %2487 = vmatprep.subr.mxu0 0.0
      %2488 = vmatpush1.msra.mxu0 0.0
      %2489 = vmatprep.subr.mxu0 0.0
      %2490 = vmatpush1.msra.mxu0 0.0
      %2491 = vmatprep.subr.mxu0 0.0
      %2492 = vmatpush1.msra.mxu0 0.0
      %2493 = vmatprep.subr.mxu0 0.0
      %2494 = vmatpush1.msra.mxu0 0.0
      %2495 = vmatprep.subr.mxu0 0.0
      %2496 = vmatpush1.msra.mxu0 0.0
      %2497 = vmatprep.subr.mxu0 0.0
      %2498 = vmatpush1.msra.mxu0 0.0
      %2499 = vmatprep.subr.mxu0 0.0
      %2500 = vmatpush1.msra.mxu0 0.0
      %2501 = vmatprep.subr.mxu0 0.0
      %2502 = vmatpush1.msra.mxu0 0.0
      %2503 = vmatprep.subr.mxu0 0.0
      %2504 = vmatpush1.msra.mxu0 0.0
      %2505 = vmatprep.subr.mxu0 0.0
      %2506 = vmatpush1.msra.mxu0 0.0
      %2507 = vmatprep.subr.mxu0 0.0
      %2508 = vmatpush1.msra.mxu0 0.0
      %2509 = vmatprep.subr.mxu0 0.0
      %2510 = vmatpush1.msra.mxu0 0.0
      %2511 = vmatprep.subr.mxu0 0.0
      %2512 = vmatpush1.msra.mxu0 0.0
      %2513 = vmatprep.subr.mxu0 0.0
      %2514 = vmatpush1.msra.mxu0 0.0
      %2515 = vmatprep.subr.mxu0 0.0
      %2516 = vmatpush1.msra.mxu0 0.0
      %2517 = vmatprep.subr.mxu0 0.0
      %2518 = vmatpush1.msra.mxu0 0.0
      %2519 = vmatprep.subr.mxu0 0.0
      %2520 = vmatpush1.msra.mxu0 0.0
      %2521 = vmatprep.subr.mxu0 0.0
      %2522 = vmatpush1.msra.mxu0 0.0
      %2523 = vmatprep.mubr.f32.mxu0 0.0
      %2524 = vmatmul.mubr.f32.gmra.mrb[0].mxu0 %v2451
      %v2525 = vpop.f32.mrb[0].mxu0
      %v2526 = vadd.f32 %v2448, %v2525
      %v2527 = vpop.f32.mrb[0].mxu0
      %2528 = vmatprep.mubr.f32.mxu0 0.0
      %2529 = vmatmul.mubr.f32.gmra.mrb[0].mxu0 %v2454
      %v2530 = vpop.f32.mrb[0].mxu0
      %v2531 = vadd.f32 %v2448, %v2530
      %v2532 = vpop.f32.mrb[0].mxu0
      %2533 = vmatprep.mubr.f32.mxu0 0.0
      %2534 = vmatmul.mubr.f32.gmra.mrb[0].mxu0 %v2457
      %v2535 = vpop.f32.mrb[0].mxu0
      %v2536 = vadd.f32 %v2448, %v2535
      %v2537 = vpop.f32.mrb[0].mxu0
      %2538 = vdwg.mxu0
      %v2539 = vmul.f32 %v2526, 0.5
      %v2540 = vmul.f32 %v2531, 0.5
      %v2541 = vmul.f32 %v2536, 0.5
      %v2542 = vmul.f32 %v2526, 0.70710677
      %v2543 = vmul.f32 %v2531, 0.70710677
      %v2544 = vmul.f32 %v2536, 0.70710677
      %v2545 = verf.f32.pop %v2542
      %v2546 = verf.f32.pop %v2543
      %v2547 = verf.f32.pop %v2544
      %v2548 = vadd.f32 %v2545, 1.0
      %v2549 = vadd.f32 %v2546, 1.0
      %v2550 = vadd.f32 %v2547, 1.0
      %v2551 = vmul.f32 %v2539, %v2548
      %v2552 = vmul.f32 %v2540, %v2549
      %v2553 = vmul.f32 %v2541, %v2550
      %s2554 = scalar_lea.vmem %s6, 128
      %v2555 = vld [vmem:[%s2554] sm:$0xff]
      %v2556 = vld [vmem:[%s2554 + $0x8] sm:$0xff]
      %v2557 = vld [vmem:[%s2554 + $0x10] sm:$0xff]
      %v2558 = vld [vmem:[%s2554 + $0x18] sm:$0xff]
      %v2559 = vld [vmem:[%s2554 + $0x20] sm:$0xff]
      %v2560 = vld [vmem:[%s2554 + $0x28] sm:$0xff]
      %v2561 = vld [vmem:[%s2554 + $0x30] sm:$0xff]
      %v2562 = vld [vmem:[%s2554 + $0x38] sm:$0xff]
      %v2563 = vld [vmem:[%s2554 + $0x40] sm:$0xff]
      %v2564 = vld [vmem:[%s2554 + $0x48] sm:$0xff]
      %v2565 = vld [vmem:[%s2554 + $0x50] sm:$0xff]
      %v2566 = vld [vmem:[%s2554 + $0x58] sm:$0xff]
      %v2567 = vld [vmem:[%s2554 + $0x60] sm:$0xff]
      %v2568 = vld [vmem:[%s2554 + $0x68] sm:$0xff]
      %v2569 = vld [vmem:[%s2554 + $0x70] sm:$0xff]
      %v2570 = vld [vmem:[%s2554 + $0x78] sm:$0xff]
      %v2571 = vlaneseq
      %v2572 = vshrl.u32 %v2571, 7
      %v2573 = vsub.s32 5, %v2572
      %v2574 = vrot.slane %v1568, %v2573
      %2575 = vmatprep.subr.mxu0 0.0
      %2576 = vmatpush1.msra.mxu0 %v2555
      %2577 = vmatprep.subr.mxu0 0.0
      %2578 = vmatpush1.msra.mxu0 %v2556
      %2579 = vmatprep.subr.mxu0 0.0
      %2580 = vmatpush1.msra.mxu0 %v2557
      %2581 = vmatprep.subr.mxu0 0.0
      %2582 = vmatpush1.msra.mxu0 %v2558
      %2583 = vmatprep.subr.mxu0 0.0
      %2584 = vmatpush1.msra.mxu0 %v2559
      %2585 = vmatprep.subr.mxu0 0.0
      %2586 = vmatpush1.msra.mxu0 %v2560
      %2587 = vmatprep.subr.mxu0 0.0
      %2588 = vmatpush1.msra.mxu0 %v2561
      %2589 = vmatprep.subr.mxu0 0.0
      %2590 = vmatpush1.msra.mxu0 %v2562
      %2591 = vmatprep.subr.mxu0 0.0
      %2592 = vmatpush1.msra.mxu0 %v2563
      %2593 = vmatprep.subr.mxu0 0.0
      %2594 = vmatpush1.msra.mxu0 %v2564
      %2595 = vmatprep.subr.mxu0 0.0
      %2596 = vmatpush1.msra.mxu0 %v2565
      %2597 = vmatprep.subr.mxu0 0.0
      %2598 = vmatpush1.msra.mxu0 %v2566
      %2599 = vmatprep.subr.mxu0 0.0
      %2600 = vmatpush1.msra.mxu0 %v2567
      %2601 = vmatprep.subr.mxu0 0.0
      %2602 = vmatpush1.msra.mxu0 %v2568
      %2603 = vmatprep.subr.mxu0 0.0
      %2604 = vmatpush1.msra.mxu0 %v2569
      %2605 = vmatprep.subr.mxu0 0.0
      %2606 = vmatpush1.msra.mxu0 %v2570
      %2607 = vmatprep.subr.mxu0 0.0
      %2608 = vmatpush1.msra.mxu0 0.0
      %2609 = vmatprep.subr.mxu0 0.0
      %2610 = vmatpush1.msra.mxu0 0.0
      %2611 = vmatprep.subr.mxu0 0.0
      %2612 = vmatpush1.msra.mxu0 0.0
      %2613 = vmatprep.subr.mxu0 0.0
      %2614 = vmatpush1.msra.mxu0 0.0
      %2615 = vmatprep.subr.mxu0 0.0
      %2616 = vmatpush1.msra.mxu0 0.0
      %2617 = vmatprep.subr.mxu0 0.0
      %2618 = vmatpush1.msra.mxu0 0.0
      %2619 = vmatprep.subr.mxu0 0.0
      %2620 = vmatpush1.msra.mxu0 0.0
      %2621 = vmatprep.subr.mxu0 0.0
      %2622 = vmatpush1.msra.mxu0 0.0
      %2623 = vmatprep.subr.mxu0 0.0
      %2624 = vmatpush1.msra.mxu0 0.0
      %2625 = vmatprep.subr.mxu0 0.0
      %2626 = vmatpush1.msra.mxu0 0.0
      %2627 = vmatprep.subr.mxu0 0.0
      %2628 = vmatpush1.msra.mxu0 0.0
      %2629 = vmatprep.subr.mxu0 0.0
      %2630 = vmatpush1.msra.mxu0 0.0
      %2631 = vmatprep.subr.mxu0 0.0
      %2632 = vmatpush1.msra.mxu0 0.0
      %2633 = vmatprep.subr.mxu0 0.0
      %2634 = vmatpush1.msra.mxu0 0.0
      %2635 = vmatprep.subr.mxu0 0.0
      %2636 = vmatpush1.msra.mxu0 0.0
      %2637 = vmatprep.subr.mxu0 0.0
      %2638 = vmatpush1.msra.mxu0 0.0
      %2639 = vmatprep.mubr.f32.mxu0 0.0
      %2640 = vmatmul.mubr.f32.gmra.mrb[0].mxu0 %v2551
      %v2641 = vpop.f32.mrb[0].mxu0
      %v2642 = vadd.f32 %v2574, %v2641
      %v2643 = vpop.f32.mrb[0].mxu0
      %2644 = vmatprep.mubr.f32.mxu0 0.0
      %2645 = vmatmul.mubr.f32.gmra.mrb[0].mxu0 %v2552
      %v2646 = vpop.f32.mrb[0].mxu0
      %v2647 = vadd.f32 %v2574, %v2646
      %v2648 = vpop.f32.mrb[0].mxu0
      %2649 = vmatprep.mubr.f32.mxu0 0.0
      %2650 = vmatmul.mubr.f32.gmra.mrb[0].mxu0 %v2553
      %v2651 = vpop.f32.mrb[0].mxu0
      %v2652 = vadd.f32 %v2574, %v2651
      %v2653 = vpop.f32.mrb[0].mxu0
      %2654 = vdwg.mxu0
      %v2655 = vadd.f32 %v2381, %v2642
      %v2656 = vadd.f32 %v2382, %v2647
      %v2657 = vadd.f32 %v2383, %v2652
      %2658 = vst.msk [vmem:[%s332] sm:$0xff] %vm430, %v2655
      %2659 = vst.msk [vmem:[%s332 + $0x8] sm:$0xff] %vm430, %v2656
      %2660 = vst.msk [vmem:[%s332 + $0x10] sm:$0x1] %vm484, %v2657
      %p2661 = scmp.lt.s32.totalorder %s20, 1
      %s2662 = scalar_select %p2661, %s20, 1
      %s2663 = smul.addr %s2662, 3
      %s2664 = smul.addr %s2663, 8
      %s2665 = scalar_lea.vmem %s9, %s2664
      // Predicated region
      $region57: #{vision_transformer_forward.1} parent=55 // pred_check
        %p2666 = pneg %p232
      $region58: #{vision_transformer_forward.1} parent=55 // pred_check_branch
        %2668 = sbr.rel (%p2666) target = $region60
      $region59: #{vision_transformer_forward.1} parent=55 // pred_region
        _
      $region60: #{vision_transformer_forward.1} parent=55 // pred_fallthru
        _
    $region56: #{vision_transformer_forward.1} parent=5 // pred_fallthru
      _
    %p2669 = scmp.le.s32.totalorder 2, %s15
    // Predicated region
    $region61: #{vision_transformer_forward.1} parent=5 // pred_check
      %p2670 = pneg %p2669
    $region62: #{vision_transformer_forward.1} parent=5 // pred_check_branch
      %2672 = sbr.rel (%p2670) target = $region64
    $region63: #{vision_transformer_forward.1} parent=5 // pred_region
      %s2673 = ssub.s32 %s15, 2
      // Predicated region
      $region65: #{vision_transformer_forward.1} parent=63 // pred_check
        %p2674 = pneg %p238
      $region66: #{vision_transformer_forward.1} parent=63 // pred_check_branch
        %2676 = sbr.rel (%p2674) target = $region68
      $region67: #{vision_transformer_forward.1} parent=63 // pred_region
        %p2677 = scmp.lt.s32.totalorder %s21, 1
        %s2678 = scalar_select %p2677, %s21, 1
        %s2679 = smul.addr %s2678, 3
        %s2680 = smul.addr %s2679, 8
        %s2681 = scalar_lea.vmem %s9, %s2680
      $region68: #{vision_transformer_forward.1} parent=63 // pred_fallthru
        _
    $region64: #{vision_transformer_forward.1} parent=5 // pred_fallthru
      _
  $region6: #{vision_transformer_forward.1} parent=0 // loop_footer
    %s19 = sadd.s32 1, %s15
  $region7: #{vision_transformer_forward.1} parent=0 // loop_footer_branch
    %14 = sbr.rel target = $region3
  $region8: #{vision_transformer_forward.1} parent=0 // loop_exit
    _

</llo_original>
